<compile_context>
chip_gen: v6e
topology: v6e:2x2x1
jax: 0.10.0
libtpu: 0.0.40
codegen_flags: <defaults>
</compile_context>

<pallas_src>
import functools

import jax
import jax.numpy as jnp
import numpy as np
from jax import lax
from jax.experimental import pallas as pl
from jax.experimental.pallas import tpu as pltpu

LANE = 128


# -----------------------------------------------------------------------------
# Fused kernel: conv (in-VMEM im2col + one MXU matmul) + BN stats + BN/ReLU + 2x2 max-pool
# -----------------------------------------------------------------------------
def _conv_block_kernel(x_ref, w_ref, g_ref, b_ref, o_ref, z_scr, h_scr,
                       *, N, H, W, KH, KW, Cin, K, Kp, eps):
    Cp = w_ref.shape[1]
    Ho, Wo = H // 2, W // 2

    # ---- conv: hierarchical in-VMEM im2col, lane-aligned contraction ----
    x = x_ref[...]                                            # (N, Hp, Wp, Cin) f32
    rows = [
        jnp.concatenate([x[:, kh:kh + H, kw:kw + W, :] for kw in range(KW)], axis=-1)
        for kh in range(KH)
    ]                                                         # KH x (N, H, W, KW*Cin)
    if Kp > K:                                                # zero tap -> K padded to 128
        rows.append(jnp.zeros((N, H, W, Kp - K), jnp.float32))
    patches = jnp.concatenate(rows, axis=-1)                  # (N, H, W, Kp)
    patches = patches.reshape(N * H * W, Kp).astype(jnp.bfloat16)
    y = jnp.dot(patches, w_ref[...],                          # (N*H*W, Cp) bf16 MXU, f32 accum
                preferred_element_type=jnp.float32)

    # ---- train-mode BatchNorm folded into per-channel scale/shift (stats on resident y) ----
    cnt = jnp.float32(N * H * W)
    mean = jnp.sum(y, axis=0, keepdims=True) / cnt            # (1, Cp)
    var = jnp.maximum(jnp.sum(y * y, axis=0, keepdims=True) / cnt - mean * mean, 0.0)
    scale = g_ref[...] * lax.rsqrt(var + eps)                 # (1, Cp)
    shift = b_ref[...] - mean * scale
    z = jnp.maximum(y * scale + shift, 0.0)                   # BN affine + ReLU, single pass

    # ---- 2x2 / stride-2 max-pool via dense strided VMEM reads ----
    z_scr[...] = z.reshape(N * H, W, Cp)                      # rows ordered (n, h)
    hmax = jnp.maximum(z_scr[pl.ds(0, N * Ho, 2)],            # even h rows  (N*Ho, W, Cp)
                       z_scr[pl.ds(1, N * Ho, 2)])            # odd  h rows
    h_scr[...] = hmax
    pooled = jnp.maximum(h_scr[:, pl.ds(0, Wo, 2), :],        # even w cols  (N*Ho, Wo, Cp)
                         h_scr[:, pl.ds(1, Wo, 2), :])        # odd  w cols
    o_ref[...] = pooled.reshape(N, Ho, Wo, Cp)


def conv_block(x, w_hwio, bias, gamma, beta, eps=1e-5):
    """x: (N, Cin, H, W) f32 -> (N, Cout, H//2, W//2) f32 (train-mode ConvBlock forward)."""
    del bias  # cancels exactly in train-mode BN (subtracted back out with the batch mean)
    N, Cin, H, W = x.shape
    KH, KW, _, Cout = w_hwio.shape
    assert H % 2 == 0 and W % 2 == 0
    Ho, Wo = H // 2, W // 2
    ph, pw = KH // 2, KW // 2
    K = KH * KW * Cin
    Kp = pl.cdiv(K, LANE) * LANE                              # MXU-aligned contraction
    Cp = pl.cdiv(Cout, LANE) * LANE                           # lane-dense output channels

    # ---- XLA glue: NCHW -> NHWC, spatial zero-pad; weights padded + pre-cast to bf16 ----
    x_nhwc = jnp.transpose(x, (0, 2, 3, 1))
    x_pad = jnp.pad(x_nhwc, ((0, 0), (ph, ph), (pw, pw), (0, 0)))
    Hp, Wp = H + 2 * ph, W + 2 * pw
    w2d = jnp.pad(w_hwio.reshape(K, Cout),
                  ((0, Kp - K), (0, Cp - Cout))).astype(jnp.bfloat16)
    gamma_p = jnp.pad(gamma.astype(jnp.float32), (0, Cp - Cout)).reshape(1, Cp)
    beta_p = jnp.pad(beta.astype(jnp.float32), (0, Cp - Cout)).reshape(1, Cp)

    pooled = pl.pallas_call(
        functools.partial(_conv_block_kernel, N=N, H=H, W=W, KH=KH, KW=KW,
                          Cin=Cin, K=K, Kp=Kp, eps=eps),
        grid=(1,),                                            # whole batch in one step
        in_specs=[
            pl.BlockSpec((N, Hp, Wp, Cin), lambda i: (0, 0, 0, 0)),
            pl.BlockSpec((Kp, Cp), lambda i: (0, 0)),
            pl.BlockSpec((1, Cp), lambda i: (0, 0)),
            pl.BlockSpec((1, Cp), lambda i: (0, 0)),
        ],
        out_specs=pl.BlockSpec((N, Ho, Wo, Cp), lambda i: (0, 0, 0, 0)),
        out_shape=jax.ShapeDtypeStruct((N, Ho, Wo, Cp), jnp.float32),
        scratch_shapes=[
            pltpu.VMEM((N * H, W, Cp), jnp.float32),          # pre-pool tile (256 KiB)
            pltpu.VMEM((N * Ho, W, Cp), jnp.float32),         # after H-pool  (128 KiB)
        ],
        compiler_params=pltpu.CompilerParams(
            dimension_semantics=("arbitrary",),
            vmem_limit_bytes=32 * 1024 * 1024),               # safe on v5e/v6e (128 MiB) and v7x (64 MiB)
    )(x_pad, w2d, gamma_p, beta_p)

    return jnp.transpose(pooled[..., :Cout], (0, 3, 1, 2))


def _reference(x, w_hwio, bias, gamma, beta, eps=1e-5):
    """Pure-JAX f32 reference mirroring the PyTorch train-mode forward."""
    w_oihw = jnp.transpose(w_hwio, (3, 2, 0, 1))
    y = jax.lax.conv_general_dilated(
        x, w_oihw, window_strides=(1, 1), padding=((2, 2), (2, 2)),
        dimension_numbers=("NCHW", "OIHW", "NCHW"),
        precision=jax.lax.Precision.HIGHEST)
    y = y + bias[None, :, None, None]
    mean = jnp.mean(y, axis=(0, 2, 3), keepdims=True)
    var = jnp.mean((y - mean) ** 2, axis=(0, 2, 3), keepdims=True)
    y = (y - mean) * jax.lax.rsqrt(var + eps)
    y = y * gamma[None, :, None, None] + beta[None, :, None, None]
    y = jnp.maximum(y, 0.0)
    return jax.lax.reduce_window(y, -jnp.inf, jax.lax.max,
                                 (1, 1, 2, 2), (1, 1, 2, 2), "VALID")


if __name__ == "__main__":
    N, Cin, Cout, H, W = 2, 4, 8, 16, 16

    key = jax.random.PRNGKey(0)
    kx, kw, kb = jax.random.split(key, 3)
    x = jax.random.normal(kx, (N, Cin, H, W), jnp.float32)
    w_hwio = jax.random.normal(kw, (5, 5, Cin, Cout), jnp.float32) * 0.1
    bias = jax.random.normal(kb, (Cout,), jnp.float32) * 0.1
    gamma = jnp.ones((Cout,), jnp.float32)   # BatchNorm2d default init
    beta = jnp.zeros((Cout,), jnp.float32)   # BatchNorm2d default init

    out = jax.jit(conv_block)(x, w_hwio, bias, gamma, beta)
    out = jax.block_until_ready(out)

    ref = _reference(x, w_hwio, bias, gamma, beta)
    assert out.shape == (N, Cout, H // 2, W // 2), out.shape
    # bf16 MXU inputs (f32 accumulation) vs f32-HIGHEST reference -> bf16-level tolerance
    np.testing.assert_allclose(np.asarray(out), np.asarray(ref), rtol=3e-2, atol=3e-2)

    print("KERNEL_OK")
</pallas_src>

<mosaic_0001>
module attributes {stable_mosaic.version = 11 : i64} {
  func.func @_conv_block_kernel(%arg0: i32, %arg1: memref<2x20x20x4xf32, #tpu.memory_space<vmem>>, %arg2: memref<128x128xbf16, #tpu.memory_space<vmem>>, %arg3: memref<1x128xf32, #tpu.memory_space<vmem>>, %arg4: memref<1x128xf32, #tpu.memory_space<vmem>>, %arg5: memref<2x8x8x128xf32, #tpu.memory_space<vmem>>, %arg6: memref<32x16x128xf32, #tpu.memory_space<vmem>>, %arg7: memref<16x16x128xf32, #tpu.memory_space<vmem>>) attributes {dimension_semantics = [#tpu.dimension_semantics<arbitrary>], iteration_bounds = array<i64: 1>, scalar_prefetch = 0 : i64, scratch_operands = 2 : i64, tpu.core_type = #tpu.core_type<tc>, window_params = [{pipeline_mode = #tpu.pipeline_mode<synchronous>, transform_indices = @transform_0, window_bounds = array<i64: 2, 20, 20, 4>}, {pipeline_mode = #tpu.pipeline_mode<synchronous>, transform_indices = @transform_1, window_bounds = array<i64: 128, 128>}, {pipeline_mode = #tpu.pipeline_mode<synchronous>, transform_indices = @transform_2, window_bounds = array<i64: 1, 128>}, {pipeline_mode = #tpu.pipeline_mode<synchronous>, transform_indices = @transform_3, window_bounds = array<i64: 1, 128>}, {pipeline_mode = #tpu.pipeline_mode<synchronous>, transform_indices = @transform_4, window_bounds = array<i64: 2, 8, 8, 128>}]} {
    %c0 = arith.constant 0 : index
    %c0_0 = arith.constant 0 : index
    %c0_1 = arith.constant 0 : index
    %c0_2 = arith.constant 0 : index
    %0 = vector.load %arg1[%c0, %c0_0, %c0_1, %c0_2] : memref<2x20x20x4xf32, #tpu.memory_space<vmem>>, vector<2x20x20x4xf32>
    %1 = vector.extract_strided_slice %0 {offsets = [0, 0, 0, 0], sizes = [2, 16, 16, 4], strides = [1, 1, 1, 1]} : vector<2x20x20x4xf32> to vector<2x16x16x4xf32>
    %2 = vector.extract_strided_slice %0 {offsets = [0, 0, 1, 0], sizes = [2, 16, 16, 4], strides = [1, 1, 1, 1]} : vector<2x20x20x4xf32> to vector<2x16x16x4xf32>
    %3 = vector.extract_strided_slice %0 {offsets = [0, 0, 2, 0], sizes = [2, 16, 16, 4], strides = [1, 1, 1, 1]} : vector<2x20x20x4xf32> to vector<2x16x16x4xf32>
    %4 = vector.extract_strided_slice %0 {offsets = [0, 0, 3, 0], sizes = [2, 16, 16, 4], strides = [1, 1, 1, 1]} : vector<2x20x20x4xf32> to vector<2x16x16x4xf32>
    %5 = vector.extract_strided_slice %0 {offsets = [0, 0, 4, 0], sizes = [2, 16, 16, 4], strides = [1, 1, 1, 1]} : vector<2x20x20x4xf32> to vector<2x16x16x4xf32>
    %6 = tpu.concatenate %1, %2, %3, %4, %5 in 3 : vector<2x16x16x4xf32>, vector<2x16x16x4xf32>, vector<2x16x16x4xf32>, vector<2x16x16x4xf32>, vector<2x16x16x4xf32> -> vector<2x16x16x20xf32>
    %7 = vector.extract_strided_slice %0 {offsets = [0, 1, 0, 0], sizes = [2, 16, 16, 4], strides = [1, 1, 1, 1]} : vector<2x20x20x4xf32> to vector<2x16x16x4xf32>
    %8 = vector.extract_strided_slice %0 {offsets = [0, 1, 1, 0], sizes = [2, 16, 16, 4], strides = [1, 1, 1, 1]} : vector<2x20x20x4xf32> to vector<2x16x16x4xf32>
    %9 = vector.extract_strided_slice %0 {offsets = [0, 1, 2, 0], sizes = [2, 16, 16, 4], strides = [1, 1, 1, 1]} : vector<2x20x20x4xf32> to vector<2x16x16x4xf32>
    %10 = vector.extract_strided_slice %0 {offsets = [0, 1, 3, 0], sizes = [2, 16, 16, 4], strides = [1, 1, 1, 1]} : vector<2x20x20x4xf32> to vector<2x16x16x4xf32>
    %11 = vector.extract_strided_slice %0 {offsets = [0, 1, 4, 0], sizes = [2, 16, 16, 4], strides = [1, 1, 1, 1]} : vector<2x20x20x4xf32> to vector<2x16x16x4xf32>
    %12 = tpu.concatenate %7, %8, %9, %10, %11 in 3 : vector<2x16x16x4xf32>, vector<2x16x16x4xf32>, vector<2x16x16x4xf32>, vector<2x16x16x4xf32>, vector<2x16x16x4xf32> -> vector<2x16x16x20xf32>
    %13 = vector.extract_strided_slice %0 {offsets = [0, 2, 0, 0], sizes = [2, 16, 16, 4], strides = [1, 1, 1, 1]} : vector<2x20x20x4xf32> to vector<2x16x16x4xf32>
    %14 = vector.extract_strided_slice %0 {offsets = [0, 2, 1, 0], sizes = [2, 16, 16, 4], strides = [1, 1, 1, 1]} : vector<2x20x20x4xf32> to vector<2x16x16x4xf32>
    %15 = vector.extract_strided_slice %0 {offsets = [0, 2, 2, 0], sizes = [2, 16, 16, 4], strides = [1, 1, 1, 1]} : vector<2x20x20x4xf32> to vector<2x16x16x4xf32>
    %16 = vector.extract_strided_slice %0 {offsets = [0, 2, 3, 0], sizes = [2, 16, 16, 4], strides = [1, 1, 1, 1]} : vector<2x20x20x4xf32> to vector<2x16x16x4xf32>
    %17 = vector.extract_strided_slice %0 {offsets = [0, 2, 4, 0], sizes = [2, 16, 16, 4], strides = [1, 1, 1, 1]} : vector<2x20x20x4xf32> to vector<2x16x16x4xf32>
    %18 = tpu.concatenate %13, %14, %15, %16, %17 in 3 : vector<2x16x16x4xf32>, vector<2x16x16x4xf32>, vector<2x16x16x4xf32>, vector<2x16x16x4xf32>, vector<2x16x16x4xf32> -> vector<2x16x16x20xf32>
    %19 = vector.extract_strided_slice %0 {offsets = [0, 3, 0, 0], sizes = [2, 16, 16, 4], strides = [1, 1, 1, 1]} : vector<2x20x20x4xf32> to vector<2x16x16x4xf32>
    %20 = vector.extract_strided_slice %0 {offsets = [0, 3, 1, 0], sizes = [2, 16, 16, 4], strides = [1, 1, 1, 1]} : vector<2x20x20x4xf32> to vector<2x16x16x4xf32>
    %21 = vector.extract_strided_slice %0 {offsets = [0, 3, 2, 0], sizes = [2, 16, 16, 4], strides = [1, 1, 1, 1]} : vector<2x20x20x4xf32> to vector<2x16x16x4xf32>
    %22 = vector.extract_strided_slice %0 {offsets = [0, 3, 3, 0], sizes = [2, 16, 16, 4], strides = [1, 1, 1, 1]} : vector<2x20x20x4xf32> to vector<2x16x16x4xf32>
    %23 = vector.extract_strided_slice %0 {offsets = [0, 3, 4, 0], sizes = [2, 16, 16, 4], strides = [1, 1, 1, 1]} : vector<2x20x20x4xf32> to vector<2x16x16x4xf32>
    %24 = tpu.concatenate %19, %20, %21, %22, %23 in 3 : vector<2x16x16x4xf32>, vector<2x16x16x4xf32>, vector<2x16x16x4xf32>, vector<2x16x16x4xf32>, vector<2x16x16x4xf32> -> vector<2x16x16x20xf32>
    %25 = vector.extract_strided_slice %0 {offsets = [0, 4, 0, 0], sizes = [2, 16, 16, 4], strides = [1, 1, 1, 1]} : vector<2x20x20x4xf32> to vector<2x16x16x4xf32>
    %26 = vector.extract_strided_slice %0 {offsets = [0, 4, 1, 0], sizes = [2, 16, 16, 4], strides = [1, 1, 1, 1]} : vector<2x20x20x4xf32> to vector<2x16x16x4xf32>
    %27 = vector.extract_strided_slice %0 {offsets = [0, 4, 2, 0], sizes = [2, 16, 16, 4], strides = [1, 1, 1, 1]} : vector<2x20x20x4xf32> to vector<2x16x16x4xf32>
    %28 = vector.extract_strided_slice %0 {offsets = [0, 4, 3, 0], sizes = [2, 16, 16, 4], strides = [1, 1, 1, 1]} : vector<2x20x20x4xf32> to vector<2x16x16x4xf32>
    %29 = vector.extract_strided_slice %0 {offsets = [0, 4, 4, 0], sizes = [2, 16, 16, 4], strides = [1, 1, 1, 1]} : vector<2x20x20x4xf32> to vector<2x16x16x4xf32>
    %30 = tpu.concatenate %25, %26, %27, %28, %29 in 3 : vector<2x16x16x4xf32>, vector<2x16x16x4xf32>, vector<2x16x16x4xf32>, vector<2x16x16x4xf32>, vector<2x16x16x4xf32> -> vector<2x16x16x20xf32>
    %cst = arith.constant 0.000000e+00 : f32
    %31 = vector.broadcast %cst : f32 to vector<2x16x16x28xf32>
    %32 = tpu.concatenate %6, %12, %18, %24, %30, %31 in 3 : vector<2x16x16x20xf32>, vector<2x16x16x20xf32>, vector<2x16x16x20xf32>, vector<2x16x16x20xf32>, vector<2x16x16x20xf32>, vector<2x16x16x28xf32> -> vector<2x16x16x128xf32>
    %33 = vector.shape_cast %32 : vector<2x16x16x128xf32> to vector<512x128xf32>
    %34 = arith.truncf %33 : vector<512x128xf32> to vector<512x128xbf16>
    %c0_3 = arith.constant 0 : index
    %c0_4 = arith.constant 0 : index
    %35 = vector.load %arg2[%c0_3, %c0_4] : memref<128x128xbf16, #tpu.memory_space<vmem>>, vector<128x128xbf16>
    %cst_5 = arith.constant dense<0.000000e+00> : vector<512x128xf32>
    %36 = tpu.matmul %34, %35, %cst_5 {dimension_numbers = #tpu.dot_dimension_numbers<[1], [0], [0], [1], [0, 0, 1, 1], [], []>} : vector<512x128xbf16>, vector<128x128xbf16>, vector<512x128xf32> -> vector<512x128xf32>
    %cst_6 = arith.constant dense<0.000000e+00> : vector<128xf32>
    %37 = vector.multi_reduction <add>, %36, %cst_6 [0] : vector<512x128xf32> to vector<128xf32>
    %38 = vector.shape_cast %37 : vector<128xf32> to vector<1x128xf32>
    %cst_7 = arith.constant 5.120000e+02 : f32
    %39 = vector.broadcast %cst_7 : f32 to vector<1x128xf32>
    %40 = arith.divf %38, %39 : vector<1x128xf32>
    %41 = arith.mulf %36, %36 : vector<512x128xf32>
    %cst_8 = arith.constant dense<0.000000e+00> : vector<128xf32>
    %42 = vector.multi_reduction <add>, %41, %cst_8 [0] : vector<512x128xf32> to vector<128xf32>
    %43 = vector.shape_cast %42 : vector<128xf32> to vector<1x128xf32>
    %cst_9 = arith.constant 5.120000e+02 : f32
    %44 = vector.broadcast %cst_9 : f32 to vector<1x128xf32>
    %45 = arith.divf %43, %44 : vector<1x128xf32>
    %46 = arith.mulf %40, %40 : vector<1x128xf32>
    %47 = arith.subf %45, %46 : vector<1x128xf32>
    %cst_10 = arith.constant 0.000000e+00 : f32
    %48 = vector.broadcast %cst_10 : f32 to vector<1x128xf32>
    %49 = arith.maximumf %47, %48 : vector<1x128xf32>
    %c0_11 = arith.constant 0 : index
    %c0_12 = arith.constant 0 : index
    %50 = vector.load %arg3[%c0_11, %c0_12] : memref<1x128xf32, #tpu.memory_space<vmem>>, vector<1x128xf32>
    %cst_13 = arith.constant 9.99999974E-6 : f32
    %51 = vector.broadcast %cst_13 : f32 to vector<1x128xf32>
    %52 = arith.addf %49, %51 : vector<1x128xf32>
    %53 = math.rsqrt %52 : vector<1x128xf32>
    %54 = arith.mulf %50, %53 : vector<1x128xf32>
    %c0_14 = arith.constant 0 : index
    %c0_15 = arith.constant 0 : index
    %55 = vector.load %arg4[%c0_14, %c0_15] : memref<1x128xf32, #tpu.memory_space<vmem>>, vector<1x128xf32>
    %56 = arith.mulf %40, %54 : vector<1x128xf32>
    %57 = arith.subf %55, %56 : vector<1x128xf32>
    %58 = vector.broadcast %54 : vector<1x128xf32> to vector<512x128xf32>
    %59 = arith.mulf %36, %58 : vector<512x128xf32>
    %60 = vector.broadcast %57 : vector<1x128xf32> to vector<512x128xf32>
    %61 = arith.addf %59, %60 : vector<512x128xf32>
    %cst_16 = arith.constant 0.000000e+00 : f32
    %62 = vector.broadcast %cst_16 : f32 to vector<512x128xf32>
    %63 = arith.maximumf %61, %62 : vector<512x128xf32>
    %64 = vector.shape_cast %63 : vector<512x128xf32> to vector<32x16x128xf32>
    %c0_17 = arith.constant 0 : index
    %c0_18 = arith.constant 0 : index
    %c0_19 = arith.constant 0 : index
    %65 = vector.load %arg6[%c0_17, %c0_18, %c0_19] : memref<32x16x128xf32, #tpu.memory_space<vmem>>, vector<32x16x128xf32>
    tpu.vector_store %arg6[%c0_17, %c0_18, %c0_19], %64 {strides = array<i32>} : memref<32x16x128xf32, #tpu.memory_space<vmem>>, vector<32x16x128xf32>,
    %c0_20 = arith.constant 0 : index
    %c0_21 = arith.constant 0 : index
    %c0_22 = arith.constant 0 : index
    %66 = tpu.strided_load %arg6[%c0_20, %c0_21, %c0_22] {strides = array<i32: 2, 1, 1>} : memref<32x16x128xf32, #tpu.memory_space<vmem>>, vector<16x16x128xf32>
    %c1 = arith.constant 1 : index
    %c0_23 = arith.constant 0 : index
    %c0_24 = arith.constant 0 : index
    %67 = tpu.strided_load %arg6[%c1, %c0_23, %c0_24] {strides = array<i32: 2, 1, 1>} : memref<32x16x128xf32, #tpu.memory_space<vmem>>, vector<16x16x128xf32>
    %68 = arith.maximumf %66, %67 : vector<16x16x128xf32>
    %c0_25 = arith.constant 0 : index
    %c0_26 = arith.constant 0 : index
    %c0_27 = arith.constant 0 : index
    %69 = vector.load %arg7[%c0_25, %c0_26, %c0_27] : memref<16x16x128xf32, #tpu.memory_space<vmem>>, vector<16x16x128xf32>
    tpu.vector_store %arg7[%c0_25, %c0_26, %c0_27], %68 {strides = array<i32>} : memref<16x16x128xf32, #tpu.memory_space<vmem>>, vector<16x16x128xf32>,
    %c0_28 = arith.constant 0 : index
    %c0_29 = arith.constant 0 : index
    %c0_30 = arith.constant 0 : index
    %70 = tpu.strided_load %arg7[%c0_28, %c0_29, %c0_30] {strides = array<i32: 1, 2, 1>} : memref<16x16x128xf32, #tpu.memory_space<vmem>>, vector<16x8x128xf32>
    %c0_31 = arith.constant 0 : index
    %c1_32 = arith.constant 1 : index
    %c0_33 = arith.constant 0 : index
    %71 = tpu.strided_load %arg7[%c0_31, %c1_32, %c0_33] {strides = array<i32: 1, 2, 1>} : memref<16x16x128xf32, #tpu.memory_space<vmem>>, vector<16x8x128xf32>
    %72 = arith.maximumf %70, %71 : vector<16x8x128xf32>
    %73 = vector.shape_cast %72 : vector<16x8x128xf32> to vector<2x8x8x128xf32>
    %c0_34 = arith.constant 0 : index
    %c0_35 = arith.constant 0 : index
    %c0_36 = arith.constant 0 : index
    %c0_37 = arith.constant 0 : index
    %74 = vector.load %arg5[%c0_34, %c0_35, %c0_36, %c0_37] : memref<2x8x8x128xf32, #tpu.memory_space<vmem>>, vector<2x8x8x128xf32>
    tpu.vector_store %arg5[%c0_34, %c0_35, %c0_36, %c0_37], %73 {strides = array<i32>} : memref<2x8x8x128xf32, #tpu.memory_space<vmem>>, vector<2x8x8x128xf32>,
    return
  }
  func.func @transform_0(%arg0: i32) -> (i32, i32, i32, i32) {
    %c0_i32 = arith.constant 0 : i32
    %c0_i32_0 = arith.constant 0 : i32
    %c0_i32_1 = arith.constant 0 : i32
    %c0_i32_2 = arith.constant 0 : i32
    %c0_i32_3 = arith.constant 0 : i32
    return %c0_i32, %c0_i32_0, %c0_i32_1, %c0_i32_2 : i32, i32, i32, i32
  }
  func.func @transform_1(%arg0: i32) -> (i32, i32) {
    %c0_i32 = arith.constant 0 : i32
    %c0_i32_0 = arith.constant 0 : i32
    %c0_i32_1 = arith.constant 0 : i32
    return %c0_i32, %c0_i32_0 : i32, i32
  }
  func.func @transform_2(%arg0: i32) -> (i32, i32) {
    %c0_i32 = arith.constant 0 : i32
    %c0_i32_0 = arith.constant 0 : i32
    %c0_i32_1 = arith.constant 0 : i32
    return %c0_i32, %c0_i32_0 : i32, i32
  }
  func.func @transform_3(%arg0: i32) -> (i32, i32) {
    %c0_i32 = arith.constant 0 : i32
    %c0_i32_0 = arith.constant 0 : i32
    %c0_i32_1 = arith.constant 0 : i32
    return %c0_i32, %c0_i32_0 : i32, i32
  }
  func.func @transform_4(%arg0: i32) -> (i32, i32, i32, i32) {
    %c0_i32 = arith.constant 0 : i32
    %c0_i32_0 = arith.constant 0 : i32
    %c0_i32_1 = arith.constant 0 : i32
    %c0_i32_2 = arith.constant 0 : i32
    %c0_i32_3 = arith.constant 0 : i32
    return %c0_i32, %c0_i32_0, %c0_i32_1, %c0_i32_2 : i32, i32, i32, i32
  }
}

</mosaic_0001>

<llo_original>
// kernel: conv_block.1
$region0: #{conv_block.1}
  #allocation0 [shape = 'u32[]', space=smem, size = 0x4, offset = 0x4, fixed_abs, tag = 'smem constant byte address 0x4 - core index']
  #allocation1 [shape = 'u32[144,128]{1,0:T(1,128)}', space=vmem, size = 0x12000, scoped, tag = 'internal scratch']
  #allocation2 [shape = 'f32[32,16,128]{2,1,0:T(8,128)}', space=vmem, size = 0x40000, scoped, tag = 'scratch operand']
  #allocation3 [shape = 'f32[16,16,128]{2,1,0:T(8,128)}', space=vmem, size = 0x20000, scoped, tag = 'scratch operand']
  %s0 = inlined_call_operand.vmem [shape: f32[2,20,20,4], index: 0, kind: input, shape index: {}]
  %s1 = inlined_call_operand.vmem [shape: bf16[128,128], index: 1, kind: input, shape index: {}]
  %s2 = inlined_call_operand.vmem [shape: f32[1,128], index: 2, kind: input, shape index: {}]
  %s3 = inlined_call_operand.vmem [shape: f32[1,128], index: 3, kind: input, shape index: {}]
  %s4 = inlined_call_operand.vmem [shape: f32[2,8,8,128], index: 4, kind: output, shape index: {}]
  %s5 = sld [smem:[#allocation0]]
  $region26: #{conv_block.1} parent=0
    _
  %s7 = ssub.s32 1, %s5
  %s8 = scalar_select 0, %s7, %s5
  // Predicated region
  $region2: #{conv_block.1} parent=0 // pred_check
    _
  $region3: #{conv_block.1} parent=0 // pred_check_branch
    %10 = sbr.rel (0) target = $region5
  $region4: #{conv_block.1} parent=0 // pred_region
    _
  $region5: #{conv_block.1} parent=0 // pred_fallthru
    _
  // Predicated region
  $region6: #{conv_block.1} parent=0 // pred_check
    _
  $region7: #{conv_block.1} parent=0 // pred_check_branch
    %12 = sbr.rel (0) target = $region9
  $region8: #{conv_block.1} parent=0 // pred_region
    _
  $region9: #{conv_block.1} parent=0 // pred_fallthru
    _
  // Predicated region
  $region10: #{conv_block.1} parent=0 // pred_check
    _
  $region11: #{conv_block.1} parent=0 // pred_check_branch
    %14 = sbr.rel (0) target = $region13
  $region12: #{conv_block.1} parent=0 // pred_region
    _
  $region13: #{conv_block.1} parent=0 // pred_fallthru
    _
  // Predicated region
  $region14: #{conv_block.1} parent=0 // pred_check
    _
  $region15: #{conv_block.1} parent=0 // pred_check_branch
    %16 = sbr.rel (0) target = $region17
  $region16: #{conv_block.1} parent=0 // pred_region
    _
  $region17: #{conv_block.1} parent=0 // pred_fallthru
    _
  %v18 = vld [vmem:[%s0] sm:$0xff]
  %v19 = vld [vmem:[%s0 + $0x8] sm:$0xff]
  %v20 = vld [vmem:[%s0 + $0x10] sm:$0xf]
  %v21 = vld [vmem:[%s0 + $0x18] sm:$0xff]
  %v22 = vld [vmem:[%s0 + $0x20] sm:$0xff]
  %v23 = vld [vmem:[%s0 + $0x28] sm:$0xf]
  %v24 = vld [vmem:[%s0 + $0x30] sm:$0xff]
  %v25 = vld [vmem:[%s0 + $0x38] sm:$0xff]
  %v26 = vld [vmem:[%s0 + $0x40] sm:$0xf]
  %v27 = vld [vmem:[%s0 + $0x48] sm:$0xff]
  %v28 = vld [vmem:[%s0 + $0x50] sm:$0xff]
  %v29 = vld [vmem:[%s0 + $0x58] sm:$0xf]
  %v30 = vld [vmem:[%s0 + $0x60] sm:$0xff]
  %v31 = vld [vmem:[%s0 + $0x68] sm:$0xff]
  %v32 = vld [vmem:[%s0 + $0x70] sm:$0xf]
  %v33 = vld [vmem:[%s0 + $0x78] sm:$0xff]
  %v34 = vld [vmem:[%s0 + $0x80] sm:$0xff]
  %v35 = vld [vmem:[%s0 + $0x88] sm:$0xf]
  %v36 = vld [vmem:[%s0 + $0x90] sm:$0xff]
  %v37 = vld [vmem:[%s0 + $0x98] sm:$0xff]
  %v38 = vld [vmem:[%s0 + $0xa0] sm:$0xf]
  %v39 = vld [vmem:[%s0 + $0xa8] sm:$0xff]
  %v40 = vld [vmem:[%s0 + $0xb0] sm:$0xff]
  %v41 = vld [vmem:[%s0 + $0xb8] sm:$0xf]
  %v42 = vld [vmem:[%s0 + $0xc0] sm:$0xff]
  %v43 = vld [vmem:[%s0 + $0xc8] sm:$0xff]
  %v44 = vld [vmem:[%s0 + $0xd0] sm:$0xf]
  %v45 = vld [vmem:[%s0 + $0xd8] sm:$0xff]
  %v46 = vld [vmem:[%s0 + $0xe0] sm:$0xff]
  %v47 = vld [vmem:[%s0 + $0xe8] sm:$0xf]
  %v48 = vld [vmem:[%s0 + $0xf0] sm:$0xff]
  %v49 = vld [vmem:[%s0 + $0xf8] sm:$0xff]
  %v50 = vld [vmem:[%s0 + $0x100] sm:$0xf]
  %v51 = vld [vmem:[%s0 + $0x108] sm:$0xff]
  %v52 = vld [vmem:[%s0 + $0x110] sm:$0xff]
  %v53 = vld [vmem:[%s0 + $0x118] sm:$0xf]
  %v54 = vld [vmem:[%s0 + $0x120] sm:$0xff]
  %v55 = vld [vmem:[%s0 + $0x128] sm:$0xff]
  %v56 = vld [vmem:[%s0 + $0x130] sm:$0xf]
  %v57 = vld [vmem:[%s0 + $0x138] sm:$0xff]
  %v58 = vld [vmem:[%s0 + $0x140] sm:$0xff]
  %v59 = vld [vmem:[%s0 + $0x148] sm:$0xf]
  %v60 = vld [vmem:[%s0 + $0x150] sm:$0xff]
  %v61 = vld [vmem:[%s0 + $0x158] sm:$0xff]
  %v62 = vld [vmem:[%s0 + $0x160] sm:$0xf]
  %v63 = vld [vmem:[%s0 + $0x168] sm:$0xff]
  %v64 = vld [vmem:[%s0 + $0x170] sm:$0xff]
  %v65 = vld [vmem:[%s0 + $0x178] sm:$0xf]
  %v66 = vld [vmem:[%s0 + $0x180] sm:$0xff]
  %v67 = vld [vmem:[%s0 + $0x188] sm:$0xff]
  %v68 = vld [vmem:[%s0 + $0x190] sm:$0xf]
  %v69 = vld [vmem:[%s0 + $0x198] sm:$0xff]
  %v70 = vld [vmem:[%s0 + $0x1a0] sm:$0xff]
  %v71 = vld [vmem:[%s0 + $0x1a8] sm:$0xf]
  %v72 = vld [vmem:[%s0 + $0x1b0] sm:$0xff]
  %v73 = vld [vmem:[%s0 + $0x1b8] sm:$0xff]
  %v74 = vld [vmem:[%s0 + $0x1c0] sm:$0xf]
  %v75 = vld [vmem:[%s0 + $0x1c8] sm:$0xff]
  %v76 = vld [vmem:[%s0 + $0x1d0] sm:$0xff]
  %v77 = vld [vmem:[%s0 + $0x1d8] sm:$0xf]
  %v78 = vld [vmem:[%s0 + $0x1e0] sm:$0xff]
  %v79 = vld [vmem:[%s0 + $0x1e8] sm:$0xff]
  %v80 = vld [vmem:[%s0 + $0x1f0] sm:$0xf]
  %v81 = vld [vmem:[%s0 + $0x1f8] sm:$0xff]
  %v82 = vld [vmem:[%s0 + $0x200] sm:$0xff]
  %v83 = vld [vmem:[%s0 + $0x208] sm:$0xf]
  %v84 = vld [vmem:[%s0 + $0x210] sm:$0xff]
  %v85 = vld [vmem:[%s0 + $0x218] sm:$0xff]
  %v86 = vld [vmem:[%s0 + $0x220] sm:$0xf]
  %v87 = vld [vmem:[%s0 + $0x228] sm:$0xff]
  %v88 = vld [vmem:[%s0 + $0x230] sm:$0xff]
  %v89 = vld [vmem:[%s0 + $0x238] sm:$0xf]
  %v90 = vld [vmem:[%s0 + $0x240] sm:$0xff]
  %v91 = vld [vmem:[%s0 + $0x248] sm:$0xff]
  %v92 = vld [vmem:[%s0 + $0x250] sm:$0xf]
  %v93 = vld [vmem:[%s0 + $0x258] sm:$0xff]
  %v94 = vld [vmem:[%s0 + $0x260] sm:$0xff]
  %v95 = vld [vmem:[%s0 + $0x268] sm:$0xf]
  %v96 = vld [vmem:[%s0 + $0x270] sm:$0xff]
  %v97 = vld [vmem:[%s0 + $0x278] sm:$0xff]
  %v98 = vld [vmem:[%s0 + $0x280] sm:$0xf]
  %v99 = vld [vmem:[%s0 + $0x288] sm:$0xff]
  %v100 = vld [vmem:[%s0 + $0x290] sm:$0xff]
  %v101 = vld [vmem:[%s0 + $0x298] sm:$0xf]
  %v102 = vld [vmem:[%s0 + $0x2a0] sm:$0xff]
  %v103 = vld [vmem:[%s0 + $0x2a8] sm:$0xff]
  %v104 = vld [vmem:[%s0 + $0x2b0] sm:$0xf]
  %v105 = vld [vmem:[%s0 + $0x2b8] sm:$0xff]
  %v106 = vld [vmem:[%s0 + $0x2c0] sm:$0xff]
  %v107 = vld [vmem:[%s0 + $0x2c8] sm:$0xf]
  %v108 = vld [vmem:[%s0 + $0x2d0] sm:$0xff]
  %v109 = vld [vmem:[%s0 + $0x2d8] sm:$0xff]
  %v110 = vld [vmem:[%s0 + $0x2e0] sm:$0xf]
  %v111 = vld [vmem:[%s0 + $0x2e8] sm:$0xff]
  %v112 = vld [vmem:[%s0 + $0x2f0] sm:$0xff]
  %v113 = vld [vmem:[%s0 + $0x2f8] sm:$0xf]
  %v114 = vld [vmem:[%s0 + $0x300] sm:$0xff]
  %v115 = vld [vmem:[%s0 + $0x308] sm:$0xff]
  %v116 = vld [vmem:[%s0 + $0x310] sm:$0xf]
  %v117 = vld [vmem:[%s0 + $0x318] sm:$0xff]
  %v118 = vld [vmem:[%s0 + $0x320] sm:$0xff]
  %v119 = vld [vmem:[%s0 + $0x328] sm:$0xf]
  %v120 = vld [vmem:[%s0 + $0x330] sm:$0xff]
  %v121 = vld [vmem:[%s0 + $0x338] sm:$0xff]
  %v122 = vld [vmem:[%s0 + $0x340] sm:$0xf]
  %v123 = vld [vmem:[%s0 + $0x348] sm:$0xff]
  %v124 = vld [vmem:[%s0 + $0x350] sm:$0xff]
  %v125 = vld [vmem:[%s0 + $0x358] sm:$0xf]
  %v126 = vld [vmem:[%s0 + $0x360] sm:$0xff]
  %v127 = vld [vmem:[%s0 + $0x368] sm:$0xff]
  %v128 = vld [vmem:[%s0 + $0x370] sm:$0xf]
  %v129 = vld [vmem:[%s0 + $0x378] sm:$0xff]
  %v130 = vld [vmem:[%s0 + $0x380] sm:$0xff]
  %v131 = vld [vmem:[%s0 + $0x388] sm:$0xf]
  %v132 = vld [vmem:[%s0 + $0x390] sm:$0xff]
  %v133 = vld [vmem:[%s0 + $0x398] sm:$0xff]
  %v134 = vld [vmem:[%s0 + $0x3a0] sm:$0xf]
  %v135 = vld [vmem:[%s0 + $0x3a8] sm:$0xff]
  %v136 = vld [vmem:[%s0 + $0x3b0] sm:$0xff]
  %v137 = vld [vmem:[%s0 + $0x3b8] sm:$0xf]
  %vm234 = vcmask 1046528
  %v235 = vrot.slane %v18, 1
  %v236 = vrot.slane %v19, 1
  %v237 = vsel %vm234, %v235, %v236
  %v238 = vrot.slane %v20, 1
  %v239 = vsel %vm234, %v236, %v238
  %v240 = vrot.slane %v21, 1
  %v241 = vrot.slane %v22, 1
  %v242 = vsel %vm234, %v240, %v241
  %v243 = vrot.slane %v23, 1
  %v244 = vsel %vm234, %v241, %v243
  %v245 = vrot.slane %v24, 1
  %v246 = vrot.slane %v25, 1
  %v247 = vsel %vm234, %v245, %v246
  %v248 = vrot.slane %v26, 1
  %v249 = vsel %vm234, %v246, %v248
  %v250 = vrot.slane %v27, 1
  %v251 = vrot.slane %v28, 1
  %v252 = vsel %vm234, %v250, %v251
  %v253 = vrot.slane %v29, 1
  %v254 = vsel %vm234, %v251, %v253
  %v255 = vrot.slane %v30, 1
  %v256 = vrot.slane %v31, 1
  %v257 = vsel %vm234, %v255, %v256
  %v258 = vrot.slane %v32, 1
  %v259 = vsel %vm234, %v256, %v258
  %v260 = vrot.slane %v33, 1
  %v261 = vrot.slane %v34, 1
  %v262 = vsel %vm234, %v260, %v261
  %v263 = vrot.slane %v35, 1
  %v264 = vsel %vm234, %v261, %v263
  %v265 = vrot.slane %v36, 1
  %v266 = vrot.slane %v37, 1
  %v267 = vsel %vm234, %v265, %v266
  %v268 = vrot.slane %v38, 1
  %v269 = vsel %vm234, %v266, %v268
  %v270 = vrot.slane %v39, 1
  %v271 = vrot.slane %v40, 1
  %v272 = vsel %vm234, %v270, %v271
  %v273 = vrot.slane %v41, 1
  %v274 = vsel %vm234, %v271, %v273
  %v275 = vrot.slane %v42, 1
  %v276 = vrot.slane %v43, 1
  %v277 = vsel %vm234, %v275, %v276
  %v278 = vrot.slane %v44, 1
  %v279 = vsel %vm234, %v276, %v278
  %v280 = vrot.slane %v45, 1
  %v281 = vrot.slane %v46, 1
  %v282 = vsel %vm234, %v280, %v281
  %v283 = vrot.slane %v47, 1
  %v284 = vsel %vm234, %v281, %v283
  %v285 = vrot.slane %v48, 1
  %v286 = vrot.slane %v49, 1
  %v287 = vsel %vm234, %v285, %v286
  %v288 = vrot.slane %v50, 1
  %v289 = vsel %vm234, %v286, %v288
  %v290 = vrot.slane %v51, 1
  %v291 = vrot.slane %v52, 1
  %v292 = vsel %vm234, %v290, %v291
  %v293 = vrot.slane %v53, 1
  %v294 = vsel %vm234, %v291, %v293
  %v295 = vrot.slane %v54, 1
  %v296 = vrot.slane %v55, 1
  %v297 = vsel %vm234, %v295, %v296
  %v298 = vrot.slane %v56, 1
  %v299 = vsel %vm234, %v296, %v298
  %v300 = vrot.slane %v57, 1
  %v301 = vrot.slane %v58, 1
  %v302 = vsel %vm234, %v300, %v301
  %v303 = vrot.slane %v59, 1
  %v304 = vsel %vm234, %v301, %v303
  %v305 = vrot.slane %v60, 1
  %v306 = vrot.slane %v61, 1
  %v307 = vsel %vm234, %v305, %v306
  %v308 = vrot.slane %v62, 1
  %v309 = vsel %vm234, %v306, %v308
  %v310 = vrot.slane %v63, 1
  %v311 = vrot.slane %v64, 1
  %v312 = vsel %vm234, %v310, %v311
  %v313 = vrot.slane %v65, 1
  %v314 = vsel %vm234, %v311, %v313
  %v315 = vrot.slane %v78, 1
  %v316 = vrot.slane %v79, 1
  %v317 = vsel %vm234, %v315, %v316
  %v318 = vrot.slane %v80, 1
  %v319 = vsel %vm234, %v316, %v318
  %v320 = vrot.slane %v81, 1
  %v321 = vrot.slane %v82, 1
  %v322 = vsel %vm234, %v320, %v321
  %v323 = vrot.slane %v83, 1
  %v324 = vsel %vm234, %v321, %v323
  %v325 = vrot.slane %v84, 1
  %v326 = vrot.slane %v85, 1
  %v327 = vsel %vm234, %v325, %v326
  %v328 = vrot.slane %v86, 1
  %v329 = vsel %vm234, %v326, %v328
  %v330 = vrot.slane %v87, 1
  %v331 = vrot.slane %v88, 1
  %v332 = vsel %vm234, %v330, %v331
  %v333 = vrot.slane %v89, 1
  %v334 = vsel %vm234, %v331, %v333
  %v335 = vrot.slane %v90, 1
  %v336 = vrot.slane %v91, 1
  %v337 = vsel %vm234, %v335, %v336
  %v338 = vrot.slane %v92, 1
  %v339 = vsel %vm234, %v336, %v338
  %v340 = vrot.slane %v93, 1
  %v341 = vrot.slane %v94, 1
  %v342 = vsel %vm234, %v340, %v341
  %v343 = vrot.slane %v95, 1
  %v344 = vsel %vm234, %v341, %v343
  %v345 = vrot.slane %v96, 1
  %v346 = vrot.slane %v97, 1
  %v347 = vsel %vm234, %v345, %v346
  %v348 = vrot.slane %v98, 1
  %v349 = vsel %vm234, %v346, %v348
  %v350 = vrot.slane %v99, 1
  %v351 = vrot.slane %v100, 1
  %v352 = vsel %vm234, %v350, %v351
  %v353 = vrot.slane %v101, 1
  %v354 = vsel %vm234, %v351, %v353
  %v355 = vrot.slane %v102, 1
  %v356 = vrot.slane %v103, 1
  %v357 = vsel %vm234, %v355, %v356
  %v358 = vrot.slane %v104, 1
  %v359 = vsel %vm234, %v356, %v358
  %v360 = vrot.slane %v105, 1
  %v361 = vrot.slane %v106, 1
  %v362 = vsel %vm234, %v360, %v361
  %v363 = vrot.slane %v107, 1
  %v364 = vsel %vm234, %v361, %v363
  %v365 = vrot.slane %v108, 1
  %v366 = vrot.slane %v109, 1
  %v367 = vsel %vm234, %v365, %v366
  %v368 = vrot.slane %v110, 1
  %v369 = vsel %vm234, %v366, %v368
  %v370 = vrot.slane %v111, 1
  %v371 = vrot.slane %v112, 1
  %v372 = vsel %vm234, %v370, %v371
  %v373 = vrot.slane %v113, 1
  %v374 = vsel %vm234, %v371, %v373
  %v375 = vrot.slane %v114, 1
  %v376 = vrot.slane %v115, 1
  %v377 = vsel %vm234, %v375, %v376
  %v378 = vrot.slane %v116, 1
  %v379 = vsel %vm234, %v376, %v378
  %v380 = vrot.slane %v117, 1
  %v381 = vrot.slane %v118, 1
  %v382 = vsel %vm234, %v380, %v381
  %v383 = vrot.slane %v119, 1
  %v384 = vsel %vm234, %v381, %v383
  %v385 = vrot.slane %v120, 1
  %v386 = vrot.slane %v121, 1
  %v387 = vsel %vm234, %v385, %v386
  %v388 = vrot.slane %v122, 1
  %v389 = vsel %vm234, %v386, %v388
  %v390 = vrot.slane %v123, 1
  %v391 = vrot.slane %v124, 1
  %v392 = vsel %vm234, %v390, %v391
  %v393 = vrot.slane %v125, 1
  %v394 = vsel %vm234, %v391, %v393
  %395 = vrot.lane.b32.xlu0 %v237, 4
  %v396 = vpop.permute.xlu0 %395
  %397 = vrot.lane.b32.xlu0 %v239, 4
  %v398 = vpop.permute.xlu0 %397
  %399 = vrot.lane.b32.xlu0 %v242, 4
  %v400 = vpop.permute.xlu0 %399
  %401 = vrot.lane.b32.xlu0 %v244, 4
  %v402 = vpop.permute.xlu0 %401
  %403 = vrot.lane.b32.xlu0 %v247, 4
  %v404 = vpop.permute.xlu0 %403
  %405 = vrot.lane.b32.xlu0 %v249, 4
  %v406 = vpop.permute.xlu0 %405
  %407 = vrot.lane.b32.xlu0 %v252, 4
  %v408 = vpop.permute.xlu0 %407
  %409 = vrot.lane.b32.xlu0 %v254, 4
  %v410 = vpop.permute.xlu0 %409
  %411 = vrot.lane.b32.xlu0 %v257, 4
  %v412 = vpop.permute.xlu0 %411
  %413 = vrot.lane.b32.xlu0 %v259, 4
  %v414 = vpop.permute.xlu0 %413
  %415 = vrot.lane.b32.xlu0 %v262, 4
  %v416 = vpop.permute.xlu0 %415
  %417 = vrot.lane.b32.xlu0 %v264, 4
  %v418 = vpop.permute.xlu0 %417
  %419 = vrot.lane.b32.xlu0 %v267, 4
  %v420 = vpop.permute.xlu0 %419
  %421 = vrot.lane.b32.xlu0 %v269, 4
  %v422 = vpop.permute.xlu0 %421
  %423 = vrot.lane.b32.xlu0 %v272, 4
  %v424 = vpop.permute.xlu0 %423
  %425 = vrot.lane.b32.xlu0 %v274, 4
  %v426 = vpop.permute.xlu0 %425
  %427 = vrot.lane.b32.xlu0 %v277, 4
  %v428 = vpop.permute.xlu0 %427
  %429 = vrot.lane.b32.xlu0 %v279, 4
  %v430 = vpop.permute.xlu0 %429
  %431 = vrot.lane.b32.xlu0 %v282, 4
  %v432 = vpop.permute.xlu0 %431
  %433 = vrot.lane.b32.xlu0 %v284, 4
  %v434 = vpop.permute.xlu0 %433
  %435 = vrot.lane.b32.xlu0 %v287, 4
  %v436 = vpop.permute.xlu0 %435
  %437 = vrot.lane.b32.xlu0 %v289, 4
  %v438 = vpop.permute.xlu0 %437
  %439 = vrot.lane.b32.xlu0 %v292, 4
  %v440 = vpop.permute.xlu0 %439
  %441 = vrot.lane.b32.xlu0 %v294, 4
  %v442 = vpop.permute.xlu0 %441
  %443 = vrot.lane.b32.xlu0 %v297, 4
  %v444 = vpop.permute.xlu0 %443
  %445 = vrot.lane.b32.xlu0 %v299, 4
  %v446 = vpop.permute.xlu0 %445
  %447 = vrot.lane.b32.xlu0 %v302, 4
  %v448 = vpop.permute.xlu0 %447
  %449 = vrot.lane.b32.xlu0 %v304, 4
  %v450 = vpop.permute.xlu0 %449
  %451 = vrot.lane.b32.xlu0 %v307, 4
  %v452 = vpop.permute.xlu0 %451
  %453 = vrot.lane.b32.xlu0 %v309, 4
  %v454 = vpop.permute.xlu0 %453
  %455 = vrot.lane.b32.xlu0 %v312, 4
  %v456 = vpop.permute.xlu0 %455
  %457 = vrot.lane.b32.xlu0 %v314, 4
  %v458 = vpop.permute.xlu0 %457
  %459 = vrot.lane.b32.xlu0 %v317, 4
  %v460 = vpop.permute.xlu0 %459
  %461 = vrot.lane.b32.xlu0 %v319, 4
  %v462 = vpop.permute.xlu0 %461
  %463 = vrot.lane.b32.xlu0 %v322, 4
  %v464 = vpop.permute.xlu0 %463
  %465 = vrot.lane.b32.xlu0 %v324, 4
  %v466 = vpop.permute.xlu0 %465
  %467 = vrot.lane.b32.xlu0 %v327, 4
  %v468 = vpop.permute.xlu0 %467
  %469 = vrot.lane.b32.xlu0 %v329, 4
  %v470 = vpop.permute.xlu0 %469
  %471 = vrot.lane.b32.xlu0 %v332, 4
  %v472 = vpop.permute.xlu0 %471
  %473 = vrot.lane.b32.xlu0 %v334, 4
  %v474 = vpop.permute.xlu0 %473
  %475 = vrot.lane.b32.xlu0 %v337, 4
  %v476 = vpop.permute.xlu0 %475
  %477 = vrot.lane.b32.xlu0 %v339, 4
  %v478 = vpop.permute.xlu0 %477
  %479 = vrot.lane.b32.xlu0 %v342, 4
  %v480 = vpop.permute.xlu0 %479
  %481 = vrot.lane.b32.xlu0 %v344, 4
  %v482 = vpop.permute.xlu0 %481
  %483 = vrot.lane.b32.xlu0 %v347, 4
  %v484 = vpop.permute.xlu0 %483
  %485 = vrot.lane.b32.xlu0 %v349, 4
  %v486 = vpop.permute.xlu0 %485
  %487 = vrot.lane.b32.xlu0 %v352, 4
  %v488 = vpop.permute.xlu0 %487
  %489 = vrot.lane.b32.xlu0 %v354, 4
  %v490 = vpop.permute.xlu0 %489
  %491 = vrot.lane.b32.xlu0 %v357, 4
  %v492 = vpop.permute.xlu0 %491
  %493 = vrot.lane.b32.xlu0 %v359, 4
  %v494 = vpop.permute.xlu0 %493
  %495 = vrot.lane.b32.xlu0 %v362, 4
  %v496 = vpop.permute.xlu0 %495
  %497 = vrot.lane.b32.xlu0 %v364, 4
  %v498 = vpop.permute.xlu0 %497
  %499 = vrot.lane.b32.xlu0 %v367, 4
  %v500 = vpop.permute.xlu0 %499
  %501 = vrot.lane.b32.xlu0 %v369, 4
  %v502 = vpop.permute.xlu0 %501
  %503 = vrot.lane.b32.xlu0 %v372, 4
  %v504 = vpop.permute.xlu0 %503
  %505 = vrot.lane.b32.xlu0 %v374, 4
  %v506 = vpop.permute.xlu0 %505
  %507 = vrot.lane.b32.xlu0 %v377, 4
  %v508 = vpop.permute.xlu0 %507
  %509 = vrot.lane.b32.xlu0 %v379, 4
  %v510 = vpop.permute.xlu0 %509
  %511 = vrot.lane.b32.xlu0 %v382, 4
  %v512 = vpop.permute.xlu0 %511
  %513 = vrot.lane.b32.xlu0 %v384, 4
  %v514 = vpop.permute.xlu0 %513
  %515 = vrot.lane.b32.xlu0 %v387, 4
  %v516 = vpop.permute.xlu0 %515
  %517 = vrot.lane.b32.xlu0 %v389, 4
  %v518 = vpop.permute.xlu0 %517
  %519 = vrot.lane.b32.xlu0 %v392, 4
  %v520 = vpop.permute.xlu0 %519
  %521 = vrot.lane.b32.xlu0 %v394, 4
  %v522 = vpop.permute.xlu0 %521
  %vm587 = vcmask 1045504
  %v588 = vrot.slane %v18, 2
  %v589 = vrot.slane %v19, 2
  %v590 = vsel %vm587, %v588, %v589
  %v591 = vrot.slane %v20, 2
  %v592 = vsel %vm587, %v589, %v591
  %v593 = vrot.slane %v21, 2
  %v594 = vrot.slane %v22, 2
  %v595 = vsel %vm587, %v593, %v594
  %v596 = vrot.slane %v23, 2
  %v597 = vsel %vm587, %v594, %v596
  %v598 = vrot.slane %v24, 2
  %v599 = vrot.slane %v25, 2
  %v600 = vsel %vm587, %v598, %v599
  %v601 = vrot.slane %v26, 2
  %v602 = vsel %vm587, %v599, %v601
  %v603 = vrot.slane %v27, 2
  %v604 = vrot.slane %v28, 2
  %v605 = vsel %vm587, %v603, %v604
  %v606 = vrot.slane %v29, 2
  %v607 = vsel %vm587, %v604, %v606
  %v608 = vrot.slane %v30, 2
  %v609 = vrot.slane %v31, 2
  %v610 = vsel %vm587, %v608, %v609
  %v611 = vrot.slane %v32, 2
  %v612 = vsel %vm587, %v609, %v611
  %v613 = vrot.slane %v33, 2
  %v614 = vrot.slane %v34, 2
  %v615 = vsel %vm587, %v613, %v614
  %v616 = vrot.slane %v35, 2
  %v617 = vsel %vm587, %v614, %v616
  %v618 = vrot.slane %v36, 2
  %v619 = vrot.slane %v37, 2
  %v620 = vsel %vm587, %v618, %v619
  %v621 = vrot.slane %v38, 2
  %v622 = vsel %vm587, %v619, %v621
  %v623 = vrot.slane %v39, 2
  %v624 = vrot.slane %v40, 2
  %v625 = vsel %vm587, %v623, %v624
  %v626 = vrot.slane %v41, 2
  %v627 = vsel %vm587, %v624, %v626
  %v628 = vrot.slane %v42, 2
  %v629 = vrot.slane %v43, 2
  %v630 = vsel %vm587, %v628, %v629
  %v631 = vrot.slane %v44, 2
  %v632 = vsel %vm587, %v629, %v631
  %v633 = vrot.slane %v45, 2
  %v634 = vrot.slane %v46, 2
  %v635 = vsel %vm587, %v633, %v634
  %v636 = vrot.slane %v47, 2
  %v637 = vsel %vm587, %v634, %v636
  %v638 = vrot.slane %v48, 2
  %v639 = vrot.slane %v49, 2
  %v640 = vsel %vm587, %v638, %v639
  %v641 = vrot.slane %v50, 2
  %v642 = vsel %vm587, %v639, %v641
  %v643 = vrot.slane %v51, 2
  %v644 = vrot.slane %v52, 2
  %v645 = vsel %vm587, %v643, %v644
  %v646 = vrot.slane %v53, 2
  %v647 = vsel %vm587, %v644, %v646
  %v648 = vrot.slane %v54, 2
  %v649 = vrot.slane %v55, 2
  %v650 = vsel %vm587, %v648, %v649
  %v651 = vrot.slane %v56, 2
  %v652 = vsel %vm587, %v649, %v651
  %v653 = vrot.slane %v57, 2
  %v654 = vrot.slane %v58, 2
  %v655 = vsel %vm587, %v653, %v654
  %v656 = vrot.slane %v59, 2
  %v657 = vsel %vm587, %v654, %v656
  %v658 = vrot.slane %v60, 2
  %v659 = vrot.slane %v61, 2
  %v660 = vsel %vm587, %v658, %v659
  %v661 = vrot.slane %v62, 2
  %v662 = vsel %vm587, %v659, %v661
  %v663 = vrot.slane %v63, 2
  %v664 = vrot.slane %v64, 2
  %v665 = vsel %vm587, %v663, %v664
  %v666 = vrot.slane %v65, 2
  %v667 = vsel %vm587, %v664, %v666
  %v668 = vrot.slane %v78, 2
  %v669 = vrot.slane %v79, 2
  %v670 = vsel %vm587, %v668, %v669
  %v671 = vrot.slane %v80, 2
  %v672 = vsel %vm587, %v669, %v671
  %v673 = vrot.slane %v81, 2
  %v674 = vrot.slane %v82, 2
  %v675 = vsel %vm587, %v673, %v674
  %v676 = vrot.slane %v83, 2
  %v677 = vsel %vm587, %v674, %v676
  %v678 = vrot.slane %v84, 2
  %v679 = vrot.slane %v85, 2
  %v680 = vsel %vm587, %v678, %v679
  %v681 = vrot.slane %v86, 2
  %v682 = vsel %vm587, %v679, %v681
  %v683 = vrot.slane %v87, 2
  %v684 = vrot.slane %v88, 2
  %v685 = vsel %vm587, %v683, %v684
  %v686 = vrot.slane %v89, 2
  %v687 = vsel %vm587, %v684, %v686
  %v688 = vrot.slane %v90, 2
  %v689 = vrot.slane %v91, 2
  %v690 = vsel %vm587, %v688, %v689
  %v691 = vrot.slane %v92, 2
  %v692 = vsel %vm587, %v689, %v691
  %v693 = vrot.slane %v93, 2
  %v694 = vrot.slane %v94, 2
  %v695 = vsel %vm587, %v693, %v694
  %v696 = vrot.slane %v95, 2
  %v697 = vsel %vm587, %v694, %v696
  %v698 = vrot.slane %v96, 2
  %v699 = vrot.slane %v97, 2
  %v700 = vsel %vm587, %v698, %v699
  %v701 = vrot.slane %v98, 2
  %v702 = vsel %vm587, %v699, %v701
  %v703 = vrot.slane %v99, 2
  %v704 = vrot.slane %v100, 2
  %v705 = vsel %vm587, %v703, %v704
  %v706 = vrot.slane %v101, 2
  %v707 = vsel %vm587, %v704, %v706
  %v708 = vrot.slane %v102, 2
  %v709 = vrot.slane %v103, 2
  %v710 = vsel %vm587, %v708, %v709
  %v711 = vrot.slane %v104, 2
  %v712 = vsel %vm587, %v709, %v711
  %v713 = vrot.slane %v105, 2
  %v714 = vrot.slane %v106, 2
  %v715 = vsel %vm587, %v713, %v714
  %v716 = vrot.slane %v107, 2
  %v717 = vsel %vm587, %v714, %v716
  %v718 = vrot.slane %v108, 2
  %v719 = vrot.slane %v109, 2
  %v720 = vsel %vm587, %v718, %v719
  %v721 = vrot.slane %v110, 2
  %v722 = vsel %vm587, %v719, %v721
  %v723 = vrot.slane %v111, 2
  %v724 = vrot.slane %v112, 2
  %v725 = vsel %vm587, %v723, %v724
  %v726 = vrot.slane %v113, 2
  %v727 = vsel %vm587, %v724, %v726
  %v728 = vrot.slane %v114, 2
  %v729 = vrot.slane %v115, 2
  %v730 = vsel %vm587, %v728, %v729
  %v731 = vrot.slane %v116, 2
  %v732 = vsel %vm587, %v729, %v731
  %v733 = vrot.slane %v117, 2
  %v734 = vrot.slane %v118, 2
  %v735 = vsel %vm587, %v733, %v734
  %v736 = vrot.slane %v119, 2
  %v737 = vsel %vm587, %v734, %v736
  %v738 = vrot.slane %v120, 2
  %v739 = vrot.slane %v121, 2
  %v740 = vsel %vm587, %v738, %v739
  %v741 = vrot.slane %v122, 2
  %v742 = vsel %vm587, %v739, %v741
  %v743 = vrot.slane %v123, 2
  %v744 = vrot.slane %v124, 2
  %v745 = vsel %vm587, %v743, %v744
  %v746 = vrot.slane %v125, 2
  %v747 = vsel %vm587, %v744, %v746
  %748 = vrot.lane.b32.xlu0 %v590, 8
  %v749 = vpop.permute.xlu0 %748
  %750 = vrot.lane.b32.xlu0 %v592, 8
  %v751 = vpop.permute.xlu0 %750
  %752 = vrot.lane.b32.xlu0 %v595, 8
  %v753 = vpop.permute.xlu0 %752
  %754 = vrot.lane.b32.xlu0 %v597, 8
  %v755 = vpop.permute.xlu0 %754
  %756 = vrot.lane.b32.xlu0 %v600, 8
  %v757 = vpop.permute.xlu0 %756
  %758 = vrot.lane.b32.xlu0 %v602, 8
  %v759 = vpop.permute.xlu0 %758
  %760 = vrot.lane.b32.xlu0 %v605, 8
  %v761 = vpop.permute.xlu0 %760
  %762 = vrot.lane.b32.xlu0 %v607, 8
  %v763 = vpop.permute.xlu0 %762
  %764 = vrot.lane.b32.xlu0 %v610, 8
  %v765 = vpop.permute.xlu0 %764
  %766 = vrot.lane.b32.xlu0 %v612, 8
  %v767 = vpop.permute.xlu0 %766
  %768 = vrot.lane.b32.xlu0 %v615, 8
  %v769 = vpop.permute.xlu0 %768
  %770 = vrot.lane.b32.xlu0 %v617, 8
  %v771 = vpop.permute.xlu0 %770
  %772 = vrot.lane.b32.xlu0 %v620, 8
  %v773 = vpop.permute.xlu0 %772
  %774 = vrot.lane.b32.xlu0 %v622, 8
  %v775 = vpop.permute.xlu0 %774
  %776 = vrot.lane.b32.xlu0 %v625, 8
  %v777 = vpop.permute.xlu0 %776
  %778 = vrot.lane.b32.xlu0 %v627, 8
  %v779 = vpop.permute.xlu0 %778
  %780 = vrot.lane.b32.xlu0 %v630, 8
  %v781 = vpop.permute.xlu0 %780
  %782 = vrot.lane.b32.xlu0 %v632, 8
  %v783 = vpop.permute.xlu0 %782
  %784 = vrot.lane.b32.xlu0 %v635, 8
  %v785 = vpop.permute.xlu0 %784
  %786 = vrot.lane.b32.xlu0 %v637, 8
  %v787 = vpop.permute.xlu0 %786
  %788 = vrot.lane.b32.xlu0 %v640, 8
  %v789 = vpop.permute.xlu0 %788
  %790 = vrot.lane.b32.xlu0 %v642, 8
  %v791 = vpop.permute.xlu0 %790
  %792 = vrot.lane.b32.xlu0 %v645, 8
  %v793 = vpop.permute.xlu0 %792
  %794 = vrot.lane.b32.xlu0 %v647, 8
  %v795 = vpop.permute.xlu0 %794
  %796 = vrot.lane.b32.xlu0 %v650, 8
  %v797 = vpop.permute.xlu0 %796
  %798 = vrot.lane.b32.xlu0 %v652, 8
  %v799 = vpop.permute.xlu0 %798
  %800 = vrot.lane.b32.xlu0 %v655, 8
  %v801 = vpop.permute.xlu0 %800
  %802 = vrot.lane.b32.xlu0 %v657, 8
  %v803 = vpop.permute.xlu0 %802
  %804 = vrot.lane.b32.xlu0 %v660, 8
  %v805 = vpop.permute.xlu0 %804
  %806 = vrot.lane.b32.xlu0 %v662, 8
  %v807 = vpop.permute.xlu0 %806
  %808 = vrot.lane.b32.xlu0 %v665, 8
  %v809 = vpop.permute.xlu0 %808
  %810 = vrot.lane.b32.xlu0 %v667, 8
  %v811 = vpop.permute.xlu0 %810
  %812 = vrot.lane.b32.xlu0 %v670, 8
  %v813 = vpop.permute.xlu0 %812
  %814 = vrot.lane.b32.xlu0 %v672, 8
  %v815 = vpop.permute.xlu0 %814
  %816 = vrot.lane.b32.xlu0 %v675, 8
  %v817 = vpop.permute.xlu0 %816
  %818 = vrot.lane.b32.xlu0 %v677, 8
  %v819 = vpop.permute.xlu0 %818
  %820 = vrot.lane.b32.xlu0 %v680, 8
  %v821 = vpop.permute.xlu0 %820
  %822 = vrot.lane.b32.xlu0 %v682, 8
  %v823 = vpop.permute.xlu0 %822
  %824 = vrot.lane.b32.xlu0 %v685, 8
  %v825 = vpop.permute.xlu0 %824
  %826 = vrot.lane.b32.xlu0 %v687, 8
  %v827 = vpop.permute.xlu0 %826
  %828 = vrot.lane.b32.xlu0 %v690, 8
  %v829 = vpop.permute.xlu0 %828
  %830 = vrot.lane.b32.xlu0 %v692, 8
  %v831 = vpop.permute.xlu0 %830
  %832 = vrot.lane.b32.xlu0 %v695, 8
  %v833 = vpop.permute.xlu0 %832
  %834 = vrot.lane.b32.xlu0 %v697, 8
  %v835 = vpop.permute.xlu0 %834
  %836 = vrot.lane.b32.xlu0 %v700, 8
  %v837 = vpop.permute.xlu0 %836
  %838 = vrot.lane.b32.xlu0 %v702, 8
  %v839 = vpop.permute.xlu0 %838
  %840 = vrot.lane.b32.xlu0 %v705, 8
  %v841 = vpop.permute.xlu0 %840
  %842 = vrot.lane.b32.xlu0 %v707, 8
  %v843 = vpop.permute.xlu0 %842
  %844 = vrot.lane.b32.xlu0 %v710, 8
  %v845 = vpop.permute.xlu0 %844
  %846 = vrot.lane.b32.xlu0 %v712, 8
  %v847 = vpop.permute.xlu0 %846
  %848 = vrot.lane.b32.xlu0 %v715, 8
  %v849 = vpop.permute.xlu0 %848
  %850 = vrot.lane.b32.xlu0 %v717, 8
  %v851 = vpop.permute.xlu0 %850
  %852 = vrot.lane.b32.xlu0 %v720, 8
  %v853 = vpop.permute.xlu0 %852
  %854 = vrot.lane.b32.xlu0 %v722, 8
  %v855 = vpop.permute.xlu0 %854
  %856 = vrot.lane.b32.xlu0 %v725, 8
  %v857 = vpop.permute.xlu0 %856
  %858 = vrot.lane.b32.xlu0 %v727, 8
  %v859 = vpop.permute.xlu0 %858
  %860 = vrot.lane.b32.xlu0 %v730, 8
  %v861 = vpop.permute.xlu0 %860
  %862 = vrot.lane.b32.xlu0 %v732, 8
  %v863 = vpop.permute.xlu0 %862
  %864 = vrot.lane.b32.xlu0 %v735, 8
  %v865 = vpop.permute.xlu0 %864
  %866 = vrot.lane.b32.xlu0 %v737, 8
  %v867 = vpop.permute.xlu0 %866
  %868 = vrot.lane.b32.xlu0 %v740, 8
  %v869 = vpop.permute.xlu0 %868
  %870 = vrot.lane.b32.xlu0 %v742, 8
  %v871 = vpop.permute.xlu0 %870
  %872 = vrot.lane.b32.xlu0 %v745, 8
  %v873 = vpop.permute.xlu0 %872
  %874 = vrot.lane.b32.xlu0 %v747, 8
  %v875 = vpop.permute.xlu0 %874
  %vm940 = vcmask 1044480
  %v941 = vrot.slane %v18, 3
  %v942 = vrot.slane %v19, 3
  %v943 = vsel %vm940, %v941, %v942
  %v944 = vrot.slane %v20, 3
  %v945 = vsel %vm940, %v942, %v944
  %v946 = vrot.slane %v21, 3
  %v947 = vrot.slane %v22, 3
  %v948 = vsel %vm940, %v946, %v947
  %v949 = vrot.slane %v23, 3
  %v950 = vsel %vm940, %v947, %v949
  %v951 = vrot.slane %v24, 3
  %v952 = vrot.slane %v25, 3
  %v953 = vsel %vm940, %v951, %v952
  %v954 = vrot.slane %v26, 3
  %v955 = vsel %vm940, %v952, %v954
  %v956 = vrot.slane %v27, 3
  %v957 = vrot.slane %v28, 3
  %v958 = vsel %vm940, %v956, %v957
  %v959 = vrot.slane %v29, 3
  %v960 = vsel %vm940, %v957, %v959
  %v961 = vrot.slane %v30, 3
  %v962 = vrot.slane %v31, 3
  %v963 = vsel %vm940, %v961, %v962
  %v964 = vrot.slane %v32, 3
  %v965 = vsel %vm940, %v962, %v964
  %v966 = vrot.slane %v33, 3
  %v967 = vrot.slane %v34, 3
  %v968 = vsel %vm940, %v966, %v967
  %v969 = vrot.slane %v35, 3
  %v970 = vsel %vm940, %v967, %v969
  %v971 = vrot.slane %v36, 3
  %v972 = vrot.slane %v37, 3
  %v973 = vsel %vm940, %v971, %v972
  %v974 = vrot.slane %v38, 3
  %v975 = vsel %vm940, %v972, %v974
  %v976 = vrot.slane %v39, 3
  %v977 = vrot.slane %v40, 3
  %v978 = vsel %vm940, %v976, %v977
  %v979 = vrot.slane %v41, 3
  %v980 = vsel %vm940, %v977, %v979
  %v981 = vrot.slane %v42, 3
  %v982 = vrot.slane %v43, 3
  %v983 = vsel %vm940, %v981, %v982
  %v984 = vrot.slane %v44, 3
  %v985 = vsel %vm940, %v982, %v984
  %v986 = vrot.slane %v45, 3
  %v987 = vrot.slane %v46, 3
  %v988 = vsel %vm940, %v986, %v987
  %v989 = vrot.slane %v47, 3
  %v990 = vsel %vm940, %v987, %v989
  %v991 = vrot.slane %v48, 3
  %v992 = vrot.slane %v49, 3
  %v993 = vsel %vm940, %v991, %v992
  %v994 = vrot.slane %v50, 3
  %v995 = vsel %vm940, %v992, %v994
  %v996 = vrot.slane %v51, 3
  %v997 = vrot.slane %v52, 3
  %v998 = vsel %vm940, %v996, %v997
  %v999 = vrot.slane %v53, 3
  %v1000 = vsel %vm940, %v997, %v999
  %v1001 = vrot.slane %v54, 3
  %v1002 = vrot.slane %v55, 3
  %v1003 = vsel %vm940, %v1001, %v1002
  %v1004 = vrot.slane %v56, 3
  %v1005 = vsel %vm940, %v1002, %v1004
  %v1006 = vrot.slane %v57, 3
  %v1007 = vrot.slane %v58, 3
  %v1008 = vsel %vm940, %v1006, %v1007
  %v1009 = vrot.slane %v59, 3
  %v1010 = vsel %vm940, %v1007, %v1009
  %v1011 = vrot.slane %v60, 3
  %v1012 = vrot.slane %v61, 3
  %v1013 = vsel %vm940, %v1011, %v1012
  %v1014 = vrot.slane %v62, 3
  %v1015 = vsel %vm940, %v1012, %v1014
  %v1016 = vrot.slane %v63, 3
  %v1017 = vrot.slane %v64, 3
  %v1018 = vsel %vm940, %v1016, %v1017
  %v1019 = vrot.slane %v65, 3
  %v1020 = vsel %vm940, %v1017, %v1019
  %v1021 = vrot.slane %v78, 3
  %v1022 = vrot.slane %v79, 3
  %v1023 = vsel %vm940, %v1021, %v1022
  %v1024 = vrot.slane %v80, 3
  %v1025 = vsel %vm940, %v1022, %v1024
  %v1026 = vrot.slane %v81, 3
  %v1027 = vrot.slane %v82, 3
  %v1028 = vsel %vm940, %v1026, %v1027
  %v1029 = vrot.slane %v83, 3
  %v1030 = vsel %vm940, %v1027, %v1029
  %v1031 = vrot.slane %v84, 3
  %v1032 = vrot.slane %v85, 3
  %v1033 = vsel %vm940, %v1031, %v1032
  %v1034 = vrot.slane %v86, 3
  %v1035 = vsel %vm940, %v1032, %v1034
  %v1036 = vrot.slane %v87, 3
  %v1037 = vrot.slane %v88, 3
  %v1038 = vsel %vm940, %v1036, %v1037
  %v1039 = vrot.slane %v89, 3
  %v1040 = vsel %vm940, %v1037, %v1039
  %v1041 = vrot.slane %v90, 3
  %v1042 = vrot.slane %v91, 3
  %v1043 = vsel %vm940, %v1041, %v1042
  %v1044 = vrot.slane %v92, 3
  %v1045 = vsel %vm940, %v1042, %v1044
  %v1046 = vrot.slane %v93, 3
  %v1047 = vrot.slane %v94, 3
  %v1048 = vsel %vm940, %v1046, %v1047
  %v1049 = vrot.slane %v95, 3
  %v1050 = vsel %vm940, %v1047, %v1049
  %v1051 = vrot.slane %v96, 3
  %v1052 = vrot.slane %v97, 3
  %v1053 = vsel %vm940, %v1051, %v1052
  %v1054 = vrot.slane %v98, 3
  %v1055 = vsel %vm940, %v1052, %v1054
  %v1056 = vrot.slane %v99, 3
  %v1057 = vrot.slane %v100, 3
  %v1058 = vsel %vm940, %v1056, %v1057
  %v1059 = vrot.slane %v101, 3
  %v1060 = vsel %vm940, %v1057, %v1059
  %v1061 = vrot.slane %v102, 3
  %v1062 = vrot.slane %v103, 3
  %v1063 = vsel %vm940, %v1061, %v1062
  %v1064 = vrot.slane %v104, 3
  %v1065 = vsel %vm940, %v1062, %v1064
  %v1066 = vrot.slane %v105, 3
  %v1067 = vrot.slane %v106, 3
  %v1068 = vsel %vm940, %v1066, %v1067
  %v1069 = vrot.slane %v107, 3
  %v1070 = vsel %vm940, %v1067, %v1069
  %v1071 = vrot.slane %v108, 3
  %v1072 = vrot.slane %v109, 3
  %v1073 = vsel %vm940, %v1071, %v1072
  %v1074 = vrot.slane %v110, 3
  %v1075 = vsel %vm940, %v1072, %v1074
  %v1076 = vrot.slane %v111, 3
  %v1077 = vrot.slane %v112, 3
  %v1078 = vsel %vm940, %v1076, %v1077
  %v1079 = vrot.slane %v113, 3
  %v1080 = vsel %vm940, %v1077, %v1079
  %v1081 = vrot.slane %v114, 3
  %v1082 = vrot.slane %v115, 3
  %v1083 = vsel %vm940, %v1081, %v1082
  %v1084 = vrot.slane %v116, 3
  %v1085 = vsel %vm940, %v1082, %v1084
  %v1086 = vrot.slane %v117, 3
  %v1087 = vrot.slane %v118, 3
  %v1088 = vsel %vm940, %v1086, %v1087
  %v1089 = vrot.slane %v119, 3
  %v1090 = vsel %vm940, %v1087, %v1089
  %v1091 = vrot.slane %v120, 3
  %v1092 = vrot.slane %v121, 3
  %v1093 = vsel %vm940, %v1091, %v1092
  %v1094 = vrot.slane %v122, 3
  %v1095 = vsel %vm940, %v1092, %v1094
  %v1096 = vrot.slane %v123, 3
  %v1097 = vrot.slane %v124, 3
  %v1098 = vsel %vm940, %v1096, %v1097
  %v1099 = vrot.slane %v125, 3
  %v1100 = vsel %vm940, %v1097, %v1099
  %1101 = vrot.lane.b32.xlu0 %v943, 12
  %v1102 = vpop.permute.xlu0 %1101
  %1103 = vrot.lane.b32.xlu0 %v945, 12
  %v1104 = vpop.permute.xlu0 %1103
  %1105 = vrot.lane.b32.xlu0 %v948, 12
  %v1106 = vpop.permute.xlu0 %1105
  %1107 = vrot.lane.b32.xlu0 %v950, 12
  %v1108 = vpop.permute.xlu0 %1107
  %1109 = vrot.lane.b32.xlu0 %v953, 12
  %v1110 = vpop.permute.xlu0 %1109
  %1111 = vrot.lane.b32.xlu0 %v955, 12
  %v1112 = vpop.permute.xlu0 %1111
  %1113 = vrot.lane.b32.xlu0 %v958, 12
  %v1114 = vpop.permute.xlu0 %1113
  %1115 = vrot.lane.b32.xlu0 %v960, 12
  %v1116 = vpop.permute.xlu0 %1115
  %1117 = vrot.lane.b32.xlu0 %v963, 12
  %v1118 = vpop.permute.xlu0 %1117
  %1119 = vrot.lane.b32.xlu0 %v965, 12
  %v1120 = vpop.permute.xlu0 %1119
  %1121 = vrot.lane.b32.xlu0 %v968, 12
  %v1122 = vpop.permute.xlu0 %1121
  %1123 = vrot.lane.b32.xlu0 %v970, 12
  %v1124 = vpop.permute.xlu0 %1123
  %1125 = vrot.lane.b32.xlu0 %v973, 12
  %v1126 = vpop.permute.xlu0 %1125
  %1127 = vrot.lane.b32.xlu0 %v975, 12
  %v1128 = vpop.permute.xlu0 %1127
  %1129 = vrot.lane.b32.xlu0 %v978, 12
  %v1130 = vpop.permute.xlu0 %1129
  %1131 = vrot.lane.b32.xlu0 %v980, 12
  %v1132 = vpop.permute.xlu0 %1131
  %1133 = vrot.lane.b32.xlu0 %v983, 12
  %v1134 = vpop.permute.xlu0 %1133
  %1135 = vrot.lane.b32.xlu0 %v985, 12
  %v1136 = vpop.permute.xlu0 %1135
  %1137 = vrot.lane.b32.xlu0 %v988, 12
  %v1138 = vpop.permute.xlu0 %1137
  %1139 = vrot.lane.b32.xlu0 %v990, 12
  %v1140 = vpop.permute.xlu0 %1139
  %1141 = vrot.lane.b32.xlu0 %v993, 12
  %v1142 = vpop.permute.xlu0 %1141
  %1143 = vrot.lane.b32.xlu0 %v995, 12
  %v1144 = vpop.permute.xlu0 %1143
  %1145 = vrot.lane.b32.xlu0 %v998, 12
  %v1146 = vpop.permute.xlu0 %1145
  %1147 = vrot.lane.b32.xlu0 %v1000, 12
  %v1148 = vpop.permute.xlu0 %1147
  %1149 = vrot.lane.b32.xlu0 %v1003, 12
  %v1150 = vpop.permute.xlu0 %1149
  %1151 = vrot.lane.b32.xlu0 %v1005, 12
  %v1152 = vpop.permute.xlu0 %1151
  %1153 = vrot.lane.b32.xlu0 %v1008, 12
  %v1154 = vpop.permute.xlu0 %1153
  %1155 = vrot.lane.b32.xlu0 %v1010, 12
  %v1156 = vpop.permute.xlu0 %1155
  %1157 = vrot.lane.b32.xlu0 %v1013, 12
  %v1158 = vpop.permute.xlu0 %1157
  %1159 = vrot.lane.b32.xlu0 %v1015, 12
  %v1160 = vpop.permute.xlu0 %1159
  %1161 = vrot.lane.b32.xlu0 %v1018, 12
  %v1162 = vpop.permute.xlu0 %1161
  %1163 = vrot.lane.b32.xlu0 %v1020, 12
  %v1164 = vpop.permute.xlu0 %1163
  %1165 = vrot.lane.b32.xlu0 %v1023, 12
  %v1166 = vpop.permute.xlu0 %1165
  %1167 = vrot.lane.b32.xlu0 %v1025, 12
  %v1168 = vpop.permute.xlu0 %1167
  %1169 = vrot.lane.b32.xlu0 %v1028, 12
  %v1170 = vpop.permute.xlu0 %1169
  %1171 = vrot.lane.b32.xlu0 %v1030, 12
  %v1172 = vpop.permute.xlu0 %1171
  %1173 = vrot.lane.b32.xlu0 %v1033, 12
  %v1174 = vpop.permute.xlu0 %1173
  %1175 = vrot.lane.b32.xlu0 %v1035, 12
  %v1176 = vpop.permute.xlu0 %1175
  %1177 = vrot.lane.b32.xlu0 %v1038, 12
  %v1178 = vpop.permute.xlu0 %1177
  %1179 = vrot.lane.b32.xlu0 %v1040, 12
  %v1180 = vpop.permute.xlu0 %1179
  %1181 = vrot.lane.b32.xlu0 %v1043, 12
  %v1182 = vpop.permute.xlu0 %1181
  %1183 = vrot.lane.b32.xlu0 %v1045, 12
  %v1184 = vpop.permute.xlu0 %1183
  %1185 = vrot.lane.b32.xlu0 %v1048, 12
  %v1186 = vpop.permute.xlu0 %1185
  %1187 = vrot.lane.b32.xlu0 %v1050, 12
  %v1188 = vpop.permute.xlu0 %1187
  %1189 = vrot.lane.b32.xlu0 %v1053, 12
  %v1190 = vpop.permute.xlu0 %1189
  %1191 = vrot.lane.b32.xlu0 %v1055, 12
  %v1192 = vpop.permute.xlu0 %1191
  %1193 = vrot.lane.b32.xlu0 %v1058, 12
  %v1194 = vpop.permute.xlu0 %1193
  %1195 = vrot.lane.b32.xlu0 %v1060, 12
  %v1196 = vpop.permute.xlu0 %1195
  %1197 = vrot.lane.b32.xlu0 %v1063, 12
  %v1198 = vpop.permute.xlu0 %1197
  %1199 = vrot.lane.b32.xlu0 %v1065, 12
  %v1200 = vpop.permute.xlu0 %1199
  %1201 = vrot.lane.b32.xlu0 %v1068, 12
  %v1202 = vpop.permute.xlu0 %1201
  %1203 = vrot.lane.b32.xlu0 %v1070, 12
  %v1204 = vpop.permute.xlu0 %1203
  %1205 = vrot.lane.b32.xlu0 %v1073, 12
  %v1206 = vpop.permute.xlu0 %1205
  %1207 = vrot.lane.b32.xlu0 %v1075, 12
  %v1208 = vpop.permute.xlu0 %1207
  %1209 = vrot.lane.b32.xlu0 %v1078, 12
  %v1210 = vpop.permute.xlu0 %1209
  %1211 = vrot.lane.b32.xlu0 %v1080, 12
  %v1212 = vpop.permute.xlu0 %1211
  %1213 = vrot.lane.b32.xlu0 %v1083, 12
  %v1214 = vpop.permute.xlu0 %1213
  %1215 = vrot.lane.b32.xlu0 %v1085, 12
  %v1216 = vpop.permute.xlu0 %1215
  %1217 = vrot.lane.b32.xlu0 %v1088, 12
  %v1218 = vpop.permute.xlu0 %1217
  %1219 = vrot.lane.b32.xlu0 %v1090, 12
  %v1220 = vpop.permute.xlu0 %1219
  %1221 = vrot.lane.b32.xlu0 %v1093, 12
  %v1222 = vpop.permute.xlu0 %1221
  %1223 = vrot.lane.b32.xlu0 %v1095, 12
  %v1224 = vpop.permute.xlu0 %1223
  %1225 = vrot.lane.b32.xlu0 %v1098, 12
  %v1226 = vpop.permute.xlu0 %1225
  %1227 = vrot.lane.b32.xlu0 %v1100, 12
  %v1228 = vpop.permute.xlu0 %1227
  %vm1293 = vcmask 1043456
  %v1294 = vrot.slane %v18, 4
  %v1295 = vrot.slane %v19, 4
  %v1296 = vsel %vm1293, %v1294, %v1295
  %v1297 = vrot.slane %v20, 4
  %v1298 = vsel %vm1293, %v1295, %v1297
  %v1299 = vrot.slane %v21, 4
  %v1300 = vrot.slane %v22, 4
  %v1301 = vsel %vm1293, %v1299, %v1300
  %v1302 = vrot.slane %v23, 4
  %v1303 = vsel %vm1293, %v1300, %v1302
  %v1304 = vrot.slane %v24, 4
  %v1305 = vrot.slane %v25, 4
  %v1306 = vsel %vm1293, %v1304, %v1305
  %v1307 = vrot.slane %v26, 4
  %v1308 = vsel %vm1293, %v1305, %v1307
  %v1309 = vrot.slane %v27, 4
  %v1310 = vrot.slane %v28, 4
  %v1311 = vsel %vm1293, %v1309, %v1310
  %v1312 = vrot.slane %v29, 4
  %v1313 = vsel %vm1293, %v1310, %v1312
  %v1314 = vrot.slane %v30, 4
  %v1315 = vrot.slane %v31, 4
  %v1316 = vsel %vm1293, %v1314, %v1315
  %v1317 = vrot.slane %v32, 4
  %v1318 = vsel %vm1293, %v1315, %v1317
  %v1319 = vrot.slane %v33, 4
  %v1320 = vrot.slane %v34, 4
  %v1321 = vsel %vm1293, %v1319, %v1320
  %v1322 = vrot.slane %v35, 4
  %v1323 = vsel %vm1293, %v1320, %v1322
  %v1324 = vrot.slane %v36, 4
  %v1325 = vrot.slane %v37, 4
  %v1326 = vsel %vm1293, %v1324, %v1325
  %v1327 = vrot.slane %v38, 4
  %v1328 = vsel %vm1293, %v1325, %v1327
  %v1329 = vrot.slane %v39, 4
  %v1330 = vrot.slane %v40, 4
  %v1331 = vsel %vm1293, %v1329, %v1330
  %v1332 = vrot.slane %v41, 4
  %v1333 = vsel %vm1293, %v1330, %v1332
  %v1334 = vrot.slane %v42, 4
  %v1335 = vrot.slane %v43, 4
  %v1336 = vsel %vm1293, %v1334, %v1335
  %v1337 = vrot.slane %v44, 4
  %v1338 = vsel %vm1293, %v1335, %v1337
  %v1339 = vrot.slane %v45, 4
  %v1340 = vrot.slane %v46, 4
  %v1341 = vsel %vm1293, %v1339, %v1340
  %v1342 = vrot.slane %v47, 4
  %v1343 = vsel %vm1293, %v1340, %v1342
  %v1344 = vrot.slane %v48, 4
  %v1345 = vrot.slane %v49, 4
  %v1346 = vsel %vm1293, %v1344, %v1345
  %v1347 = vrot.slane %v50, 4
  %v1348 = vsel %vm1293, %v1345, %v1347
  %v1349 = vrot.slane %v51, 4
  %v1350 = vrot.slane %v52, 4
  %v1351 = vsel %vm1293, %v1349, %v1350
  %v1352 = vrot.slane %v53, 4
  %v1353 = vsel %vm1293, %v1350, %v1352
  %v1354 = vrot.slane %v54, 4
  %v1355 = vrot.slane %v55, 4
  %v1356 = vsel %vm1293, %v1354, %v1355
  %v1357 = vrot.slane %v56, 4
  %v1358 = vsel %vm1293, %v1355, %v1357
  %v1359 = vrot.slane %v57, 4
  %v1360 = vrot.slane %v58, 4
  %v1361 = vsel %vm1293, %v1359, %v1360
  %v1362 = vrot.slane %v59, 4
  %v1363 = vsel %vm1293, %v1360, %v1362
  %v1364 = vrot.slane %v60, 4
  %v1365 = vrot.slane %v61, 4
  %v1366 = vsel %vm1293, %v1364, %v1365
  %v1367 = vrot.slane %v62, 4
  %v1368 = vsel %vm1293, %v1365, %v1367
  %v1369 = vrot.slane %v63, 4
  %v1370 = vrot.slane %v64, 4
  %v1371 = vsel %vm1293, %v1369, %v1370
  %v1372 = vrot.slane %v65, 4
  %v1373 = vsel %vm1293, %v1370, %v1372
  %v1374 = vrot.slane %v78, 4
  %v1375 = vrot.slane %v79, 4
  %v1376 = vsel %vm1293, %v1374, %v1375
  %v1377 = vrot.slane %v80, 4
  %v1378 = vsel %vm1293, %v1375, %v1377
  %v1379 = vrot.slane %v81, 4
  %v1380 = vrot.slane %v82, 4
  %v1381 = vsel %vm1293, %v1379, %v1380
  %v1382 = vrot.slane %v83, 4
  %v1383 = vsel %vm1293, %v1380, %v1382
  %v1384 = vrot.slane %v84, 4
  %v1385 = vrot.slane %v85, 4
  %v1386 = vsel %vm1293, %v1384, %v1385
  %v1387 = vrot.slane %v86, 4
  %v1388 = vsel %vm1293, %v1385, %v1387
  %v1389 = vrot.slane %v87, 4
  %v1390 = vrot.slane %v88, 4
  %v1391 = vsel %vm1293, %v1389, %v1390
  %v1392 = vrot.slane %v89, 4
  %v1393 = vsel %vm1293, %v1390, %v1392
  %v1394 = vrot.slane %v90, 4
  %v1395 = vrot.slane %v91, 4
  %v1396 = vsel %vm1293, %v1394, %v1395
  %v1397 = vrot.slane %v92, 4
  %v1398 = vsel %vm1293, %v1395, %v1397
  %v1399 = vrot.slane %v93, 4
  %v1400 = vrot.slane %v94, 4
  %v1401 = vsel %vm1293, %v1399, %v1400
  %v1402 = vrot.slane %v95, 4
  %v1403 = vsel %vm1293, %v1400, %v1402
  %v1404 = vrot.slane %v96, 4
  %v1405 = vrot.slane %v97, 4
  %v1406 = vsel %vm1293, %v1404, %v1405
  %v1407 = vrot.slane %v98, 4
  %v1408 = vsel %vm1293, %v1405, %v1407
  %v1409 = vrot.slane %v99, 4
  %v1410 = vrot.slane %v100, 4
  %v1411 = vsel %vm1293, %v1409, %v1410
  %v1412 = vrot.slane %v101, 4
  %v1413 = vsel %vm1293, %v1410, %v1412
  %v1414 = vrot.slane %v102, 4
  %v1415 = vrot.slane %v103, 4
  %v1416 = vsel %vm1293, %v1414, %v1415
  %v1417 = vrot.slane %v104, 4
  %v1418 = vsel %vm1293, %v1415, %v1417
  %v1419 = vrot.slane %v105, 4
  %v1420 = vrot.slane %v106, 4
  %v1421 = vsel %vm1293, %v1419, %v1420
  %v1422 = vrot.slane %v107, 4
  %v1423 = vsel %vm1293, %v1420, %v1422
  %v1424 = vrot.slane %v108, 4
  %v1425 = vrot.slane %v109, 4
  %v1426 = vsel %vm1293, %v1424, %v1425
  %v1427 = vrot.slane %v110, 4
  %v1428 = vsel %vm1293, %v1425, %v1427
  %v1429 = vrot.slane %v111, 4
  %v1430 = vrot.slane %v112, 4
  %v1431 = vsel %vm1293, %v1429, %v1430
  %v1432 = vrot.slane %v113, 4
  %v1433 = vsel %vm1293, %v1430, %v1432
  %v1434 = vrot.slane %v114, 4
  %v1435 = vrot.slane %v115, 4
  %v1436 = vsel %vm1293, %v1434, %v1435
  %v1437 = vrot.slane %v116, 4
  %v1438 = vsel %vm1293, %v1435, %v1437
  %v1439 = vrot.slane %v117, 4
  %v1440 = vrot.slane %v118, 4
  %v1441 = vsel %vm1293, %v1439, %v1440
  %v1442 = vrot.slane %v119, 4
  %v1443 = vsel %vm1293, %v1440, %v1442
  %v1444 = vrot.slane %v120, 4
  %v1445 = vrot.slane %v121, 4
  %v1446 = vsel %vm1293, %v1444, %v1445
  %v1447 = vrot.slane %v122, 4
  %v1448 = vsel %vm1293, %v1445, %v1447
  %v1449 = vrot.slane %v123, 4
  %v1450 = vrot.slane %v124, 4
  %v1451 = vsel %vm1293, %v1449, %v1450
  %v1452 = vrot.slane %v125, 4
  %v1453 = vsel %vm1293, %v1450, %v1452
  %1454 = vrot.lane.b32.xlu0 %v1296, 16
  %v1455 = vpop.permute.xlu0 %1454
  %1456 = vrot.lane.b32.xlu0 %v1298, 16
  %v1457 = vpop.permute.xlu0 %1456
  %1458 = vrot.lane.b32.xlu0 %v1301, 16
  %v1459 = vpop.permute.xlu0 %1458
  %1460 = vrot.lane.b32.xlu0 %v1303, 16
  %v1461 = vpop.permute.xlu0 %1460
  %1462 = vrot.lane.b32.xlu0 %v1306, 16
  %v1463 = vpop.permute.xlu0 %1462
  %1464 = vrot.lane.b32.xlu0 %v1308, 16
  %v1465 = vpop.permute.xlu0 %1464
  %1466 = vrot.lane.b32.xlu0 %v1311, 16
  %v1467 = vpop.permute.xlu0 %1466
  %1468 = vrot.lane.b32.xlu0 %v1313, 16
  %v1469 = vpop.permute.xlu0 %1468
  %1470 = vrot.lane.b32.xlu0 %v1316, 16
  %v1471 = vpop.permute.xlu0 %1470
  %1472 = vrot.lane.b32.xlu0 %v1318, 16
  %v1473 = vpop.permute.xlu0 %1472
  %1474 = vrot.lane.b32.xlu0 %v1321, 16
  %v1475 = vpop.permute.xlu0 %1474
  %1476 = vrot.lane.b32.xlu0 %v1323, 16
  %v1477 = vpop.permute.xlu0 %1476
  %1478 = vrot.lane.b32.xlu0 %v1326, 16
  %v1479 = vpop.permute.xlu0 %1478
  %1480 = vrot.lane.b32.xlu0 %v1328, 16
  %v1481 = vpop.permute.xlu0 %1480
  %1482 = vrot.lane.b32.xlu0 %v1331, 16
  %v1483 = vpop.permute.xlu0 %1482
  %1484 = vrot.lane.b32.xlu0 %v1333, 16
  %v1485 = vpop.permute.xlu0 %1484
  %1486 = vrot.lane.b32.xlu0 %v1336, 16
  %v1487 = vpop.permute.xlu0 %1486
  %1488 = vrot.lane.b32.xlu0 %v1338, 16
  %v1489 = vpop.permute.xlu0 %1488
  %1490 = vrot.lane.b32.xlu0 %v1341, 16
  %v1491 = vpop.permute.xlu0 %1490
  %1492 = vrot.lane.b32.xlu0 %v1343, 16
  %v1493 = vpop.permute.xlu0 %1492
  %1494 = vrot.lane.b32.xlu0 %v1346, 16
  %v1495 = vpop.permute.xlu0 %1494
  %1496 = vrot.lane.b32.xlu0 %v1348, 16
  %v1497 = vpop.permute.xlu0 %1496
  %1498 = vrot.lane.b32.xlu0 %v1351, 16
  %v1499 = vpop.permute.xlu0 %1498
  %1500 = vrot.lane.b32.xlu0 %v1353, 16
  %v1501 = vpop.permute.xlu0 %1500
  %1502 = vrot.lane.b32.xlu0 %v1356, 16
  %v1503 = vpop.permute.xlu0 %1502
  %1504 = vrot.lane.b32.xlu0 %v1358, 16
  %v1505 = vpop.permute.xlu0 %1504
  %1506 = vrot.lane.b32.xlu0 %v1361, 16
  %v1507 = vpop.permute.xlu0 %1506
  %1508 = vrot.lane.b32.xlu0 %v1363, 16
  %v1509 = vpop.permute.xlu0 %1508
  %1510 = vrot.lane.b32.xlu0 %v1366, 16
  %v1511 = vpop.permute.xlu0 %1510
  %1512 = vrot.lane.b32.xlu0 %v1368, 16
  %v1513 = vpop.permute.xlu0 %1512
  %1514 = vrot.lane.b32.xlu0 %v1371, 16
  %v1515 = vpop.permute.xlu0 %1514
  %1516 = vrot.lane.b32.xlu0 %v1373, 16
  %v1517 = vpop.permute.xlu0 %1516
  %1518 = vrot.lane.b32.xlu0 %v1376, 16
  %v1519 = vpop.permute.xlu0 %1518
  %1520 = vrot.lane.b32.xlu0 %v1378, 16
  %v1521 = vpop.permute.xlu0 %1520
  %1522 = vrot.lane.b32.xlu0 %v1381, 16
  %v1523 = vpop.permute.xlu0 %1522
  %1524 = vrot.lane.b32.xlu0 %v1383, 16
  %v1525 = vpop.permute.xlu0 %1524
  %1526 = vrot.lane.b32.xlu0 %v1386, 16
  %v1527 = vpop.permute.xlu0 %1526
  %1528 = vrot.lane.b32.xlu0 %v1388, 16
  %v1529 = vpop.permute.xlu0 %1528
  %1530 = vrot.lane.b32.xlu0 %v1391, 16
  %v1531 = vpop.permute.xlu0 %1530
  %1532 = vrot.lane.b32.xlu0 %v1393, 16
  %v1533 = vpop.permute.xlu0 %1532
  %1534 = vrot.lane.b32.xlu0 %v1396, 16
  %v1535 = vpop.permute.xlu0 %1534
  %1536 = vrot.lane.b32.xlu0 %v1398, 16
  %v1537 = vpop.permute.xlu0 %1536
  %1538 = vrot.lane.b32.xlu0 %v1401, 16
  %v1539 = vpop.permute.xlu0 %1538
  %1540 = vrot.lane.b32.xlu0 %v1403, 16
  %v1541 = vpop.permute.xlu0 %1540
  %1542 = vrot.lane.b32.xlu0 %v1406, 16
  %v1543 = vpop.permute.xlu0 %1542
  %1544 = vrot.lane.b32.xlu0 %v1408, 16
  %v1545 = vpop.permute.xlu0 %1544
  %1546 = vrot.lane.b32.xlu0 %v1411, 16
  %v1547 = vpop.permute.xlu0 %1546
  %1548 = vrot.lane.b32.xlu0 %v1413, 16
  %v1549 = vpop.permute.xlu0 %1548
  %1550 = vrot.lane.b32.xlu0 %v1416, 16
  %v1551 = vpop.permute.xlu0 %1550
  %1552 = vrot.lane.b32.xlu0 %v1418, 16
  %v1553 = vpop.permute.xlu0 %1552
  %1554 = vrot.lane.b32.xlu0 %v1421, 16
  %v1555 = vpop.permute.xlu0 %1554
  %1556 = vrot.lane.b32.xlu0 %v1423, 16
  %v1557 = vpop.permute.xlu0 %1556
  %1558 = vrot.lane.b32.xlu0 %v1426, 16
  %v1559 = vpop.permute.xlu0 %1558
  %1560 = vrot.lane.b32.xlu0 %v1428, 16
  %v1561 = vpop.permute.xlu0 %1560
  %1562 = vrot.lane.b32.xlu0 %v1431, 16
  %v1563 = vpop.permute.xlu0 %1562
  %1564 = vrot.lane.b32.xlu0 %v1433, 16
  %v1565 = vpop.permute.xlu0 %1564
  %1566 = vrot.lane.b32.xlu0 %v1436, 16
  %v1567 = vpop.permute.xlu0 %1566
  %1568 = vrot.lane.b32.xlu0 %v1438, 16
  %v1569 = vpop.permute.xlu0 %1568
  %1570 = vrot.lane.b32.xlu0 %v1441, 16
  %v1571 = vpop.permute.xlu0 %1570
  %1572 = vrot.lane.b32.xlu0 %v1443, 16
  %v1573 = vpop.permute.xlu0 %1572
  %1574 = vrot.lane.b32.xlu0 %v1446, 16
  %v1575 = vpop.permute.xlu0 %1574
  %1576 = vrot.lane.b32.xlu0 %v1448, 16
  %v1577 = vpop.permute.xlu0 %1576
  %1578 = vrot.lane.b32.xlu0 %v1451, 16
  %v1579 = vpop.permute.xlu0 %1578
  %1580 = vrot.lane.b32.xlu0 %v1453, 16
  %v1581 = vpop.permute.xlu0 %1580
  %vm1646 = vcmask 31744
  %v1647 = vsel %vm1646, %v18, %v396
  %v1648 = vsel %vm1646, %v19, %v398
  %v1649 = vsel %vm1646, %v21, %v400
  %v1650 = vsel %vm1646, %v22, %v402
  %v1651 = vsel %vm1646, %v24, %v404
  %v1652 = vsel %vm1646, %v25, %v406
  %v1653 = vsel %vm1646, %v27, %v408
  %v1654 = vsel %vm1646, %v28, %v410
  %v1655 = vsel %vm1646, %v30, %v412
  %v1656 = vsel %vm1646, %v31, %v414
  %v1657 = vsel %vm1646, %v33, %v416
  %v1658 = vsel %vm1646, %v34, %v418
  %v1659 = vsel %vm1646, %v36, %v420
  %v1660 = vsel %vm1646, %v37, %v422
  %v1661 = vsel %vm1646, %v39, %v424
  %v1662 = vsel %vm1646, %v40, %v426
  %v1663 = vsel %vm1646, %v42, %v428
  %v1664 = vsel %vm1646, %v43, %v430
  %v1665 = vsel %vm1646, %v45, %v432
  %v1666 = vsel %vm1646, %v46, %v434
  %v1667 = vsel %vm1646, %v48, %v436
  %v1668 = vsel %vm1646, %v49, %v438
  %v1669 = vsel %vm1646, %v51, %v440
  %v1670 = vsel %vm1646, %v52, %v442
  %v1671 = vsel %vm1646, %v54, %v444
  %v1672 = vsel %vm1646, %v55, %v446
  %v1673 = vsel %vm1646, %v57, %v448
  %v1674 = vsel %vm1646, %v58, %v450
  %v1675 = vsel %vm1646, %v60, %v452
  %v1676 = vsel %vm1646, %v61, %v454
  %v1677 = vsel %vm1646, %v63, %v456
  %v1678 = vsel %vm1646, %v64, %v458
  %v1679 = vsel %vm1646, %v78, %v460
  %v1680 = vsel %vm1646, %v79, %v462
  %v1681 = vsel %vm1646, %v81, %v464
  %v1682 = vsel %vm1646, %v82, %v466
  %v1683 = vsel %vm1646, %v84, %v468
  %v1684 = vsel %vm1646, %v85, %v470
  %v1685 = vsel %vm1646, %v87, %v472
  %v1686 = vsel %vm1646, %v88, %v474
  %v1687 = vsel %vm1646, %v90, %v476
  %v1688 = vsel %vm1646, %v91, %v478
  %v1689 = vsel %vm1646, %v93, %v480
  %v1690 = vsel %vm1646, %v94, %v482
  %v1691 = vsel %vm1646, %v96, %v484
  %v1692 = vsel %vm1646, %v97, %v486
  %v1693 = vsel %vm1646, %v99, %v488
  %v1694 = vsel %vm1646, %v100, %v490
  %v1695 = vsel %vm1646, %v102, %v492
  %v1696 = vsel %vm1646, %v103, %v494
  %v1697 = vsel %vm1646, %v105, %v496
  %v1698 = vsel %vm1646, %v106, %v498
  %v1699 = vsel %vm1646, %v108, %v500
  %v1700 = vsel %vm1646, %v109, %v502
  %v1701 = vsel %vm1646, %v111, %v504
  %v1702 = vsel %vm1646, %v112, %v506
  %v1703 = vsel %vm1646, %v114, %v508
  %v1704 = vsel %vm1646, %v115, %v510
  %v1705 = vsel %vm1646, %v117, %v512
  %v1706 = vsel %vm1646, %v118, %v514
  %v1707 = vsel %vm1646, %v120, %v516
  %v1708 = vsel %vm1646, %v121, %v518
  %v1709 = vsel %vm1646, %v123, %v520
  %v1710 = vsel %vm1646, %v124, %v522
  %vm1711 = vcmask 64512
  %v1712 = vsel %vm1711, %v1647, %v749
  %v1713 = vsel %vm1711, %v1648, %v751
  %v1714 = vsel %vm1711, %v1649, %v753
  %v1715 = vsel %vm1711, %v1650, %v755
  %v1716 = vsel %vm1711, %v1651, %v757
  %v1717 = vsel %vm1711, %v1652, %v759
  %v1718 = vsel %vm1711, %v1653, %v761
  %v1719 = vsel %vm1711, %v1654, %v763
  %v1720 = vsel %vm1711, %v1655, %v765
  %v1721 = vsel %vm1711, %v1656, %v767
  %v1722 = vsel %vm1711, %v1657, %v769
  %v1723 = vsel %vm1711, %v1658, %v771
  %v1724 = vsel %vm1711, %v1659, %v773
  %v1725 = vsel %vm1711, %v1660, %v775
  %v1726 = vsel %vm1711, %v1661, %v777
  %v1727 = vsel %vm1711, %v1662, %v779
  %v1728 = vsel %vm1711, %v1663, %v781
  %v1729 = vsel %vm1711, %v1664, %v783
  %v1730 = vsel %vm1711, %v1665, %v785
  %v1731 = vsel %vm1711, %v1666, %v787
  %v1732 = vsel %vm1711, %v1667, %v789
  %v1733 = vsel %vm1711, %v1668, %v791
  %v1734 = vsel %vm1711, %v1669, %v793
  %v1735 = vsel %vm1711, %v1670, %v795
  %v1736 = vsel %vm1711, %v1671, %v797
  %v1737 = vsel %vm1711, %v1672, %v799
  %v1738 = vsel %vm1711, %v1673, %v801
  %v1739 = vsel %vm1711, %v1674, %v803
  %v1740 = vsel %vm1711, %v1675, %v805
  %v1741 = vsel %vm1711, %v1676, %v807
  %v1742 = vsel %vm1711, %v1677, %v809
  %v1743 = vsel %vm1711, %v1678, %v811
  %v1744 = vsel %vm1711, %v1679, %v813
  %v1745 = vsel %vm1711, %v1680, %v815
  %v1746 = vsel %vm1711, %v1681, %v817
  %v1747 = vsel %vm1711, %v1682, %v819
  %v1748 = vsel %vm1711, %v1683, %v821
  %v1749 = vsel %vm1711, %v1684, %v823
  %v1750 = vsel %vm1711, %v1685, %v825
  %v1751 = vsel %vm1711, %v1686, %v827
  %v1752 = vsel %vm1711, %v1687, %v829
  %v1753 = vsel %vm1711, %v1688, %v831
  %v1754 = vsel %vm1711, %v1689, %v833
  %v1755 = vsel %vm1711, %v1690, %v835
  %v1756 = vsel %vm1711, %v1691, %v837
  %v1757 = vsel %vm1711, %v1692, %v839
  %v1758 = vsel %vm1711, %v1693, %v841
  %v1759 = vsel %vm1711, %v1694, %v843
  %v1760 = vsel %vm1711, %v1695, %v845
  %v1761 = vsel %vm1711, %v1696, %v847
  %v1762 = vsel %vm1711, %v1697, %v849
  %v1763 = vsel %vm1711, %v1698, %v851
  %v1764 = vsel %vm1711, %v1699, %v853
  %v1765 = vsel %vm1711, %v1700, %v855
  %v1766 = vsel %vm1711, %v1701, %v857
  %v1767 = vsel %vm1711, %v1702, %v859
  %v1768 = vsel %vm1711, %v1703, %v861
  %v1769 = vsel %vm1711, %v1704, %v863
  %v1770 = vsel %vm1711, %v1705, %v865
  %v1771 = vsel %vm1711, %v1706, %v867
  %v1772 = vsel %vm1711, %v1707, %v869
  %v1773 = vsel %vm1711, %v1708, %v871
  %v1774 = vsel %vm1711, %v1709, %v873
  %v1775 = vsel %vm1711, %v1710, %v875
  %vm1776 = vcmask 97280
  %v1777 = vsel %vm1776, %v1712, %v1102
  %v1778 = vsel %vm1776, %v1713, %v1104
  %v1779 = vsel %vm1776, %v1714, %v1106
  %v1780 = vsel %vm1776, %v1715, %v1108
  %v1781 = vsel %vm1776, %v1716, %v1110
  %v1782 = vsel %vm1776, %v1717, %v1112
  %v1783 = vsel %vm1776, %v1718, %v1114
  %v1784 = vsel %vm1776, %v1719, %v1116
  %v1785 = vsel %vm1776, %v1720, %v1118
  %v1786 = vsel %vm1776, %v1721, %v1120
  %v1787 = vsel %vm1776, %v1722, %v1122
  %v1788 = vsel %vm1776, %v1723, %v1124
  %v1789 = vsel %vm1776, %v1724, %v1126
  %v1790 = vsel %vm1776, %v1725, %v1128
  %v1791 = vsel %vm1776, %v1726, %v1130
  %v1792 = vsel %vm1776, %v1727, %v1132
  %v1793 = vsel %vm1776, %v1728, %v1134
  %v1794 = vsel %vm1776, %v1729, %v1136
  %v1795 = vsel %vm1776, %v1730, %v1138
  %v1796 = vsel %vm1776, %v1731, %v1140
  %v1797 = vsel %vm1776, %v1732, %v1142
  %v1798 = vsel %vm1776, %v1733, %v1144
  %v1799 = vsel %vm1776, %v1734, %v1146
  %v1800 = vsel %vm1776, %v1735, %v1148
  %v1801 = vsel %vm1776, %v1736, %v1150
  %v1802 = vsel %vm1776, %v1737, %v1152
  %v1803 = vsel %vm1776, %v1738, %v1154
  %v1804 = vsel %vm1776, %v1739, %v1156
  %v1805 = vsel %vm1776, %v1740, %v1158
  %v1806 = vsel %vm1776, %v1741, %v1160
  %v1807 = vsel %vm1776, %v1742, %v1162
  %v1808 = vsel %vm1776, %v1743, %v1164
  %v1809 = vsel %vm1776, %v1744, %v1166
  %v1810 = vsel %vm1776, %v1745, %v1168
  %v1811 = vsel %vm1776, %v1746, %v1170
  %v1812 = vsel %vm1776, %v1747, %v1172
  %v1813 = vsel %vm1776, %v1748, %v1174
  %v1814 = vsel %vm1776, %v1749, %v1176
  %v1815 = vsel %vm1776, %v1750, %v1178
  %v1816 = vsel %vm1776, %v1751, %v1180
  %v1817 = vsel %vm1776, %v1752, %v1182
  %v1818 = vsel %vm1776, %v1753, %v1184
  %v1819 = vsel %vm1776, %v1754, %v1186
  %v1820 = vsel %vm1776, %v1755, %v1188
  %v1821 = vsel %vm1776, %v1756, %v1190
  %v1822 = vsel %vm1776, %v1757, %v1192
  %v1823 = vsel %vm1776, %v1758, %v1194
  %v1824 = vsel %vm1776, %v1759, %v1196
  %v1825 = vsel %vm1776, %v1760, %v1198
  %v1826 = vsel %vm1776, %v1761, %v1200
  %v1827 = vsel %vm1776, %v1762, %v1202
  %v1828 = vsel %vm1776, %v1763, %v1204
  %v1829 = vsel %vm1776, %v1764, %v1206
  %v1830 = vsel %vm1776, %v1765, %v1208
  %v1831 = vsel %vm1776, %v1766, %v1210
  %v1832 = vsel %vm1776, %v1767, %v1212
  %v1833 = vsel %vm1776, %v1768, %v1214
  %v1834 = vsel %vm1776, %v1769, %v1216
  %v1835 = vsel %vm1776, %v1770, %v1218
  %v1836 = vsel %vm1776, %v1771, %v1220
  %v1837 = vsel %vm1776, %v1772, %v1222
  %v1838 = vsel %vm1776, %v1773, %v1224
  %v1839 = vsel %vm1776, %v1774, %v1226
  %v1840 = vsel %vm1776, %v1775, %v1228
  %vm1841 = vcmask 130048
  %v1842 = vsel %vm1841, %v1777, %v1455
  %v1843 = vsel %vm1841, %v1778, %v1457
  %v1844 = vsel %vm1841, %v1779, %v1459
  %v1845 = vsel %vm1841, %v1780, %v1461
  %v1846 = vsel %vm1841, %v1781, %v1463
  %v1847 = vsel %vm1841, %v1782, %v1465
  %v1848 = vsel %vm1841, %v1783, %v1467
  %v1849 = vsel %vm1841, %v1784, %v1469
  %v1850 = vsel %vm1841, %v1785, %v1471
  %v1851 = vsel %vm1841, %v1786, %v1473
  %v1852 = vsel %vm1841, %v1787, %v1475
  %v1853 = vsel %vm1841, %v1788, %v1477
  %v1854 = vsel %vm1841, %v1789, %v1479
  %v1855 = vsel %vm1841, %v1790, %v1481
  %v1856 = vsel %vm1841, %v1791, %v1483
  %v1857 = vsel %vm1841, %v1792, %v1485
  %v1858 = vsel %vm1841, %v1793, %v1487
  %v1859 = vsel %vm1841, %v1794, %v1489
  %v1860 = vsel %vm1841, %v1795, %v1491
  %v1861 = vsel %vm1841, %v1796, %v1493
  %v1862 = vsel %vm1841, %v1797, %v1495
  %v1863 = vsel %vm1841, %v1798, %v1497
  %v1864 = vsel %vm1841, %v1799, %v1499
  %v1865 = vsel %vm1841, %v1800, %v1501
  %v1866 = vsel %vm1841, %v1801, %v1503
  %v1867 = vsel %vm1841, %v1802, %v1505
  %v1868 = vsel %vm1841, %v1803, %v1507
  %v1869 = vsel %vm1841, %v1804, %v1509
  %v1870 = vsel %vm1841, %v1805, %v1511
  %v1871 = vsel %vm1841, %v1806, %v1513
  %v1872 = vsel %vm1841, %v1807, %v1515
  %v1873 = vsel %vm1841, %v1808, %v1517
  %v1874 = vsel %vm1841, %v1809, %v1519
  %v1875 = vsel %vm1841, %v1810, %v1521
  %v1876 = vsel %vm1841, %v1811, %v1523
  %v1877 = vsel %vm1841, %v1812, %v1525
  %v1878 = vsel %vm1841, %v1813, %v1527
  %v1879 = vsel %vm1841, %v1814, %v1529
  %v1880 = vsel %vm1841, %v1815, %v1531
  %v1881 = vsel %vm1841, %v1816, %v1533
  %v1882 = vsel %vm1841, %v1817, %v1535
  %v1883 = vsel %vm1841, %v1818, %v1537
  %v1884 = vsel %vm1841, %v1819, %v1539
  %v1885 = vsel %vm1841, %v1820, %v1541
  %v1886 = vsel %vm1841, %v1821, %v1543
  %v1887 = vsel %vm1841, %v1822, %v1545
  %v1888 = vsel %vm1841, %v1823, %v1547
  %v1889 = vsel %vm1841, %v1824, %v1549
  %v1890 = vsel %vm1841, %v1825, %v1551
  %v1891 = vsel %vm1841, %v1826, %v1553
  %v1892 = vsel %vm1841, %v1827, %v1555
  %v1893 = vsel %vm1841, %v1828, %v1557
  %v1894 = vsel %vm1841, %v1829, %v1559
  %v1895 = vsel %vm1841, %v1830, %v1561
  %v1896 = vsel %vm1841, %v1831, %v1563
  %v1897 = vsel %vm1841, %v1832, %v1565
  %v1898 = vsel %vm1841, %v1833, %v1567
  %v1899 = vsel %vm1841, %v1834, %v1569
  %v1900 = vsel %vm1841, %v1835, %v1571
  %v1901 = vsel %vm1841, %v1836, %v1573
  %v1902 = vsel %vm1841, %v1837, %v1575
  %v1903 = vsel %vm1841, %v1838, %v1577
  %v1904 = vsel %vm1841, %v1839, %v1579
  %v1905 = vsel %vm1841, %v1840, %v1581
  %v1912 = vrot.slane %v66, 1
  %v1913 = vrot.slane %v67, 1
  %v1914 = vsel %vm234, %v1912, %v1913
  %v1915 = vrot.slane %v68, 1
  %v1916 = vsel %vm234, %v1913, %v1915
  %v1917 = vrot.slane %v126, 1
  %v1918 = vrot.slane %v127, 1
  %v1919 = vsel %vm234, %v1917, %v1918
  %v1920 = vrot.slane %v128, 1
  %v1921 = vsel %vm234, %v1918, %v1920
  %1922 = vrot.lane.b32.xlu0 %v1914, 4
  %v1923 = vpop.permute.xlu0 %1922
  %1924 = vrot.lane.b32.xlu0 %v1916, 4
  %v1925 = vpop.permute.xlu0 %1924
  %1926 = vrot.lane.b32.xlu0 %v1919, 4
  %v1927 = vpop.permute.xlu0 %1926
  %1928 = vrot.lane.b32.xlu0 %v1921, 4
  %v1929 = vpop.permute.xlu0 %1928
  %v1934 = vrot.slane %v66, 2
  %v1935 = vrot.slane %v67, 2
  %v1936 = vsel %vm587, %v1934, %v1935
  %v1937 = vrot.slane %v68, 2
  %v1938 = vsel %vm587, %v1935, %v1937
  %v1939 = vrot.slane %v126, 2
  %v1940 = vrot.slane %v127, 2
  %v1941 = vsel %vm587, %v1939, %v1940
  %v1942 = vrot.slane %v128, 2
  %v1943 = vsel %vm587, %v1940, %v1942
  %1944 = vrot.lane.b32.xlu0 %v1936, 8
  %v1945 = vpop.permute.xlu0 %1944
  %1946 = vrot.lane.b32.xlu0 %v1938, 8
  %v1947 = vpop.permute.xlu0 %1946
  %1948 = vrot.lane.b32.xlu0 %v1941, 8
  %v1949 = vpop.permute.xlu0 %1948
  %1950 = vrot.lane.b32.xlu0 %v1943, 8
  %v1951 = vpop.permute.xlu0 %1950
  %v1956 = vrot.slane %v66, 3
  %v1957 = vrot.slane %v67, 3
  %v1958 = vsel %vm940, %v1956, %v1957
  %v1959 = vrot.slane %v68, 3
  %v1960 = vsel %vm940, %v1957, %v1959
  %v1961 = vrot.slane %v126, 3
  %v1962 = vrot.slane %v127, 3
  %v1963 = vsel %vm940, %v1961, %v1962
  %v1964 = vrot.slane %v128, 3
  %v1965 = vsel %vm940, %v1962, %v1964
  %1966 = vrot.lane.b32.xlu0 %v1958, 12
  %v1967 = vpop.permute.xlu0 %1966
  %1968 = vrot.lane.b32.xlu0 %v1960, 12
  %v1969 = vpop.permute.xlu0 %1968
  %1970 = vrot.lane.b32.xlu0 %v1963, 12
  %v1971 = vpop.permute.xlu0 %1970
  %1972 = vrot.lane.b32.xlu0 %v1965, 12
  %v1973 = vpop.permute.xlu0 %1972
  %v1978 = vrot.slane %v66, 4
  %v1979 = vrot.slane %v67, 4
  %v1980 = vsel %vm1293, %v1978, %v1979
  %v1981 = vrot.slane %v68, 4
  %v1982 = vsel %vm1293, %v1979, %v1981
  %v1983 = vrot.slane %v126, 4
  %v1984 = vrot.slane %v127, 4
  %v1985 = vsel %vm1293, %v1983, %v1984
  %v1986 = vrot.slane %v128, 4
  %v1987 = vsel %vm1293, %v1984, %v1986
  %1988 = vrot.lane.b32.xlu0 %v1980, 16
  %v1989 = vpop.permute.xlu0 %1988
  %1990 = vrot.lane.b32.xlu0 %v1982, 16
  %v1991 = vpop.permute.xlu0 %1990
  %1992 = vrot.lane.b32.xlu0 %v1985, 16
  %v1993 = vpop.permute.xlu0 %1992
  %1994 = vrot.lane.b32.xlu0 %v1987, 16
  %v1995 = vpop.permute.xlu0 %1994
  %v2000 = vsel %vm1646, %v66, %v1923
  %v2001 = vsel %vm1646, %v67, %v1925
  %v2002 = vsel %vm1646, %v126, %v1927
  %v2003 = vsel %vm1646, %v127, %v1929
  %v2004 = vsel %vm1711, %v2000, %v1945
  %v2005 = vsel %vm1711, %v2001, %v1947
  %v2006 = vsel %vm1711, %v2002, %v1949
  %v2007 = vsel %vm1711, %v2003, %v1951
  %v2008 = vsel %vm1776, %v2004, %v1967
  %v2009 = vsel %vm1776, %v2005, %v1969
  %v2010 = vsel %vm1776, %v2006, %v1971
  %v2011 = vsel %vm1776, %v2007, %v1973
  %v2012 = vsel %vm1841, %v2008, %v1989
  %v2013 = vsel %vm1841, %v2009, %v1991
  %v2014 = vsel %vm1841, %v2010, %v1993
  %v2015 = vsel %vm1841, %v2011, %v1995
  %v2022 = vrot.slane %v69, 1
  %v2023 = vrot.slane %v70, 1
  %v2024 = vsel %vm234, %v2022, %v2023
  %v2025 = vrot.slane %v71, 1
  %v2026 = vsel %vm234, %v2023, %v2025
  %v2027 = vrot.slane %v129, 1
  %v2028 = vrot.slane %v130, 1
  %v2029 = vsel %vm234, %v2027, %v2028
  %v2030 = vrot.slane %v131, 1
  %v2031 = vsel %vm234, %v2028, %v2030
  %2032 = vrot.lane.b32.xlu0 %v2024, 4
  %v2033 = vpop.permute.xlu0 %2032
  %2034 = vrot.lane.b32.xlu0 %v2026, 4
  %v2035 = vpop.permute.xlu0 %2034
  %2036 = vrot.lane.b32.xlu0 %v2029, 4
  %v2037 = vpop.permute.xlu0 %2036
  %2038 = vrot.lane.b32.xlu0 %v2031, 4
  %v2039 = vpop.permute.xlu0 %2038
  %v2044 = vrot.slane %v69, 2
  %v2045 = vrot.slane %v70, 2
  %v2046 = vsel %vm587, %v2044, %v2045
  %v2047 = vrot.slane %v71, 2
  %v2048 = vsel %vm587, %v2045, %v2047
  %v2049 = vrot.slane %v129, 2
  %v2050 = vrot.slane %v130, 2
  %v2051 = vsel %vm587, %v2049, %v2050
  %v2052 = vrot.slane %v131, 2
  %v2053 = vsel %vm587, %v2050, %v2052
  %2054 = vrot.lane.b32.xlu0 %v2046, 8
  %v2055 = vpop.permute.xlu0 %2054
  %2056 = vrot.lane.b32.xlu0 %v2048, 8
  %v2057 = vpop.permute.xlu0 %2056
  %2058 = vrot.lane.b32.xlu0 %v2051, 8
  %v2059 = vpop.permute.xlu0 %2058
  %2060 = vrot.lane.b32.xlu0 %v2053, 8
  %v2061 = vpop.permute.xlu0 %2060
  %v2066 = vrot.slane %v69, 3
  %v2067 = vrot.slane %v70, 3
  %v2068 = vsel %vm940, %v2066, %v2067
  %v2069 = vrot.slane %v71, 3
  %v2070 = vsel %vm940, %v2067, %v2069
  %v2071 = vrot.slane %v129, 3
  %v2072 = vrot.slane %v130, 3
  %v2073 = vsel %vm940, %v2071, %v2072
  %v2074 = vrot.slane %v131, 3
  %v2075 = vsel %vm940, %v2072, %v2074
  %2076 = vrot.lane.b32.xlu0 %v2068, 12
  %v2077 = vpop.permute.xlu0 %2076
  %2078 = vrot.lane.b32.xlu0 %v2070, 12
  %v2079 = vpop.permute.xlu0 %2078
  %2080 = vrot.lane.b32.xlu0 %v2073, 12
  %v2081 = vpop.permute.xlu0 %2080
  %2082 = vrot.lane.b32.xlu0 %v2075, 12
  %v2083 = vpop.permute.xlu0 %2082
  %v2088 = vrot.slane %v69, 4
  %v2089 = vrot.slane %v70, 4
  %v2090 = vsel %vm1293, %v2088, %v2089
  %v2091 = vrot.slane %v71, 4
  %v2092 = vsel %vm1293, %v2089, %v2091
  %v2093 = vrot.slane %v129, 4
  %v2094 = vrot.slane %v130, 4
  %v2095 = vsel %vm1293, %v2093, %v2094
  %v2096 = vrot.slane %v131, 4
  %v2097 = vsel %vm1293, %v2094, %v2096
  %2098 = vrot.lane.b32.xlu0 %v2090, 16
  %v2099 = vpop.permute.xlu0 %2098
  %2100 = vrot.lane.b32.xlu0 %v2092, 16
  %v2101 = vpop.permute.xlu0 %2100
  %2102 = vrot.lane.b32.xlu0 %v2095, 16
  %v2103 = vpop.permute.xlu0 %2102
  %2104 = vrot.lane.b32.xlu0 %v2097, 16
  %v2105 = vpop.permute.xlu0 %2104
  %v2110 = vsel %vm1646, %v69, %v2033
  %v2111 = vsel %vm1646, %v70, %v2035
  %v2112 = vsel %vm1646, %v129, %v2037
  %v2113 = vsel %vm1646, %v130, %v2039
  %v2114 = vsel %vm1711, %v2110, %v2055
  %v2115 = vsel %vm1711, %v2111, %v2057
  %v2116 = vsel %vm1711, %v2112, %v2059
  %v2117 = vsel %vm1711, %v2113, %v2061
  %v2118 = vsel %vm1776, %v2114, %v2077
  %v2119 = vsel %vm1776, %v2115, %v2079
  %v2120 = vsel %vm1776, %v2116, %v2081
  %v2121 = vsel %vm1776, %v2117, %v2083
  %v2122 = vsel %vm1841, %v2118, %v2099
  %v2123 = vsel %vm1841, %v2119, %v2101
  %v2124 = vsel %vm1841, %v2120, %v2103
  %v2125 = vsel %vm1841, %v2121, %v2105
  %v2132 = vrot.slane %v72, 1
  %v2133 = vrot.slane %v73, 1
  %v2134 = vsel %vm234, %v2132, %v2133
  %v2135 = vrot.slane %v74, 1
  %v2136 = vsel %vm234, %v2133, %v2135
  %v2137 = vrot.slane %v132, 1
  %v2138 = vrot.slane %v133, 1
  %v2139 = vsel %vm234, %v2137, %v2138
  %v2140 = vrot.slane %v134, 1
  %v2141 = vsel %vm234, %v2138, %v2140
  %2142 = vrot.lane.b32.xlu0 %v2134, 4
  %v2143 = vpop.permute.xlu0 %2142
  %2144 = vrot.lane.b32.xlu0 %v2136, 4
  %v2145 = vpop.permute.xlu0 %2144
  %2146 = vrot.lane.b32.xlu0 %v2139, 4
  %v2147 = vpop.permute.xlu0 %2146
  %2148 = vrot.lane.b32.xlu0 %v2141, 4
  %v2149 = vpop.permute.xlu0 %2148
  %v2154 = vrot.slane %v72, 2
  %v2155 = vrot.slane %v73, 2
  %v2156 = vsel %vm587, %v2154, %v2155
  %v2157 = vrot.slane %v74, 2
  %v2158 = vsel %vm587, %v2155, %v2157
  %v2159 = vrot.slane %v132, 2
  %v2160 = vrot.slane %v133, 2
  %v2161 = vsel %vm587, %v2159, %v2160
  %v2162 = vrot.slane %v134, 2
  %v2163 = vsel %vm587, %v2160, %v2162
  %2164 = vrot.lane.b32.xlu0 %v2156, 8
  %v2165 = vpop.permute.xlu0 %2164
  %2166 = vrot.lane.b32.xlu0 %v2158, 8
  %v2167 = vpop.permute.xlu0 %2166
  %2168 = vrot.lane.b32.xlu0 %v2161, 8
  %v2169 = vpop.permute.xlu0 %2168
  %2170 = vrot.lane.b32.xlu0 %v2163, 8
  %v2171 = vpop.permute.xlu0 %2170
  %v2176 = vrot.slane %v72, 3
  %v2177 = vrot.slane %v73, 3
  %v2178 = vsel %vm940, %v2176, %v2177
  %v2179 = vrot.slane %v74, 3
  %v2180 = vsel %vm940, %v2177, %v2179
  %v2181 = vrot.slane %v132, 3
  %v2182 = vrot.slane %v133, 3
  %v2183 = vsel %vm940, %v2181, %v2182
  %v2184 = vrot.slane %v134, 3
  %v2185 = vsel %vm940, %v2182, %v2184
  %2186 = vrot.lane.b32.xlu0 %v2178, 12
  %v2187 = vpop.permute.xlu0 %2186
  %2188 = vrot.lane.b32.xlu0 %v2180, 12
  %v2189 = vpop.permute.xlu0 %2188
  %2190 = vrot.lane.b32.xlu0 %v2183, 12
  %v2191 = vpop.permute.xlu0 %2190
  %2192 = vrot.lane.b32.xlu0 %v2185, 12
  %v2193 = vpop.permute.xlu0 %2192
  %v2198 = vrot.slane %v72, 4
  %v2199 = vrot.slane %v73, 4
  %v2200 = vsel %vm1293, %v2198, %v2199
  %v2201 = vrot.slane %v74, 4
  %v2202 = vsel %vm1293, %v2199, %v2201
  %v2203 = vrot.slane %v132, 4
  %v2204 = vrot.slane %v133, 4
  %v2205 = vsel %vm1293, %v2203, %v2204
  %v2206 = vrot.slane %v134, 4
  %v2207 = vsel %vm1293, %v2204, %v2206
  %2208 = vrot.lane.b32.xlu0 %v2200, 16
  %v2209 = vpop.permute.xlu0 %2208
  %2210 = vrot.lane.b32.xlu0 %v2202, 16
  %v2211 = vpop.permute.xlu0 %2210
  %2212 = vrot.lane.b32.xlu0 %v2205, 16
  %v2213 = vpop.permute.xlu0 %2212
  %2214 = vrot.lane.b32.xlu0 %v2207, 16
  %v2215 = vpop.permute.xlu0 %2214
  %v2220 = vsel %vm1646, %v72, %v2143
  %v2221 = vsel %vm1646, %v73, %v2145
  %v2222 = vsel %vm1646, %v132, %v2147
  %v2223 = vsel %vm1646, %v133, %v2149
  %v2224 = vsel %vm1711, %v2220, %v2165
  %v2225 = vsel %vm1711, %v2221, %v2167
  %v2226 = vsel %vm1711, %v2222, %v2169
  %v2227 = vsel %vm1711, %v2223, %v2171
  %v2228 = vsel %vm1776, %v2224, %v2187
  %v2229 = vsel %vm1776, %v2225, %v2189
  %v2230 = vsel %vm1776, %v2226, %v2191
  %v2231 = vsel %vm1776, %v2227, %v2193
  %v2232 = vsel %vm1841, %v2228, %v2209
  %v2233 = vsel %vm1841, %v2229, %v2211
  %v2234 = vsel %vm1841, %v2230, %v2213
  %v2235 = vsel %vm1841, %v2231, %v2215
  %v2242 = vrot.slane %v75, 1
  %v2243 = vrot.slane %v76, 1
  %v2244 = vsel %vm234, %v2242, %v2243
  %v2245 = vrot.slane %v77, 1
  %v2246 = vsel %vm234, %v2243, %v2245
  %v2247 = vrot.slane %v135, 1
  %v2248 = vrot.slane %v136, 1
  %v2249 = vsel %vm234, %v2247, %v2248
  %v2250 = vrot.slane %v137, 1
  %v2251 = vsel %vm234, %v2248, %v2250
  %2252 = vrot.lane.b32.xlu0 %v2244, 4
  %v2253 = vpop.permute.xlu0 %2252
  %2254 = vrot.lane.b32.xlu0 %v2246, 4
  %v2255 = vpop.permute.xlu0 %2254
  %2256 = vrot.lane.b32.xlu0 %v2249, 4
  %v2257 = vpop.permute.xlu0 %2256
  %2258 = vrot.lane.b32.xlu0 %v2251, 4
  %v2259 = vpop.permute.xlu0 %2258
  %v2264 = vrot.slane %v75, 2
  %v2265 = vrot.slane %v76, 2
  %v2266 = vsel %vm587, %v2264, %v2265
  %v2267 = vrot.slane %v77, 2
  %v2268 = vsel %vm587, %v2265, %v2267
  %v2269 = vrot.slane %v135, 2
  %v2270 = vrot.slane %v136, 2
  %v2271 = vsel %vm587, %v2269, %v2270
  %v2272 = vrot.slane %v137, 2
  %v2273 = vsel %vm587, %v2270, %v2272
  %2274 = vrot.lane.b32.xlu0 %v2266, 8
  %v2275 = vpop.permute.xlu0 %2274
  %2276 = vrot.lane.b32.xlu0 %v2268, 8
  %v2277 = vpop.permute.xlu0 %2276
  %2278 = vrot.lane.b32.xlu0 %v2271, 8
  %v2279 = vpop.permute.xlu0 %2278
  %2280 = vrot.lane.b32.xlu0 %v2273, 8
  %v2281 = vpop.permute.xlu0 %2280
  %v2286 = vrot.slane %v75, 3
  %v2287 = vrot.slane %v76, 3
  %v2288 = vsel %vm940, %v2286, %v2287
  %v2289 = vrot.slane %v77, 3
  %v2290 = vsel %vm940, %v2287, %v2289
  %v2291 = vrot.slane %v135, 3
  %v2292 = vrot.slane %v136, 3
  %v2293 = vsel %vm940, %v2291, %v2292
  %v2294 = vrot.slane %v137, 3
  %v2295 = vsel %vm940, %v2292, %v2294
  %2296 = vrot.lane.b32.xlu0 %v2288, 12
  %v2297 = vpop.permute.xlu0 %2296
  %2298 = vrot.lane.b32.xlu0 %v2290, 12
  %v2299 = vpop.permute.xlu0 %2298
  %2300 = vrot.lane.b32.xlu0 %v2293, 12
  %v2301 = vpop.permute.xlu0 %2300
  %2302 = vrot.lane.b32.xlu0 %v2295, 12
  %v2303 = vpop.permute.xlu0 %2302
  %v2308 = vrot.slane %v75, 4
  %v2309 = vrot.slane %v76, 4
  %v2310 = vsel %vm1293, %v2308, %v2309
  %v2311 = vrot.slane %v77, 4
  %v2312 = vsel %vm1293, %v2309, %v2311
  %v2313 = vrot.slane %v135, 4
  %v2314 = vrot.slane %v136, 4
  %v2315 = vsel %vm1293, %v2313, %v2314
  %v2316 = vrot.slane %v137, 4
  %v2317 = vsel %vm1293, %v2314, %v2316
  %2318 = vrot.lane.b32.xlu0 %v2310, 16
  %v2319 = vpop.permute.xlu0 %2318
  %2320 = vrot.lane.b32.xlu0 %v2312, 16
  %v2321 = vpop.permute.xlu0 %2320
  %2322 = vrot.lane.b32.xlu0 %v2315, 16
  %v2323 = vpop.permute.xlu0 %2322
  %2324 = vrot.lane.b32.xlu0 %v2317, 16
  %v2325 = vpop.permute.xlu0 %2324
  %v2330 = vsel %vm1646, %v75, %v2253
  %v2331 = vsel %vm1646, %v76, %v2255
  %v2332 = vsel %vm1646, %v135, %v2257
  %v2333 = vsel %vm1646, %v136, %v2259
  %v2334 = vsel %vm1711, %v2330, %v2275
  %v2335 = vsel %vm1711, %v2331, %v2277
  %v2336 = vsel %vm1711, %v2332, %v2279
  %v2337 = vsel %vm1711, %v2333, %v2281
  %v2338 = vsel %vm1776, %v2334, %v2297
  %v2339 = vsel %vm1776, %v2335, %v2299
  %v2340 = vsel %vm1776, %v2336, %v2301
  %v2341 = vsel %vm1776, %v2337, %v2303
  %v2342 = vsel %vm1841, %v2338, %v2319
  %v2343 = vsel %vm1841, %v2339, %v2321
  %v2344 = vsel %vm1841, %v2340, %v2323
  %v2345 = vsel %vm1841, %v2341, %v2325
  %2410 = vrot.lane.b32.xlu0 %v1844, 20
  %v2411 = vpop.permute.xlu0 %2410
  %2412 = vrot.lane.b32.xlu0 %v1845, 20
  %v2413 = vpop.permute.xlu0 %2412
  %2414 = vrot.lane.b32.xlu0 %v1846, 20
  %v2415 = vpop.permute.xlu0 %2414
  %2416 = vrot.lane.b32.xlu0 %v1847, 20
  %v2417 = vpop.permute.xlu0 %2416
  %2418 = vrot.lane.b32.xlu0 %v1848, 20
  %v2419 = vpop.permute.xlu0 %2418
  %2420 = vrot.lane.b32.xlu0 %v1849, 20
  %v2421 = vpop.permute.xlu0 %2420
  %2422 = vrot.lane.b32.xlu0 %v1850, 20
  %v2423 = vpop.permute.xlu0 %2422
  %2424 = vrot.lane.b32.xlu0 %v1851, 20
  %v2425 = vpop.permute.xlu0 %2424
  %2426 = vrot.lane.b32.xlu0 %v1852, 20
  %v2427 = vpop.permute.xlu0 %2426
  %2428 = vrot.lane.b32.xlu0 %v1853, 20
  %v2429 = vpop.permute.xlu0 %2428
  %2430 = vrot.lane.b32.xlu0 %v1854, 20
  %v2431 = vpop.permute.xlu0 %2430
  %2432 = vrot.lane.b32.xlu0 %v1855, 20
  %v2433 = vpop.permute.xlu0 %2432
  %2434 = vrot.lane.b32.xlu0 %v1856, 20
  %v2435 = vpop.permute.xlu0 %2434
  %2436 = vrot.lane.b32.xlu0 %v1857, 20
  %v2437 = vpop.permute.xlu0 %2436
  %2438 = vrot.lane.b32.xlu0 %v1858, 20
  %v2439 = vpop.permute.xlu0 %2438
  %2440 = vrot.lane.b32.xlu0 %v1859, 20
  %v2441 = vpop.permute.xlu0 %2440
  %2442 = vrot.lane.b32.xlu0 %v1860, 20
  %v2443 = vpop.permute.xlu0 %2442
  %2444 = vrot.lane.b32.xlu0 %v1861, 20
  %v2445 = vpop.permute.xlu0 %2444
  %2446 = vrot.lane.b32.xlu0 %v1862, 20
  %v2447 = vpop.permute.xlu0 %2446
  %2448 = vrot.lane.b32.xlu0 %v1863, 20
  %v2449 = vpop.permute.xlu0 %2448
  %2450 = vrot.lane.b32.xlu0 %v1864, 20
  %v2451 = vpop.permute.xlu0 %2450
  %2452 = vrot.lane.b32.xlu0 %v1865, 20
  %v2453 = vpop.permute.xlu0 %2452
  %2454 = vrot.lane.b32.xlu0 %v1866, 20
  %v2455 = vpop.permute.xlu0 %2454
  %2456 = vrot.lane.b32.xlu0 %v1867, 20
  %v2457 = vpop.permute.xlu0 %2456
  %2458 = vrot.lane.b32.xlu0 %v1868, 20
  %v2459 = vpop.permute.xlu0 %2458
  %2460 = vrot.lane.b32.xlu0 %v1869, 20
  %v2461 = vpop.permute.xlu0 %2460
  %2462 = vrot.lane.b32.xlu0 %v1870, 20
  %v2463 = vpop.permute.xlu0 %2462
  %2464 = vrot.lane.b32.xlu0 %v1871, 20
  %v2465 = vpop.permute.xlu0 %2464
  %2466 = vrot.lane.b32.xlu0 %v1872, 20
  %v2467 = vpop.permute.xlu0 %2466
  %2468 = vrot.lane.b32.xlu0 %v1873, 20
  %v2469 = vpop.permute.xlu0 %2468
  %2470 = vrot.lane.b32.xlu0 %v2012, 20
  %v2471 = vpop.permute.xlu0 %2470
  %2472 = vrot.lane.b32.xlu0 %v2013, 20
  %v2473 = vpop.permute.xlu0 %2472
  %2474 = vrot.lane.b32.xlu0 %v1876, 20
  %v2475 = vpop.permute.xlu0 %2474
  %2476 = vrot.lane.b32.xlu0 %v1877, 20
  %v2477 = vpop.permute.xlu0 %2476
  %2478 = vrot.lane.b32.xlu0 %v1878, 20
  %v2479 = vpop.permute.xlu0 %2478
  %2480 = vrot.lane.b32.xlu0 %v1879, 20
  %v2481 = vpop.permute.xlu0 %2480
  %2482 = vrot.lane.b32.xlu0 %v1880, 20
  %v2483 = vpop.permute.xlu0 %2482
  %2484 = vrot.lane.b32.xlu0 %v1881, 20
  %v2485 = vpop.permute.xlu0 %2484
  %2486 = vrot.lane.b32.xlu0 %v1882, 20
  %v2487 = vpop.permute.xlu0 %2486
  %2488 = vrot.lane.b32.xlu0 %v1883, 20
  %v2489 = vpop.permute.xlu0 %2488
  %2490 = vrot.lane.b32.xlu0 %v1884, 20
  %v2491 = vpop.permute.xlu0 %2490
  %2492 = vrot.lane.b32.xlu0 %v1885, 20
  %v2493 = vpop.permute.xlu0 %2492
  %2494 = vrot.lane.b32.xlu0 %v1886, 20
  %v2495 = vpop.permute.xlu0 %2494
  %2496 = vrot.lane.b32.xlu0 %v1887, 20
  %v2497 = vpop.permute.xlu0 %2496
  %2498 = vrot.lane.b32.xlu0 %v1888, 20
  %v2499 = vpop.permute.xlu0 %2498
  %2500 = vrot.lane.b32.xlu0 %v1889, 20
  %v2501 = vpop.permute.xlu0 %2500
  %2502 = vrot.lane.b32.xlu0 %v1890, 20
  %v2503 = vpop.permute.xlu0 %2502
  %2504 = vrot.lane.b32.xlu0 %v1891, 20
  %v2505 = vpop.permute.xlu0 %2504
  %2506 = vrot.lane.b32.xlu0 %v1892, 20
  %v2507 = vpop.permute.xlu0 %2506
  %2508 = vrot.lane.b32.xlu0 %v1893, 20
  %v2509 = vpop.permute.xlu0 %2508
  %2510 = vrot.lane.b32.xlu0 %v1894, 20
  %v2511 = vpop.permute.xlu0 %2510
  %2512 = vrot.lane.b32.xlu0 %v1895, 20
  %v2513 = vpop.permute.xlu0 %2512
  %2514 = vrot.lane.b32.xlu0 %v1896, 20
  %v2515 = vpop.permute.xlu0 %2514
  %2516 = vrot.lane.b32.xlu0 %v1897, 20
  %v2517 = vpop.permute.xlu0 %2516
  %2518 = vrot.lane.b32.xlu0 %v1898, 20
  %v2519 = vpop.permute.xlu0 %2518
  %2520 = vrot.lane.b32.xlu0 %v1899, 20
  %v2521 = vpop.permute.xlu0 %2520
  %2522 = vrot.lane.b32.xlu0 %v1900, 20
  %v2523 = vpop.permute.xlu0 %2522
  %2524 = vrot.lane.b32.xlu0 %v1901, 20
  %v2525 = vpop.permute.xlu0 %2524
  %2526 = vrot.lane.b32.xlu0 %v1902, 20
  %v2527 = vpop.permute.xlu0 %2526
  %2528 = vrot.lane.b32.xlu0 %v1903, 20
  %v2529 = vpop.permute.xlu0 %2528
  %2530 = vrot.lane.b32.xlu0 %v1904, 20
  %v2531 = vpop.permute.xlu0 %2530
  %2532 = vrot.lane.b32.xlu0 %v1905, 20
  %v2533 = vpop.permute.xlu0 %2532
  %2534 = vrot.lane.b32.xlu0 %v2014, 20
  %v2535 = vpop.permute.xlu0 %2534
  %2536 = vrot.lane.b32.xlu0 %v2015, 20
  %v2537 = vpop.permute.xlu0 %2536
  %2606 = vrot.lane.b32.xlu0 %v1846, 40
  %v2607 = vpop.permute.xlu0 %2606
  %2608 = vrot.lane.b32.xlu0 %v1847, 40
  %v2609 = vpop.permute.xlu0 %2608
  %2610 = vrot.lane.b32.xlu0 %v1848, 40
  %v2611 = vpop.permute.xlu0 %2610
  %2612 = vrot.lane.b32.xlu0 %v1849, 40
  %v2613 = vpop.permute.xlu0 %2612
  %2614 = vrot.lane.b32.xlu0 %v1850, 40
  %v2615 = vpop.permute.xlu0 %2614
  %2616 = vrot.lane.b32.xlu0 %v1851, 40
  %v2617 = vpop.permute.xlu0 %2616
  %2618 = vrot.lane.b32.xlu0 %v1852, 40
  %v2619 = vpop.permute.xlu0 %2618
  %2620 = vrot.lane.b32.xlu0 %v1853, 40
  %v2621 = vpop.permute.xlu0 %2620
  %2622 = vrot.lane.b32.xlu0 %v1854, 40
  %v2623 = vpop.permute.xlu0 %2622
  %2624 = vrot.lane.b32.xlu0 %v1855, 40
  %v2625 = vpop.permute.xlu0 %2624
  %2626 = vrot.lane.b32.xlu0 %v1856, 40
  %v2627 = vpop.permute.xlu0 %2626
  %2628 = vrot.lane.b32.xlu0 %v1857, 40
  %v2629 = vpop.permute.xlu0 %2628
  %2630 = vrot.lane.b32.xlu0 %v1858, 40
  %v2631 = vpop.permute.xlu0 %2630
  %2632 = vrot.lane.b32.xlu0 %v1859, 40
  %v2633 = vpop.permute.xlu0 %2632
  %2634 = vrot.lane.b32.xlu0 %v1860, 40
  %v2635 = vpop.permute.xlu0 %2634
  %2636 = vrot.lane.b32.xlu0 %v1861, 40
  %v2637 = vpop.permute.xlu0 %2636
  %2638 = vrot.lane.b32.xlu0 %v1862, 40
  %v2639 = vpop.permute.xlu0 %2638
  %2640 = vrot.lane.b32.xlu0 %v1863, 40
  %v2641 = vpop.permute.xlu0 %2640
  %2642 = vrot.lane.b32.xlu0 %v1864, 40
  %v2643 = vpop.permute.xlu0 %2642
  %2644 = vrot.lane.b32.xlu0 %v1865, 40
  %v2645 = vpop.permute.xlu0 %2644
  %2646 = vrot.lane.b32.xlu0 %v1866, 40
  %v2647 = vpop.permute.xlu0 %2646
  %2648 = vrot.lane.b32.xlu0 %v1867, 40
  %v2649 = vpop.permute.xlu0 %2648
  %2650 = vrot.lane.b32.xlu0 %v1868, 40
  %v2651 = vpop.permute.xlu0 %2650
  %2652 = vrot.lane.b32.xlu0 %v1869, 40
  %v2653 = vpop.permute.xlu0 %2652
  %2654 = vrot.lane.b32.xlu0 %v1870, 40
  %v2655 = vpop.permute.xlu0 %2654
  %2656 = vrot.lane.b32.xlu0 %v1871, 40
  %v2657 = vpop.permute.xlu0 %2656
  %2658 = vrot.lane.b32.xlu0 %v1872, 40
  %v2659 = vpop.permute.xlu0 %2658
  %2660 = vrot.lane.b32.xlu0 %v1873, 40
  %v2661 = vpop.permute.xlu0 %2660
  %2662 = vrot.lane.b32.xlu0 %v2012, 40
  %v2663 = vpop.permute.xlu0 %2662
  %2664 = vrot.lane.b32.xlu0 %v2013, 40
  %v2665 = vpop.permute.xlu0 %2664
  %2666 = vrot.lane.b32.xlu0 %v2122, 40
  %v2667 = vpop.permute.xlu0 %2666
  %2668 = vrot.lane.b32.xlu0 %v2123, 40
  %v2669 = vpop.permute.xlu0 %2668
  %2670 = vrot.lane.b32.xlu0 %v1878, 40
  %v2671 = vpop.permute.xlu0 %2670
  %2672 = vrot.lane.b32.xlu0 %v1879, 40
  %v2673 = vpop.permute.xlu0 %2672
  %2674 = vrot.lane.b32.xlu0 %v1880, 40
  %v2675 = vpop.permute.xlu0 %2674
  %2676 = vrot.lane.b32.xlu0 %v1881, 40
  %v2677 = vpop.permute.xlu0 %2676
  %2678 = vrot.lane.b32.xlu0 %v1882, 40
  %v2679 = vpop.permute.xlu0 %2678
  %2680 = vrot.lane.b32.xlu0 %v1883, 40
  %v2681 = vpop.permute.xlu0 %2680
  %2682 = vrot.lane.b32.xlu0 %v1884, 40
  %v2683 = vpop.permute.xlu0 %2682
  %2684 = vrot.lane.b32.xlu0 %v1885, 40
  %v2685 = vpop.permute.xlu0 %2684
  %2686 = vrot.lane.b32.xlu0 %v1886, 40
  %v2687 = vpop.permute.xlu0 %2686
  %2688 = vrot.lane.b32.xlu0 %v1887, 40
  %v2689 = vpop.permute.xlu0 %2688
  %2690 = vrot.lane.b32.xlu0 %v1888, 40
  %v2691 = vpop.permute.xlu0 %2690
  %2692 = vrot.lane.b32.xlu0 %v1889, 40
  %v2693 = vpop.permute.xlu0 %2692
  %2694 = vrot.lane.b32.xlu0 %v1890, 40
  %v2695 = vpop.permute.xlu0 %2694
  %2696 = vrot.lane.b32.xlu0 %v1891, 40
  %v2697 = vpop.permute.xlu0 %2696
  %2698 = vrot.lane.b32.xlu0 %v1892, 40
  %v2699 = vpop.permute.xlu0 %2698
  %2700 = vrot.lane.b32.xlu0 %v1893, 40
  %v2701 = vpop.permute.xlu0 %2700
  %2702 = vrot.lane.b32.xlu0 %v1894, 40
  %v2703 = vpop.permute.xlu0 %2702
  %2704 = vrot.lane.b32.xlu0 %v1895, 40
  %v2705 = vpop.permute.xlu0 %2704
  %2706 = vrot.lane.b32.xlu0 %v1896, 40
  %v2707 = vpop.permute.xlu0 %2706
  %2708 = vrot.lane.b32.xlu0 %v1897, 40
  %v2709 = vpop.permute.xlu0 %2708
  %2710 = vrot.lane.b32.xlu0 %v1898, 40
  %v2711 = vpop.permute.xlu0 %2710
  %2712 = vrot.lane.b32.xlu0 %v1899, 40
  %v2713 = vpop.permute.xlu0 %2712
  %2714 = vrot.lane.b32.xlu0 %v1900, 40
  %v2715 = vpop.permute.xlu0 %2714
  %2716 = vrot.lane.b32.xlu0 %v1901, 40
  %v2717 = vpop.permute.xlu0 %2716
  %2718 = vrot.lane.b32.xlu0 %v1902, 40
  %v2719 = vpop.permute.xlu0 %2718
  %2720 = vrot.lane.b32.xlu0 %v1903, 40
  %v2721 = vpop.permute.xlu0 %2720
  %2722 = vrot.lane.b32.xlu0 %v1904, 40
  %v2723 = vpop.permute.xlu0 %2722
  %2724 = vrot.lane.b32.xlu0 %v1905, 40
  %v2725 = vpop.permute.xlu0 %2724
  %2726 = vrot.lane.b32.xlu0 %v2014, 40
  %v2727 = vpop.permute.xlu0 %2726
  %2728 = vrot.lane.b32.xlu0 %v2015, 40
  %v2729 = vpop.permute.xlu0 %2728
  %2730 = vrot.lane.b32.xlu0 %v2124, 40
  %v2731 = vpop.permute.xlu0 %2730
  %2732 = vrot.lane.b32.xlu0 %v2125, 40
  %v2733 = vpop.permute.xlu0 %2732
  %2802 = vrot.lane.b32.xlu0 %v1848, 60
  %v2803 = vpop.permute.xlu0 %2802
  %2804 = vrot.lane.b32.xlu0 %v1849, 60
  %v2805 = vpop.permute.xlu0 %2804
  %2806 = vrot.lane.b32.xlu0 %v1850, 60
  %v2807 = vpop.permute.xlu0 %2806
  %2808 = vrot.lane.b32.xlu0 %v1851, 60
  %v2809 = vpop.permute.xlu0 %2808
  %2810 = vrot.lane.b32.xlu0 %v1852, 60
  %v2811 = vpop.permute.xlu0 %2810
  %2812 = vrot.lane.b32.xlu0 %v1853, 60
  %v2813 = vpop.permute.xlu0 %2812
  %2814 = vrot.lane.b32.xlu0 %v1854, 60
  %v2815 = vpop.permute.xlu0 %2814
  %2816 = vrot.lane.b32.xlu0 %v1855, 60
  %v2817 = vpop.permute.xlu0 %2816
  %2818 = vrot.lane.b32.xlu0 %v1856, 60
  %v2819 = vpop.permute.xlu0 %2818
  %2820 = vrot.lane.b32.xlu0 %v1857, 60
  %v2821 = vpop.permute.xlu0 %2820
  %2822 = vrot.lane.b32.xlu0 %v1858, 60
  %v2823 = vpop.permute.xlu0 %2822
  %2824 = vrot.lane.b32.xlu0 %v1859, 60
  %v2825 = vpop.permute.xlu0 %2824
  %2826 = vrot.lane.b32.xlu0 %v1860, 60
  %v2827 = vpop.permute.xlu0 %2826
  %2828 = vrot.lane.b32.xlu0 %v1861, 60
  %v2829 = vpop.permute.xlu0 %2828
  %2830 = vrot.lane.b32.xlu0 %v1862, 60
  %v2831 = vpop.permute.xlu0 %2830
  %2832 = vrot.lane.b32.xlu0 %v1863, 60
  %v2833 = vpop.permute.xlu0 %2832
  %2834 = vrot.lane.b32.xlu0 %v1864, 60
  %v2835 = vpop.permute.xlu0 %2834
  %2836 = vrot.lane.b32.xlu0 %v1865, 60
  %v2837 = vpop.permute.xlu0 %2836
  %2838 = vrot.lane.b32.xlu0 %v1866, 60
  %v2839 = vpop.permute.xlu0 %2838
  %2840 = vrot.lane.b32.xlu0 %v1867, 60
  %v2841 = vpop.permute.xlu0 %2840
  %2842 = vrot.lane.b32.xlu0 %v1868, 60
  %v2843 = vpop.permute.xlu0 %2842
  %2844 = vrot.lane.b32.xlu0 %v1869, 60
  %v2845 = vpop.permute.xlu0 %2844
  %2846 = vrot.lane.b32.xlu0 %v1870, 60
  %v2847 = vpop.permute.xlu0 %2846
  %2848 = vrot.lane.b32.xlu0 %v1871, 60
  %v2849 = vpop.permute.xlu0 %2848
  %2850 = vrot.lane.b32.xlu0 %v1872, 60
  %v2851 = vpop.permute.xlu0 %2850
  %2852 = vrot.lane.b32.xlu0 %v1873, 60
  %v2853 = vpop.permute.xlu0 %2852
  %2854 = vrot.lane.b32.xlu0 %v2012, 60
  %v2855 = vpop.permute.xlu0 %2854
  %2856 = vrot.lane.b32.xlu0 %v2013, 60
  %v2857 = vpop.permute.xlu0 %2856
  %2858 = vrot.lane.b32.xlu0 %v2122, 60
  %v2859 = vpop.permute.xlu0 %2858
  %2860 = vrot.lane.b32.xlu0 %v2123, 60
  %v2861 = vpop.permute.xlu0 %2860
  %2862 = vrot.lane.b32.xlu0 %v2232, 60
  %v2863 = vpop.permute.xlu0 %2862
  %2864 = vrot.lane.b32.xlu0 %v2233, 60
  %v2865 = vpop.permute.xlu0 %2864
  %2866 = vrot.lane.b32.xlu0 %v1880, 60
  %v2867 = vpop.permute.xlu0 %2866
  %2868 = vrot.lane.b32.xlu0 %v1881, 60
  %v2869 = vpop.permute.xlu0 %2868
  %2870 = vrot.lane.b32.xlu0 %v1882, 60
  %v2871 = vpop.permute.xlu0 %2870
  %2872 = vrot.lane.b32.xlu0 %v1883, 60
  %v2873 = vpop.permute.xlu0 %2872
  %2874 = vrot.lane.b32.xlu0 %v1884, 60
  %v2875 = vpop.permute.xlu0 %2874
  %2876 = vrot.lane.b32.xlu0 %v1885, 60
  %v2877 = vpop.permute.xlu0 %2876
  %2878 = vrot.lane.b32.xlu0 %v1886, 60
  %v2879 = vpop.permute.xlu0 %2878
  %2880 = vrot.lane.b32.xlu0 %v1887, 60
  %v2881 = vpop.permute.xlu0 %2880
  %2882 = vrot.lane.b32.xlu0 %v1888, 60
  %v2883 = vpop.permute.xlu0 %2882
  %2884 = vrot.lane.b32.xlu0 %v1889, 60
  %v2885 = vpop.permute.xlu0 %2884
  %2886 = vrot.lane.b32.xlu0 %v1890, 60
  %v2887 = vpop.permute.xlu0 %2886
  %2888 = vrot.lane.b32.xlu0 %v1891, 60
  %v2889 = vpop.permute.xlu0 %2888
  %2890 = vrot.lane.b32.xlu0 %v1892, 60
  %v2891 = vpop.permute.xlu0 %2890
  %2892 = vrot.lane.b32.xlu0 %v1893, 60
  %v2893 = vpop.permute.xlu0 %2892
  %2894 = vrot.lane.b32.xlu0 %v1894, 60
  %v2895 = vpop.permute.xlu0 %2894
  %2896 = vrot.lane.b32.xlu0 %v1895, 60
  %v2897 = vpop.permute.xlu0 %2896
  %2898 = vrot.lane.b32.xlu0 %v1896, 60
  %v2899 = vpop.permute.xlu0 %2898
  %2900 = vrot.lane.b32.xlu0 %v1897, 60
  %v2901 = vpop.permute.xlu0 %2900
  %2902 = vrot.lane.b32.xlu0 %v1898, 60
  %v2903 = vpop.permute.xlu0 %2902
  %2904 = vrot.lane.b32.xlu0 %v1899, 60
  %v2905 = vpop.permute.xlu0 %2904
  %2906 = vrot.lane.b32.xlu0 %v1900, 60
  %v2907 = vpop.permute.xlu0 %2906
  %2908 = vrot.lane.b32.xlu0 %v1901, 60
  %v2909 = vpop.permute.xlu0 %2908
  %2910 = vrot.lane.b32.xlu0 %v1902, 60
  %v2911 = vpop.permute.xlu0 %2910
  %2912 = vrot.lane.b32.xlu0 %v1903, 60
  %v2913 = vpop.permute.xlu0 %2912
  %2914 = vrot.lane.b32.xlu0 %v1904, 60
  %v2915 = vpop.permute.xlu0 %2914
  %2916 = vrot.lane.b32.xlu0 %v1905, 60
  %v2917 = vpop.permute.xlu0 %2916
  %2918 = vrot.lane.b32.xlu0 %v2014, 60
  %v2919 = vpop.permute.xlu0 %2918
  %2920 = vrot.lane.b32.xlu0 %v2015, 60
  %v2921 = vpop.permute.xlu0 %2920
  %2922 = vrot.lane.b32.xlu0 %v2124, 60
  %v2923 = vpop.permute.xlu0 %2922
  %2924 = vrot.lane.b32.xlu0 %v2125, 60
  %v2925 = vpop.permute.xlu0 %2924
  %2926 = vrot.lane.b32.xlu0 %v2234, 60
  %v2927 = vpop.permute.xlu0 %2926
  %2928 = vrot.lane.b32.xlu0 %v2235, 60
  %v2929 = vpop.permute.xlu0 %2928
  %2998 = vrot.lane.b32.xlu0 %v1850, 80
  %v2999 = vpop.permute.xlu0 %2998
  %3000 = vrot.lane.b32.xlu0 %v1851, 80
  %v3001 = vpop.permute.xlu0 %3000
  %3002 = vrot.lane.b32.xlu0 %v1852, 80
  %v3003 = vpop.permute.xlu0 %3002
  %3004 = vrot.lane.b32.xlu0 %v1853, 80
  %v3005 = vpop.permute.xlu0 %3004
  %3006 = vrot.lane.b32.xlu0 %v1854, 80
  %v3007 = vpop.permute.xlu0 %3006
  %3008 = vrot.lane.b32.xlu0 %v1855, 80
  %v3009 = vpop.permute.xlu0 %3008
  %3010 = vrot.lane.b32.xlu0 %v1856, 80
  %v3011 = vpop.permute.xlu0 %3010
  %3012 = vrot.lane.b32.xlu0 %v1857, 80
  %v3013 = vpop.permute.xlu0 %3012
  %3014 = vrot.lane.b32.xlu0 %v1858, 80
  %v3015 = vpop.permute.xlu0 %3014
  %3016 = vrot.lane.b32.xlu0 %v1859, 80
  %v3017 = vpop.permute.xlu0 %3016
  %3018 = vrot.lane.b32.xlu0 %v1860, 80
  %v3019 = vpop.permute.xlu0 %3018
  %3020 = vrot.lane.b32.xlu0 %v1861, 80
  %v3021 = vpop.permute.xlu0 %3020
  %3022 = vrot.lane.b32.xlu0 %v1862, 80
  %v3023 = vpop.permute.xlu0 %3022
  %3024 = vrot.lane.b32.xlu0 %v1863, 80
  %v3025 = vpop.permute.xlu0 %3024
  %3026 = vrot.lane.b32.xlu0 %v1864, 80
  %v3027 = vpop.permute.xlu0 %3026
  %3028 = vrot.lane.b32.xlu0 %v1865, 80
  %v3029 = vpop.permute.xlu0 %3028
  %3030 = vrot.lane.b32.xlu0 %v1866, 80
  %v3031 = vpop.permute.xlu0 %3030
  %3032 = vrot.lane.b32.xlu0 %v1867, 80
  %v3033 = vpop.permute.xlu0 %3032
  %3034 = vrot.lane.b32.xlu0 %v1868, 80
  %v3035 = vpop.permute.xlu0 %3034
  %3036 = vrot.lane.b32.xlu0 %v1869, 80
  %v3037 = vpop.permute.xlu0 %3036
  %3038 = vrot.lane.b32.xlu0 %v1870, 80
  %v3039 = vpop.permute.xlu0 %3038
  %3040 = vrot.lane.b32.xlu0 %v1871, 80
  %v3041 = vpop.permute.xlu0 %3040
  %3042 = vrot.lane.b32.xlu0 %v1872, 80
  %v3043 = vpop.permute.xlu0 %3042
  %3044 = vrot.lane.b32.xlu0 %v1873, 80
  %v3045 = vpop.permute.xlu0 %3044
  %3046 = vrot.lane.b32.xlu0 %v2012, 80
  %v3047 = vpop.permute.xlu0 %3046
  %3048 = vrot.lane.b32.xlu0 %v2013, 80
  %v3049 = vpop.permute.xlu0 %3048
  %3050 = vrot.lane.b32.xlu0 %v2122, 80
  %v3051 = vpop.permute.xlu0 %3050
  %3052 = vrot.lane.b32.xlu0 %v2123, 80
  %v3053 = vpop.permute.xlu0 %3052
  %3054 = vrot.lane.b32.xlu0 %v2232, 80
  %v3055 = vpop.permute.xlu0 %3054
  %3056 = vrot.lane.b32.xlu0 %v2233, 80
  %v3057 = vpop.permute.xlu0 %3056
  %3058 = vrot.lane.b32.xlu0 %v2342, 80
  %v3059 = vpop.permute.xlu0 %3058
  %3060 = vrot.lane.b32.xlu0 %v2343, 80
  %v3061 = vpop.permute.xlu0 %3060
  %3062 = vrot.lane.b32.xlu0 %v1882, 80
  %v3063 = vpop.permute.xlu0 %3062
  %3064 = vrot.lane.b32.xlu0 %v1883, 80
  %v3065 = vpop.permute.xlu0 %3064
  %3066 = vrot.lane.b32.xlu0 %v1884, 80
  %v3067 = vpop.permute.xlu0 %3066
  %3068 = vrot.lane.b32.xlu0 %v1885, 80
  %v3069 = vpop.permute.xlu0 %3068
  %3070 = vrot.lane.b32.xlu0 %v1886, 80
  %v3071 = vpop.permute.xlu0 %3070
  %3072 = vrot.lane.b32.xlu0 %v1887, 80
  %v3073 = vpop.permute.xlu0 %3072
  %3074 = vrot.lane.b32.xlu0 %v1888, 80
  %v3075 = vpop.permute.xlu0 %3074
  %3076 = vrot.lane.b32.xlu0 %v1889, 80
  %v3077 = vpop.permute.xlu0 %3076
  %3078 = vrot.lane.b32.xlu0 %v1890, 80
  %v3079 = vpop.permute.xlu0 %3078
  %3080 = vrot.lane.b32.xlu0 %v1891, 80
  %v3081 = vpop.permute.xlu0 %3080
  %3082 = vrot.lane.b32.xlu0 %v1892, 80
  %v3083 = vpop.permute.xlu0 %3082
  %3084 = vrot.lane.b32.xlu0 %v1893, 80
  %v3085 = vpop.permute.xlu0 %3084
  %3086 = vrot.lane.b32.xlu0 %v1894, 80
  %v3087 = vpop.permute.xlu0 %3086
  %3088 = vrot.lane.b32.xlu0 %v1895, 80
  %v3089 = vpop.permute.xlu0 %3088
  %3090 = vrot.lane.b32.xlu0 %v1896, 80
  %v3091 = vpop.permute.xlu0 %3090
  %3092 = vrot.lane.b32.xlu0 %v1897, 80
  %v3093 = vpop.permute.xlu0 %3092
  %3094 = vrot.lane.b32.xlu0 %v1898, 80
  %v3095 = vpop.permute.xlu0 %3094
  %3096 = vrot.lane.b32.xlu0 %v1899, 80
  %v3097 = vpop.permute.xlu0 %3096
  %3098 = vrot.lane.b32.xlu0 %v1900, 80
  %v3099 = vpop.permute.xlu0 %3098
  %3100 = vrot.lane.b32.xlu0 %v1901, 80
  %v3101 = vpop.permute.xlu0 %3100
  %3102 = vrot.lane.b32.xlu0 %v1902, 80
  %v3103 = vpop.permute.xlu0 %3102
  %3104 = vrot.lane.b32.xlu0 %v1903, 80
  %v3105 = vpop.permute.xlu0 %3104
  %3106 = vrot.lane.b32.xlu0 %v1904, 80
  %v3107 = vpop.permute.xlu0 %3106
  %3108 = vrot.lane.b32.xlu0 %v1905, 80
  %v3109 = vpop.permute.xlu0 %3108
  %3110 = vrot.lane.b32.xlu0 %v2014, 80
  %v3111 = vpop.permute.xlu0 %3110
  %3112 = vrot.lane.b32.xlu0 %v2015, 80
  %v3113 = vpop.permute.xlu0 %3112
  %3114 = vrot.lane.b32.xlu0 %v2124, 80
  %v3115 = vpop.permute.xlu0 %3114
  %3116 = vrot.lane.b32.xlu0 %v2125, 80
  %v3117 = vpop.permute.xlu0 %3116
  %3118 = vrot.lane.b32.xlu0 %v2234, 80
  %v3119 = vpop.permute.xlu0 %3118
  %3120 = vrot.lane.b32.xlu0 %v2235, 80
  %v3121 = vpop.permute.xlu0 %3120
  %3122 = vrot.lane.b32.xlu0 %v2344, 80
  %v3123 = vpop.permute.xlu0 %3122
  %3124 = vrot.lane.b32.xlu0 %v2345, 80
  %v3125 = vpop.permute.xlu0 %3124
  %vm3190 = vcmask 162816
  %v3191 = vsel %vm3190, %v1842, %v2411
  %v3192 = vsel %vm3190, %v1843, %v2413
  %v3193 = vsel %vm3190, %v1844, %v2415
  %v3194 = vsel %vm3190, %v1845, %v2417
  %v3195 = vsel %vm3190, %v1846, %v2419
  %v3196 = vsel %vm3190, %v1847, %v2421
  %v3197 = vsel %vm3190, %v1848, %v2423
  %v3198 = vsel %vm3190, %v1849, %v2425
  %v3199 = vsel %vm3190, %v1850, %v2427
  %v3200 = vsel %vm3190, %v1851, %v2429
  %v3201 = vsel %vm3190, %v1852, %v2431
  %v3202 = vsel %vm3190, %v1853, %v2433
  %v3203 = vsel %vm3190, %v1854, %v2435
  %v3204 = vsel %vm3190, %v1855, %v2437
  %v3205 = vsel %vm3190, %v1856, %v2439
  %v3206 = vsel %vm3190, %v1857, %v2441
  %v3207 = vsel %vm3190, %v1858, %v2443
  %v3208 = vsel %vm3190, %v1859, %v2445
  %v3209 = vsel %vm3190, %v1860, %v2447
  %v3210 = vsel %vm3190, %v1861, %v2449
  %v3211 = vsel %vm3190, %v1862, %v2451
  %v3212 = vsel %vm3190, %v1863, %v2453
  %v3213 = vsel %vm3190, %v1864, %v2455
  %v3214 = vsel %vm3190, %v1865, %v2457
  %v3215 = vsel %vm3190, %v1866, %v2459
  %v3216 = vsel %vm3190, %v1867, %v2461
  %v3217 = vsel %vm3190, %v1868, %v2463
  %v3218 = vsel %vm3190, %v1869, %v2465
  %v3219 = vsel %vm3190, %v1870, %v2467
  %v3220 = vsel %vm3190, %v1871, %v2469
  %v3221 = vsel %vm3190, %v1872, %v2471
  %v3222 = vsel %vm3190, %v1873, %v2473
  %v3223 = vsel %vm3190, %v1874, %v2475
  %v3224 = vsel %vm3190, %v1875, %v2477
  %v3225 = vsel %vm3190, %v1876, %v2479
  %v3226 = vsel %vm3190, %v1877, %v2481
  %v3227 = vsel %vm3190, %v1878, %v2483
  %v3228 = vsel %vm3190, %v1879, %v2485
  %v3229 = vsel %vm3190, %v1880, %v2487
  %v3230 = vsel %vm3190, %v1881, %v2489
  %v3231 = vsel %vm3190, %v1882, %v2491
  %v3232 = vsel %vm3190, %v1883, %v2493
  %v3233 = vsel %vm3190, %v1884, %v2495
  %v3234 = vsel %vm3190, %v1885, %v2497
  %v3235 = vsel %vm3190, %v1886, %v2499
  %v3236 = vsel %vm3190, %v1887, %v2501
  %v3237 = vsel %vm3190, %v1888, %v2503
  %v3238 = vsel %vm3190, %v1889, %v2505
  %v3239 = vsel %vm3190, %v1890, %v2507
  %v3240 = vsel %vm3190, %v1891, %v2509
  %v3241 = vsel %vm3190, %v1892, %v2511
  %v3242 = vsel %vm3190, %v1893, %v2513
  %v3243 = vsel %vm3190, %v1894, %v2515
  %v3244 = vsel %vm3190, %v1895, %v2517
  %v3245 = vsel %vm3190, %v1896, %v2519
  %v3246 = vsel %vm3190, %v1897, %v2521
  %v3247 = vsel %vm3190, %v1898, %v2523
  %v3248 = vsel %vm3190, %v1899, %v2525
  %v3249 = vsel %vm3190, %v1900, %v2527
  %v3250 = vsel %vm3190, %v1901, %v2529
  %v3251 = vsel %vm3190, %v1902, %v2531
  %v3252 = vsel %vm3190, %v1903, %v2533
  %v3253 = vsel %vm3190, %v1904, %v2535
  %v3254 = vsel %vm3190, %v1905, %v2537
  %vm3255 = vcmask 326656
  %v3256 = vsel %vm3255, %v3191, %v2607
  %v3257 = vsel %vm3255, %v3192, %v2609
  %v3258 = vsel %vm3255, %v3193, %v2611
  %v3259 = vsel %vm3255, %v3194, %v2613
  %v3260 = vsel %vm3255, %v3195, %v2615
  %v3261 = vsel %vm3255, %v3196, %v2617
  %v3262 = vsel %vm3255, %v3197, %v2619
  %v3263 = vsel %vm3255, %v3198, %v2621
  %v3264 = vsel %vm3255, %v3199, %v2623
  %v3265 = vsel %vm3255, %v3200, %v2625
  %v3266 = vsel %vm3255, %v3201, %v2627
  %v3267 = vsel %vm3255, %v3202, %v2629
  %v3268 = vsel %vm3255, %v3203, %v2631
  %v3269 = vsel %vm3255, %v3204, %v2633
  %v3270 = vsel %vm3255, %v3205, %v2635
  %v3271 = vsel %vm3255, %v3206, %v2637
  %v3272 = vsel %vm3255, %v3207, %v2639
  %v3273 = vsel %vm3255, %v3208, %v2641
  %v3274 = vsel %vm3255, %v3209, %v2643
  %v3275 = vsel %vm3255, %v3210, %v2645
  %v3276 = vsel %vm3255, %v3211, %v2647
  %v3277 = vsel %vm3255, %v3212, %v2649
  %v3278 = vsel %vm3255, %v3213, %v2651
  %v3279 = vsel %vm3255, %v3214, %v2653
  %v3280 = vsel %vm3255, %v3215, %v2655
  %v3281 = vsel %vm3255, %v3216, %v2657
  %v3282 = vsel %vm3255, %v3217, %v2659
  %v3283 = vsel %vm3255, %v3218, %v2661
  %v3284 = vsel %vm3255, %v3219, %v2663
  %v3285 = vsel %vm3255, %v3220, %v2665
  %v3286 = vsel %vm3255, %v3221, %v2667
  %v3287 = vsel %vm3255, %v3222, %v2669
  %v3288 = vsel %vm3255, %v3223, %v2671
  %v3289 = vsel %vm3255, %v3224, %v2673
  %v3290 = vsel %vm3255, %v3225, %v2675
  %v3291 = vsel %vm3255, %v3226, %v2677
  %v3292 = vsel %vm3255, %v3227, %v2679
  %v3293 = vsel %vm3255, %v3228, %v2681
  %v3294 = vsel %vm3255, %v3229, %v2683
  %v3295 = vsel %vm3255, %v3230, %v2685
  %v3296 = vsel %vm3255, %v3231, %v2687
  %v3297 = vsel %vm3255, %v3232, %v2689
  %v3298 = vsel %vm3255, %v3233, %v2691
  %v3299 = vsel %vm3255, %v3234, %v2693
  %v3300 = vsel %vm3255, %v3235, %v2695
  %v3301 = vsel %vm3255, %v3236, %v2697
  %v3302 = vsel %vm3255, %v3237, %v2699
  %v3303 = vsel %vm3255, %v3238, %v2701
  %v3304 = vsel %vm3255, %v3239, %v2703
  %v3305 = vsel %vm3255, %v3240, %v2705
  %v3306 = vsel %vm3255, %v3241, %v2707
  %v3307 = vsel %vm3255, %v3242, %v2709
  %v3308 = vsel %vm3255, %v3243, %v2711
  %v3309 = vsel %vm3255, %v3244, %v2713
  %v3310 = vsel %vm3255, %v3245, %v2715
  %v3311 = vsel %vm3255, %v3246, %v2717
  %v3312 = vsel %vm3255, %v3247, %v2719
  %v3313 = vsel %vm3255, %v3248, %v2721
  %v3314 = vsel %vm3255, %v3249, %v2723
  %v3315 = vsel %vm3255, %v3250, %v2725
  %v3316 = vsel %vm3255, %v3251, %v2727
  %v3317 = vsel %vm3255, %v3252, %v2729
  %v3318 = vsel %vm3255, %v3253, %v2731
  %v3319 = vsel %vm3255, %v3254, %v2733
  %vm3320 = vcmask 490496
  %v3321 = vsel %vm3320, %v3256, %v2803
  %v3322 = vsel %vm3320, %v3257, %v2805
  %v3323 = vsel %vm3320, %v3258, %v2807
  %v3324 = vsel %vm3320, %v3259, %v2809
  %v3325 = vsel %vm3320, %v3260, %v2811
  %v3326 = vsel %vm3320, %v3261, %v2813
  %v3327 = vsel %vm3320, %v3262, %v2815
  %v3328 = vsel %vm3320, %v3263, %v2817
  %v3329 = vsel %vm3320, %v3264, %v2819
  %v3330 = vsel %vm3320, %v3265, %v2821
  %v3331 = vsel %vm3320, %v3266, %v2823
  %v3332 = vsel %vm3320, %v3267, %v2825
  %v3333 = vsel %vm3320, %v3268, %v2827
  %v3334 = vsel %vm3320, %v3269, %v2829
  %v3335 = vsel %vm3320, %v3270, %v2831
  %v3336 = vsel %vm3320, %v3271, %v2833
  %v3337 = vsel %vm3320, %v3272, %v2835
  %v3338 = vsel %vm3320, %v3273, %v2837
  %v3339 = vsel %vm3320, %v3274, %v2839
  %v3340 = vsel %vm3320, %v3275, %v2841
  %v3341 = vsel %vm3320, %v3276, %v2843
  %v3342 = vsel %vm3320, %v3277, %v2845
  %v3343 = vsel %vm3320, %v3278, %v2847
  %v3344 = vsel %vm3320, %v3279, %v2849
  %v3345 = vsel %vm3320, %v3280, %v2851
  %v3346 = vsel %vm3320, %v3281, %v2853
  %v3347 = vsel %vm3320, %v3282, %v2855
  %v3348 = vsel %vm3320, %v3283, %v2857
  %v3349 = vsel %vm3320, %v3284, %v2859
  %v3350 = vsel %vm3320, %v3285, %v2861
  %v3351 = vsel %vm3320, %v3286, %v2863
  %v3352 = vsel %vm3320, %v3287, %v2865
  %v3353 = vsel %vm3320, %v3288, %v2867
  %v3354 = vsel %vm3320, %v3289, %v2869
  %v3355 = vsel %vm3320, %v3290, %v2871
  %v3356 = vsel %vm3320, %v3291, %v2873
  %v3357 = vsel %vm3320, %v3292, %v2875
  %v3358 = vsel %vm3320, %v3293, %v2877
  %v3359 = vsel %vm3320, %v3294, %v2879
  %v3360 = vsel %vm3320, %v3295, %v2881
  %v3361 = vsel %vm3320, %v3296, %v2883
  %v3362 = vsel %vm3320, %v3297, %v2885
  %v3363 = vsel %vm3320, %v3298, %v2887
  %v3364 = vsel %vm3320, %v3299, %v2889
  %v3365 = vsel %vm3320, %v3300, %v2891
  %v3366 = vsel %vm3320, %v3301, %v2893
  %v3367 = vsel %vm3320, %v3302, %v2895
  %v3368 = vsel %vm3320, %v3303, %v2897
  %v3369 = vsel %vm3320, %v3304, %v2899
  %v3370 = vsel %vm3320, %v3305, %v2901
  %v3371 = vsel %vm3320, %v3306, %v2903
  %v3372 = vsel %vm3320, %v3307, %v2905
  %v3373 = vsel %vm3320, %v3308, %v2907
  %v3374 = vsel %vm3320, %v3309, %v2909
  %v3375 = vsel %vm3320, %v3310, %v2911
  %v3376 = vsel %vm3320, %v3311, %v2913
  %v3377 = vsel %vm3320, %v3312, %v2915
  %v3378 = vsel %vm3320, %v3313, %v2917
  %v3379 = vsel %vm3320, %v3314, %v2919
  %v3380 = vsel %vm3320, %v3315, %v2921
  %v3381 = vsel %vm3320, %v3316, %v2923
  %v3382 = vsel %vm3320, %v3317, %v2925
  %v3383 = vsel %vm3320, %v3318, %v2927
  %v3384 = vsel %vm3320, %v3319, %v2929
  %vm3385 = vcmask 654336
  %v3386 = vsel %vm3385, %v3321, %v2999
  %v3387 = vsel %vm3385, %v3322, %v3001
  %v3388 = vsel %vm3385, %v3323, %v3003
  %v3389 = vsel %vm3385, %v3324, %v3005
  %v3390 = vsel %vm3385, %v3325, %v3007
  %v3391 = vsel %vm3385, %v3326, %v3009
  %v3392 = vsel %vm3385, %v3327, %v3011
  %v3393 = vsel %vm3385, %v3328, %v3013
  %v3394 = vsel %vm3385, %v3329, %v3015
  %v3395 = vsel %vm3385, %v3330, %v3017
  %v3396 = vsel %vm3385, %v3331, %v3019
  %v3397 = vsel %vm3385, %v3332, %v3021
  %v3398 = vsel %vm3385, %v3333, %v3023
  %v3399 = vsel %vm3385, %v3334, %v3025
  %v3400 = vsel %vm3385, %v3335, %v3027
  %v3401 = vsel %vm3385, %v3336, %v3029
  %v3402 = vsel %vm3385, %v3337, %v3031
  %v3403 = vsel %vm3385, %v3338, %v3033
  %v3404 = vsel %vm3385, %v3339, %v3035
  %v3405 = vsel %vm3385, %v3340, %v3037
  %v3406 = vsel %vm3385, %v3341, %v3039
  %v3407 = vsel %vm3385, %v3342, %v3041
  %v3408 = vsel %vm3385, %v3343, %v3043
  %v3409 = vsel %vm3385, %v3344, %v3045
  %v3410 = vsel %vm3385, %v3345, %v3047
  %v3411 = vsel %vm3385, %v3346, %v3049
  %v3412 = vsel %vm3385, %v3347, %v3051
  %v3413 = vsel %vm3385, %v3348, %v3053
  %v3414 = vsel %vm3385, %v3349, %v3055
  %v3415 = vsel %vm3385, %v3350, %v3057
  %v3416 = vsel %vm3385, %v3351, %v3059
  %v3417 = vsel %vm3385, %v3352, %v3061
  %v3418 = vsel %vm3385, %v3353, %v3063
  %v3419 = vsel %vm3385, %v3354, %v3065
  %v3420 = vsel %vm3385, %v3355, %v3067
  %v3421 = vsel %vm3385, %v3356, %v3069
  %v3422 = vsel %vm3385, %v3357, %v3071
  %v3423 = vsel %vm3385, %v3358, %v3073
  %v3424 = vsel %vm3385, %v3359, %v3075
  %v3425 = vsel %vm3385, %v3360, %v3077
  %v3426 = vsel %vm3385, %v3361, %v3079
  %v3427 = vsel %vm3385, %v3362, %v3081
  %v3428 = vsel %vm3385, %v3363, %v3083
  %v3429 = vsel %vm3385, %v3364, %v3085
  %v3430 = vsel %vm3385, %v3365, %v3087
  %v3431 = vsel %vm3385, %v3366, %v3089
  %v3432 = vsel %vm3385, %v3367, %v3091
  %v3433 = vsel %vm3385, %v3368, %v3093
  %v3434 = vsel %vm3385, %v3369, %v3095
  %v3435 = vsel %vm3385, %v3370, %v3097
  %v3436 = vsel %vm3385, %v3371, %v3099
  %v3437 = vsel %vm3385, %v3372, %v3101
  %v3438 = vsel %vm3385, %v3373, %v3103
  %v3439 = vsel %vm3385, %v3374, %v3105
  %v3440 = vsel %vm3385, %v3375, %v3107
  %v3441 = vsel %vm3385, %v3376, %v3109
  %v3442 = vsel %vm3385, %v3377, %v3111
  %v3443 = vsel %vm3385, %v3378, %v3113
  %v3444 = vsel %vm3385, %v3379, %v3115
  %v3445 = vsel %vm3385, %v3380, %v3117
  %v3446 = vsel %vm3385, %v3381, %v3119
  %v3447 = vsel %vm3385, %v3382, %v3121
  %v3448 = vsel %vm3385, %v3383, %v3123
  %v3449 = vsel %vm3385, %v3384, %v3125
  %vm3450 = vcmask 818176
  %v3451 = vsel %vm3450, %v3386, 0.0
  %v3452 = vsel %vm3450, %v3387, 0.0
  %v3453 = vsel %vm3450, %v3388, 0.0
  %v3454 = vsel %vm3450, %v3389, 0.0
  %v3455 = vsel %vm3450, %v3390, 0.0
  %v3456 = vsel %vm3450, %v3391, 0.0
  %v3457 = vsel %vm3450, %v3392, 0.0
  %v3458 = vsel %vm3450, %v3393, 0.0
  %v3459 = vsel %vm3450, %v3394, 0.0
  %v3460 = vsel %vm3450, %v3395, 0.0
  %v3461 = vsel %vm3450, %v3396, 0.0
  %v3462 = vsel %vm3450, %v3397, 0.0
  %v3463 = vsel %vm3450, %v3398, 0.0
  %v3464 = vsel %vm3450, %v3399, 0.0
  %v3465 = vsel %vm3450, %v3400, 0.0
  %v3466 = vsel %vm3450, %v3401, 0.0
  %v3467 = vsel %vm3450, %v3402, 0.0
  %v3468 = vsel %vm3450, %v3403, 0.0
  %v3469 = vsel %vm3450, %v3404, 0.0
  %v3470 = vsel %vm3450, %v3405, 0.0
  %v3471 = vsel %vm3450, %v3406, 0.0
  %v3472 = vsel %vm3450, %v3407, 0.0
  %v3473 = vsel %vm3450, %v3408, 0.0
  %v3474 = vsel %vm3450, %v3409, 0.0
  %v3475 = vsel %vm3450, %v3410, 0.0
  %v3476 = vsel %vm3450, %v3411, 0.0
  %v3477 = vsel %vm3450, %v3412, 0.0
  %v3478 = vsel %vm3450, %v3413, 0.0
  %v3479 = vsel %vm3450, %v3414, 0.0
  %v3480 = vsel %vm3450, %v3415, 0.0
  %v3481 = vsel %vm3450, %v3416, 0.0
  %v3482 = vsel %vm3450, %v3417, 0.0
  %v3483 = vsel %vm3450, %v3418, 0.0
  %v3484 = vsel %vm3450, %v3419, 0.0
  %v3485 = vsel %vm3450, %v3420, 0.0
  %v3486 = vsel %vm3450, %v3421, 0.0
  %v3487 = vsel %vm3450, %v3422, 0.0
  %v3488 = vsel %vm3450, %v3423, 0.0
  %v3489 = vsel %vm3450, %v3424, 0.0
  %v3490 = vsel %vm3450, %v3425, 0.0
  %v3491 = vsel %vm3450, %v3426, 0.0
  %v3492 = vsel %vm3450, %v3427, 0.0
  %v3493 = vsel %vm3450, %v3428, 0.0
  %v3494 = vsel %vm3450, %v3429, 0.0
  %v3495 = vsel %vm3450, %v3430, 0.0
  %v3496 = vsel %vm3450, %v3431, 0.0
  %v3497 = vsel %vm3450, %v3432, 0.0
  %v3498 = vsel %vm3450, %v3433, 0.0
  %v3499 = vsel %vm3450, %v3434, 0.0
  %v3500 = vsel %vm3450, %v3435, 0.0
  %v3501 = vsel %vm3450, %v3436, 0.0
  %v3502 = vsel %vm3450, %v3437, 0.0
  %v3503 = vsel %vm3450, %v3438, 0.0
  %v3504 = vsel %vm3450, %v3439, 0.0
  %v3505 = vsel %vm3450, %v3440, 0.0
  %v3506 = vsel %vm3450, %v3441, 0.0
  %v3507 = vsel %vm3450, %v3442, 0.0
  %v3508 = vsel %vm3450, %v3443, 0.0
  %v3509 = vsel %vm3450, %v3444, 0.0
  %v3510 = vsel %vm3450, %v3445, 0.0
  %v3511 = vsel %vm3450, %v3446, 0.0
  %v3512 = vsel %vm3450, %v3447, 0.0
  %v3513 = vsel %vm3450, %v3448, 0.0
  %v3514 = vsel %vm3450, %v3449, 0.0
  %v3515 = vpack.c.bf16 %v3452, %v3451
  %v3516 = vpack.c.bf16 %v3454, %v3453
  %v3517 = vpack.c.bf16 %v3456, %v3455
  %v3518 = vpack.c.bf16 %v3458, %v3457
  %v3519 = vpack.c.bf16 %v3460, %v3459
  %v3520 = vpack.c.bf16 %v3462, %v3461
  %v3521 = vpack.c.bf16 %v3464, %v3463
  %v3522 = vpack.c.bf16 %v3466, %v3465
  %v3523 = vpack.c.bf16 %v3468, %v3467
  %v3524 = vpack.c.bf16 %v3470, %v3469
  %v3525 = vpack.c.bf16 %v3472, %v3471
  %v3526 = vpack.c.bf16 %v3474, %v3473
  %v3527 = vpack.c.bf16 %v3476, %v3475
  %v3528 = vpack.c.bf16 %v3478, %v3477
  %v3529 = vpack.c.bf16 %v3480, %v3479
  %v3530 = vpack.c.bf16 %v3482, %v3481
  %v3531 = vpack.c.bf16 %v3484, %v3483
  %v3532 = vpack.c.bf16 %v3486, %v3485
  %v3533 = vpack.c.bf16 %v3488, %v3487
  %v3534 = vpack.c.bf16 %v3490, %v3489
  %v3535 = vpack.c.bf16 %v3492, %v3491
  %v3536 = vpack.c.bf16 %v3494, %v3493
  %v3537 = vpack.c.bf16 %v3496, %v3495
  %v3538 = vpack.c.bf16 %v3498, %v3497
  %v3539 = vpack.c.bf16 %v3500, %v3499
  %v3540 = vpack.c.bf16 %v3502, %v3501
  %v3541 = vpack.c.bf16 %v3504, %v3503
  %v3542 = vpack.c.bf16 %v3506, %v3505
  %v3543 = vpack.c.bf16 %v3508, %v3507
  %v3544 = vpack.c.bf16 %v3510, %v3509
  %v3545 = vpack.c.bf16 %v3512, %v3511
  %v3546 = vpack.c.bf16 %v3514, %v3513
  %v3547 = vld [vmem:[%s1] sm:$0xf]
  %v3548 = vld [vmem:[%s1 + $0x4] sm:$0xf]
  %v3549 = vld [vmem:[%s1 + $0x8] sm:$0xf]
  %v3550 = vld [vmem:[%s1 + $0xc] sm:$0xf]
  %v3551 = vld [vmem:[%s1 + $0x10] sm:$0xf]
  %v3552 = vld [vmem:[%s1 + $0x14] sm:$0xf]
  %v3553 = vld [vmem:[%s1 + $0x18] sm:$0xf]
  %v3554 = vld [vmem:[%s1 + $0x1c] sm:$0xf]
  %v3555 = vld [vmem:[%s1 + $0x20] sm:$0xf]
  %v3556 = vld [vmem:[%s1 + $0x24] sm:$0xf]
  %v3557 = vld [vmem:[%s1 + $0x28] sm:$0xf]
  %v3558 = vld [vmem:[%s1 + $0x2c] sm:$0xf]
  %v3559 = vld [vmem:[%s1 + $0x30] sm:$0xf]
  %v3560 = vld [vmem:[%s1 + $0x34] sm:$0xf]
  %v3561 = vld [vmem:[%s1 + $0x38] sm:$0xf]
  %v3562 = vld [vmem:[%s1 + $0x3c] sm:$0xf]
  %v3579 = vunpack.c.l.b16 %v3547
  %v3580 = vunpack.c.l.b16 %v3548
  %v3581 = vunpack.c.l.b16 %v3549
  %v3582 = vunpack.c.l.b16 %v3550
  %v3583 = vunpack.c.l.b16 %v3551
  %v3584 = vunpack.c.l.b16 %v3552
  %v3585 = vunpack.c.l.b16 %v3553
  %v3586 = vunpack.c.l.b16 %v3554
  %v3587 = vunpack.c.l.b16 %v3555
  %v3588 = vunpack.c.l.b16 %v3556
  %v3589 = vunpack.c.l.b16 %v3557
  %v3590 = vunpack.c.l.b16 %v3558
  %v3591 = vunpack.c.l.b16 %v3559
  %v3592 = vunpack.c.l.b16 %v3560
  %v3593 = vunpack.c.l.b16 %v3561
  %v3594 = vunpack.c.l.b16 %v3562
  %v3595 = vpack.c.b16 %v3580, %v3579
  %v3596 = vpack.c.b16 %v3582, %v3581
  %v3597 = vpack.c.b16 %v3584, %v3583
  %v3598 = vpack.c.b16 %v3586, %v3585
  %v3599 = vpack.c.b16 %v3588, %v3587
  %v3600 = vpack.c.b16 %v3590, %v3589
  %v3601 = vpack.c.b16 %v3592, %v3591
  %v3602 = vpack.c.b16 %v3594, %v3593
  %3611 = vmatprep.subr.bf16.mxu0 0
  %3612 = vmatpush1.bf16.msra.mxu0 %v3602
  %3613 = vmatprep.subr.bf16.mxu0 0
  %3614 = vmatpush1.bf16.msra.mxu0 %v3601
  %3615 = vmatprep.subr.bf16.mxu0 0
  %3616 = vmatpush1.bf16.msra.mxu0 %v3600
  %3617 = vmatprep.subr.bf16.mxu0 0
  %3618 = vmatpush1.bf16.msra.mxu0 %v3599
  %3619 = vmatprep.subr.bf16.mxu0 0
  %3620 = vmatpush1.bf16.msra.mxu0 %v3598
  %3621 = vmatprep.subr.bf16.mxu0 0
  %3622 = vmatpush1.bf16.msra.mxu0 %v3597
  %3623 = vmatprep.subr.bf16.mxu0 0
  %3624 = vmatpush1.bf16.msra.mxu0 %v3596
  %3625 = vmatprep.subr.bf16.mxu0 0
  %3626 = vmatpush1.bf16.msra.mxu0 %v3595
  %3627 = vmatprep.subr.bf16.mxu0 0
  %3628 = vmatpush2.bf16.msra.mxu0 0
  %3629 = vmatprep.subr.bf16.mxu0 0
  %3630 = vmatpush2.bf16.msra.mxu0 0
  %3631 = vmatprep.subr.bf16.mxu0 0
  %3632 = vmatpush2.bf16.msra.mxu0 0
  %3633 = vmatprep.subr.bf16.mxu0 0
  %3634 = vmatpush2.bf16.msra.mxu0 0
  %3635 = vmatprep.subr.bf16.mxu0 0
  %3636 = vmatpush2.bf16.msra.mxu0 0
  %3637 = vmatprep.subr.bf16.mxu0 0
  %3638 = vmatpush2.bf16.msra.mxu0 0
  %3639 = vmatprep.subr.bf16.mxu0 0
  %3640 = vmatpush2.bf16.msra.mxu0 0
  %3641 = vmatprep.subr.bf16.mxu0 0
  %3642 = vmatpush2.bf16.msra.mxu0 0
  %3643 = vmatprep.mubr.bf16.mxu0 0
  %3644 = vmatmul.mubr.bf16.gmra.mxu0 %v3515
  %v3645 = vpop.f32.mrf.mxu0
  %v3646 = vadd.f32 0.0, %v3645
  %v3647 = vpop.f32.mrf.mxu0
  %v3648 = vpop.f32.mrf.mxu0
  %v3649 = vadd.f32 0.0, %v3648
  %v3650 = vpop.f32.mrf.mxu0
  %3651 = vmatprep.mubr.bf16.mxu0 0
  %3652 = vmatmul.mubr.bf16.gmra.mxu0 %v3516
  %v3653 = vpop.f32.mrf.mxu0
  %v3654 = vadd.f32 0.0, %v3653
  %v3655 = vpop.f32.mrf.mxu0
  %v3656 = vpop.f32.mrf.mxu0
  %v3657 = vadd.f32 0.0, %v3656
  %v3658 = vpop.f32.mrf.mxu0
  %3659 = vmatprep.mubr.bf16.mxu0 0
  %3660 = vmatmul.mubr.bf16.gmra.mxu0 %v3517
  %v3661 = vpop.f32.mrf.mxu0
  %v3662 = vadd.f32 0.0, %v3661
  %v3663 = vpop.f32.mrf.mxu0
  %v3664 = vpop.f32.mrf.mxu0
  %v3665 = vadd.f32 0.0, %v3664
  %v3666 = vpop.f32.mrf.mxu0
  %3667 = vmatprep.mubr.bf16.mxu0 0
  %3668 = vmatmul.mubr.bf16.gmra.mxu0 %v3518
  %v3669 = vpop.f32.mrf.mxu0
  %v3670 = vadd.f32 0.0, %v3669
  %v3671 = vpop.f32.mrf.mxu0
  %v3672 = vpop.f32.mrf.mxu0
  %v3673 = vadd.f32 0.0, %v3672
  %v3674 = vpop.f32.mrf.mxu0
  %3675 = vmatprep.mubr.bf16.mxu0 0
  %3676 = vmatmul.mubr.bf16.gmra.mxu0 %v3519
  %v3677 = vpop.f32.mrf.mxu0
  %v3678 = vadd.f32 0.0, %v3677
  %v3679 = vpop.f32.mrf.mxu0
  %v3680 = vpop.f32.mrf.mxu0
  %v3681 = vadd.f32 0.0, %v3680
  %v3682 = vpop.f32.mrf.mxu0
  %3683 = vmatprep.mubr.bf16.mxu0 0
  %3684 = vmatmul.mubr.bf16.gmra.mxu0 %v3520
  %v3685 = vpop.f32.mrf.mxu0
  %v3686 = vadd.f32 0.0, %v3685
  %v3687 = vpop.f32.mrf.mxu0
  %v3688 = vpop.f32.mrf.mxu0
  %v3689 = vadd.f32 0.0, %v3688
  %v3690 = vpop.f32.mrf.mxu0
  %3691 = vmatprep.mubr.bf16.mxu0 0
  %3692 = vmatmul.mubr.bf16.gmra.mxu0 %v3521
  %v3693 = vpop.f32.mrf.mxu0
  %v3694 = vadd.f32 0.0, %v3693
  %v3695 = vpop.f32.mrf.mxu0
  %v3696 = vpop.f32.mrf.mxu0
  %v3697 = vadd.f32 0.0, %v3696
  %v3698 = vpop.f32.mrf.mxu0
  %3699 = vmatprep.mubr.bf16.mxu0 0
  %3700 = vmatmul.mubr.bf16.gmra.mxu0 %v3522
  %v3701 = vpop.f32.mrf.mxu0
  %v3702 = vadd.f32 0.0, %v3701
  %v3703 = vpop.f32.mrf.mxu0
  %v3704 = vpop.f32.mrf.mxu0
  %v3705 = vadd.f32 0.0, %v3704
  %v3706 = vpop.f32.mrf.mxu0
  %3707 = vmatprep.mubr.bf16.mxu0 0
  %3708 = vmatmul.mubr.bf16.gmra.mxu0 %v3523
  %v3709 = vpop.f32.mrf.mxu0
  %v3710 = vadd.f32 0.0, %v3709
  %v3711 = vpop.f32.mrf.mxu0
  %v3712 = vpop.f32.mrf.mxu0
  %v3713 = vadd.f32 0.0, %v3712
  %v3714 = vpop.f32.mrf.mxu0
  %3715 = vmatprep.mubr.bf16.mxu0 0
  %3716 = vmatmul.mubr.bf16.gmra.mxu0 %v3524
  %v3717 = vpop.f32.mrf.mxu0
  %v3718 = vadd.f32 0.0, %v3717
  %v3719 = vpop.f32.mrf.mxu0
  %v3720 = vpop.f32.mrf.mxu0
  %v3721 = vadd.f32 0.0, %v3720
  %v3722 = vpop.f32.mrf.mxu0
  %3723 = vmatprep.mubr.bf16.mxu0 0
  %3724 = vmatmul.mubr.bf16.gmra.mxu0 %v3525
  %v3725 = vpop.f32.mrf.mxu0
  %v3726 = vadd.f32 0.0, %v3725
  %v3727 = vpop.f32.mrf.mxu0
  %v3728 = vpop.f32.mrf.mxu0
  %v3729 = vadd.f32 0.0, %v3728
  %v3730 = vpop.f32.mrf.mxu0
  %3731 = vmatprep.mubr.bf16.mxu0 0
  %3732 = vmatmul.mubr.bf16.gmra.mxu0 %v3526
  %v3733 = vpop.f32.mrf.mxu0
  %v3734 = vadd.f32 0.0, %v3733
  %v3735 = vpop.f32.mrf.mxu0
  %v3736 = vpop.f32.mrf.mxu0
  %v3737 = vadd.f32 0.0, %v3736
  %v3738 = vpop.f32.mrf.mxu0
  %3739 = vmatprep.mubr.bf16.mxu0 0
  %3740 = vmatmul.mubr.bf16.gmra.mxu0 %v3527
  %v3741 = vpop.f32.mrf.mxu0
  %v3742 = vadd.f32 0.0, %v3741
  %v3743 = vpop.f32.mrf.mxu0
  %v3744 = vpop.f32.mrf.mxu0
  %v3745 = vadd.f32 0.0, %v3744
  %v3746 = vpop.f32.mrf.mxu0
  %3747 = vmatprep.mubr.bf16.mxu0 0
  %3748 = vmatmul.mubr.bf16.gmra.mxu0 %v3528
  %v3749 = vpop.f32.mrf.mxu0
  %v3750 = vadd.f32 0.0, %v3749
  %v3751 = vpop.f32.mrf.mxu0
  %v3752 = vpop.f32.mrf.mxu0
  %v3753 = vadd.f32 0.0, %v3752
  %v3754 = vpop.f32.mrf.mxu0
  %3755 = vmatprep.mubr.bf16.mxu0 0
  %3756 = vmatmul.mubr.bf16.gmra.mxu0 %v3529
  %v3757 = vpop.f32.mrf.mxu0
  %v3758 = vadd.f32 0.0, %v3757
  %v3759 = vpop.f32.mrf.mxu0
  %v3760 = vpop.f32.mrf.mxu0
  %v3761 = vadd.f32 0.0, %v3760
  %v3762 = vpop.f32.mrf.mxu0
  %3763 = vmatprep.mubr.bf16.mxu0 0
  %3764 = vmatmul.mubr.bf16.gmra.mxu0 %v3530
  %v3765 = vpop.f32.mrf.mxu0
  %v3766 = vadd.f32 0.0, %v3765
  %v3767 = vpop.f32.mrf.mxu0
  %v3768 = vpop.f32.mrf.mxu0
  %v3769 = vadd.f32 0.0, %v3768
  %v3770 = vpop.f32.mrf.mxu0
  %3771 = vmatprep.mubr.bf16.mxu0 0
  %3772 = vmatmul.mubr.bf16.gmra.mxu0 %v3531
  %v3773 = vpop.f32.mrf.mxu0
  %v3774 = vadd.f32 0.0, %v3773
  %v3775 = vpop.f32.mrf.mxu0
  %v3776 = vpop.f32.mrf.mxu0
  %v3777 = vadd.f32 0.0, %v3776
  %v3778 = vpop.f32.mrf.mxu0
  %3779 = vmatprep.mubr.bf16.mxu0 0
  %3780 = vmatmul.mubr.bf16.gmra.mxu0 %v3532
  %v3781 = vpop.f32.mrf.mxu0
  %v3782 = vadd.f32 0.0, %v3781
  %v3783 = vpop.f32.mrf.mxu0
  %v3784 = vpop.f32.mrf.mxu0
  %v3785 = vadd.f32 0.0, %v3784
  %v3786 = vpop.f32.mrf.mxu0
  %3787 = vmatprep.mubr.bf16.mxu0 0
  %3788 = vmatmul.mubr.bf16.gmra.mxu0 %v3533
  %v3789 = vpop.f32.mrf.mxu0
  %v3790 = vadd.f32 0.0, %v3789
  %v3791 = vpop.f32.mrf.mxu0
  %v3792 = vpop.f32.mrf.mxu0
  %v3793 = vadd.f32 0.0, %v3792
  %v3794 = vpop.f32.mrf.mxu0
  %3795 = vmatprep.mubr.bf16.mxu0 0
  %3796 = vmatmul.mubr.bf16.gmra.mxu0 %v3534
  %v3797 = vpop.f32.mrf.mxu0
  %v3798 = vadd.f32 0.0, %v3797
  %v3799 = vpop.f32.mrf.mxu0
  %v3800 = vpop.f32.mrf.mxu0
  %v3801 = vadd.f32 0.0, %v3800
  %v3802 = vpop.f32.mrf.mxu0
  %3803 = vmatprep.mubr.bf16.mxu0 0
  %3804 = vmatmul.mubr.bf16.gmra.mxu0 %v3535
  %v3805 = vpop.f32.mrf.mxu0
  %v3806 = vadd.f32 0.0, %v3805
  %v3807 = vpop.f32.mrf.mxu0
  %v3808 = vpop.f32.mrf.mxu0
  %v3809 = vadd.f32 0.0, %v3808
  %v3810 = vpop.f32.mrf.mxu0
  %3811 = vmatprep.mubr.bf16.mxu0 0
  %3812 = vmatmul.mubr.bf16.gmra.mxu0 %v3536
  %v3813 = vpop.f32.mrf.mxu0
  %v3814 = vadd.f32 0.0, %v3813
  %v3815 = vpop.f32.mrf.mxu0
  %v3816 = vpop.f32.mrf.mxu0
  %v3817 = vadd.f32 0.0, %v3816
  %v3818 = vpop.f32.mrf.mxu0
  %3819 = vmatprep.mubr.bf16.mxu0 0
  %3820 = vmatmul.mubr.bf16.gmra.mxu0 %v3537
  %v3821 = vpop.f32.mrf.mxu0
  %v3822 = vadd.f32 0.0, %v3821
  %v3823 = vpop.f32.mrf.mxu0
  %v3824 = vpop.f32.mrf.mxu0
  %v3825 = vadd.f32 0.0, %v3824
  %v3826 = vpop.f32.mrf.mxu0
  %3827 = vmatprep.mubr.bf16.mxu0 0
  %3828 = vmatmul.mubr.bf16.gmra.mxu0 %v3538
  %v3829 = vpop.f32.mrf.mxu0
  %v3830 = vadd.f32 0.0, %v3829
  %v3831 = vpop.f32.mrf.mxu0
  %v3832 = vpop.f32.mrf.mxu0
  %v3833 = vadd.f32 0.0, %v3832
  %v3834 = vpop.f32.mrf.mxu0
  %3835 = vmatprep.mubr.bf16.mxu0 0
  %3836 = vmatmul.mubr.bf16.gmra.mxu0 %v3539
  %v3837 = vpop.f32.mrf.mxu0
  %v3838 = vadd.f32 0.0, %v3837
  %v3839 = vpop.f32.mrf.mxu0
  %v3840 = vpop.f32.mrf.mxu0
  %v3841 = vadd.f32 0.0, %v3840
  %v3842 = vpop.f32.mrf.mxu0
  %3843 = vmatprep.mubr.bf16.mxu0 0
  %3844 = vmatmul.mubr.bf16.gmra.mxu0 %v3540
  %v3845 = vpop.f32.mrf.mxu0
  %v3846 = vadd.f32 0.0, %v3845
  %v3847 = vpop.f32.mrf.mxu0
  %v3848 = vpop.f32.mrf.mxu0
  %v3849 = vadd.f32 0.0, %v3848
  %v3850 = vpop.f32.mrf.mxu0
  %3851 = vmatprep.mubr.bf16.mxu0 0
  %3852 = vmatmul.mubr.bf16.gmra.mxu0 %v3541
  %v3853 = vpop.f32.mrf.mxu0
  %v3854 = vadd.f32 0.0, %v3853
  %v3855 = vpop.f32.mrf.mxu0
  %v3856 = vpop.f32.mrf.mxu0
  %v3857 = vadd.f32 0.0, %v3856
  %v3858 = vpop.f32.mrf.mxu0
  %3859 = vmatprep.mubr.bf16.mxu0 0
  %3860 = vmatmul.mubr.bf16.gmra.mxu0 %v3542
  %v3861 = vpop.f32.mrf.mxu0
  %v3862 = vadd.f32 0.0, %v3861
  %v3863 = vpop.f32.mrf.mxu0
  %v3864 = vpop.f32.mrf.mxu0
  %v3865 = vadd.f32 0.0, %v3864
  %v3866 = vpop.f32.mrf.mxu0
  %3867 = vmatprep.mubr.bf16.mxu0 0
  %3868 = vmatmul.mubr.bf16.gmra.mxu0 %v3543
  %v3869 = vpop.f32.mrf.mxu0
  %v3870 = vadd.f32 0.0, %v3869
  %v3871 = vpop.f32.mrf.mxu0
  %v3872 = vpop.f32.mrf.mxu0
  %v3873 = vadd.f32 0.0, %v3872
  %v3874 = vpop.f32.mrf.mxu0
  %3875 = vmatprep.mubr.bf16.mxu0 0
  %3876 = vmatmul.mubr.bf16.gmra.mxu0 %v3544
  %v3877 = vpop.f32.mrf.mxu0
  %v3878 = vadd.f32 0.0, %v3877
  %v3879 = vpop.f32.mrf.mxu0
  %v3880 = vpop.f32.mrf.mxu0
  %v3881 = vadd.f32 0.0, %v3880
  %v3882 = vpop.f32.mrf.mxu0
  %3883 = vmatprep.mubr.bf16.mxu0 0
  %3884 = vmatmul.mubr.bf16.gmra.mxu0 %v3545
  %v3885 = vpop.f32.mrf.mxu0
  %v3886 = vadd.f32 0.0, %v3885
  %v3887 = vpop.f32.mrf.mxu0
  %v3888 = vpop.f32.mrf.mxu0
  %v3889 = vadd.f32 0.0, %v3888
  %v3890 = vpop.f32.mrf.mxu0
  %3891 = vmatprep.mubr.bf16.mxu0 0
  %3892 = vmatmul.mubr.bf16.gmra.mxu0 %v3546
  %v3893 = vpop.f32.mrf.mxu0
  %v3894 = vadd.f32 0.0, %v3893
  %v3895 = vpop.f32.mrf.mxu0
  %v3896 = vpop.f32.mrf.mxu0
  %v3897 = vadd.f32 0.0, %v3896
  %v3898 = vpop.f32.mrf.mxu0
  %3899 = vdwg.mxu0
  %v3900 = vadd.f32 %v3646, %v3649
  %v3901 = vadd.f32 %v3900, %v3654
  %v3902 = vadd.f32 %v3901, %v3657
  %v3903 = vadd.f32 %v3902, %v3662
  %v3904 = vadd.f32 %v3903, %v3665
  %v3905 = vadd.f32 %v3904, %v3670
  %v3906 = vadd.f32 %v3905, %v3673
  %v3907 = vadd.f32 %v3906, %v3678
  %v3908 = vadd.f32 %v3907, %v3681
  %v3909 = vadd.f32 %v3908, %v3686
  %v3910 = vadd.f32 %v3909, %v3689
  %v3911 = vadd.f32 %v3910, %v3694
  %v3912 = vadd.f32 %v3911, %v3697
  %v3913 = vadd.f32 %v3912, %v3702
  %v3914 = vadd.f32 %v3913, %v3705
  %v3915 = vadd.f32 %v3914, %v3710
  %v3916 = vadd.f32 %v3915, %v3713
  %v3917 = vadd.f32 %v3916, %v3718
  %v3918 = vadd.f32 %v3917, %v3721
  %v3919 = vadd.f32 %v3918, %v3726
  %v3920 = vadd.f32 %v3919, %v3729
  %v3921 = vadd.f32 %v3920, %v3734
  %v3922 = vadd.f32 %v3921, %v3737
  %v3923 = vadd.f32 %v3922, %v3742
  %v3924 = vadd.f32 %v3923, %v3745
  %v3925 = vadd.f32 %v3924, %v3750
  %v3926 = vadd.f32 %v3925, %v3753
  %v3927 = vadd.f32 %v3926, %v3758
  %v3928 = vadd.f32 %v3927, %v3761
  %v3929 = vadd.f32 %v3928, %v3766
  %v3930 = vadd.f32 %v3929, %v3769
  %v3931 = vadd.f32 %v3930, %v3774
  %v3932 = vadd.f32 %v3931, %v3777
  %v3933 = vadd.f32 %v3932, %v3782
  %v3934 = vadd.f32 %v3933, %v3785
  %v3935 = vadd.f32 %v3934, %v3790
  %v3936 = vadd.f32 %v3935, %v3793
  %v3937 = vadd.f32 %v3936, %v3798
  %v3938 = vadd.f32 %v3937, %v3801
  %v3939 = vadd.f32 %v3938, %v3806
  %v3940 = vadd.f32 %v3939, %v3809
  %v3941 = vadd.f32 %v3940, %v3814
  %v3942 = vadd.f32 %v3941, %v3817
  %v3943 = vadd.f32 %v3942, %v3822
  %v3944 = vadd.f32 %v3943, %v3825
  %v3945 = vadd.f32 %v3944, %v3830
  %v3946 = vadd.f32 %v3945, %v3833
  %v3947 = vadd.f32 %v3946, %v3838
  %v3948 = vadd.f32 %v3947, %v3841
  %v3949 = vadd.f32 %v3948, %v3846
  %v3950 = vadd.f32 %v3949, %v3849
  %v3951 = vadd.f32 %v3950, %v3854
  %v3952 = vadd.f32 %v3951, %v3857
  %v3953 = vadd.f32 %v3952, %v3862
  %v3954 = vadd.f32 %v3953, %v3865
  %v3955 = vadd.f32 %v3954, %v3870
  %v3956 = vadd.f32 %v3955, %v3873
  %v3957 = vadd.f32 %v3956, %v3878
  %v3958 = vadd.f32 %v3957, %v3881
  %v3959 = vadd.f32 %v3958, %v3886
  %v3960 = vadd.f32 %v3959, %v3889
  %v3961 = vadd.f32 %v3960, %v3894
  %v3962 = vadd.f32 %v3961, %v3897
  %v3963 = vrot.slane %v3962, 4
  %v3964 = vadd.f32 %v3962, %v3963
  %v3965 = vrot.slane %v3964, 2
  %v3966 = vadd.f32 %v3964, %v3965
  %v3967 = vrot.slane %v3966, 1
  %v3968 = vadd.f32 %v3966, %v3967
  %v3969 = vrcp.pop 512.0
  %v3970 = vmul.f32 %v3968, %v3969
  %v3971 = vmul.f32 %v3646, %v3646
  %v3972 = vmul.f32 %v3649, %v3649
  %v3973 = vmul.f32 %v3654, %v3654
  %v3974 = vmul.f32 %v3657, %v3657
  %v3975 = vmul.f32 %v3662, %v3662
  %v3976 = vmul.f32 %v3665, %v3665
  %v3977 = vmul.f32 %v3670, %v3670
  %v3978 = vmul.f32 %v3673, %v3673
  %v3979 = vmul.f32 %v3678, %v3678
  %v3980 = vmul.f32 %v3681, %v3681
  %v3981 = vmul.f32 %v3686, %v3686
  %v3982 = vmul.f32 %v3689, %v3689
  %v3983 = vmul.f32 %v3694, %v3694
  %v3984 = vmul.f32 %v3697, %v3697
  %v3985 = vmul.f32 %v3702, %v3702
  %v3986 = vmul.f32 %v3705, %v3705
  %v3987 = vmul.f32 %v3710, %v3710
  %v3988 = vmul.f32 %v3713, %v3713
  %v3989 = vmul.f32 %v3718, %v3718
  %v3990 = vmul.f32 %v3721, %v3721
  %v3991 = vmul.f32 %v3726, %v3726
  %v3992 = vmul.f32 %v3729, %v3729
  %v3993 = vmul.f32 %v3734, %v3734
  %v3994 = vmul.f32 %v3737, %v3737
  %v3995 = vmul.f32 %v3742, %v3742
  %v3996 = vmul.f32 %v3745, %v3745
  %v3997 = vmul.f32 %v3750, %v3750
  %v3998 = vmul.f32 %v3753, %v3753
  %v3999 = vmul.f32 %v3758, %v3758
  %v4000 = vmul.f32 %v3761, %v3761
  %v4001 = vmul.f32 %v3766, %v3766
  %v4002 = vmul.f32 %v3769, %v3769
  %v4003 = vmul.f32 %v3774, %v3774
  %v4004 = vmul.f32 %v3777, %v3777
  %v4005 = vmul.f32 %v3782, %v3782
  %v4006 = vmul.f32 %v3785, %v3785
  %v4007 = vmul.f32 %v3790, %v3790
  %v4008 = vmul.f32 %v3793, %v3793
  %v4009 = vmul.f32 %v3798, %v3798
  %v4010 = vmul.f32 %v3801, %v3801
  %v4011 = vmul.f32 %v3806, %v3806
  %v4012 = vmul.f32 %v3809, %v3809
  %v4013 = vmul.f32 %v3814, %v3814
  %v4014 = vmul.f32 %v3817, %v3817
  %v4015 = vmul.f32 %v3822, %v3822
  %v4016 = vmul.f32 %v3825, %v3825
  %v4017 = vmul.f32 %v3830, %v3830
  %v4018 = vmul.f32 %v3833, %v3833
  %v4019 = vmul.f32 %v3838, %v3838
  %v4020 = vmul.f32 %v3841, %v3841
  %v4021 = vmul.f32 %v3846, %v3846
  %v4022 = vmul.f32 %v3849, %v3849
  %v4023 = vmul.f32 %v3854, %v3854
  %v4024 = vmul.f32 %v3857, %v3857
  %v4025 = vmul.f32 %v3862, %v3862
  %v4026 = vmul.f32 %v3865, %v3865
  %v4027 = vmul.f32 %v3870, %v3870
  %v4028 = vmul.f32 %v3873, %v3873
  %v4029 = vmul.f32 %v3878, %v3878
  %v4030 = vmul.f32 %v3881, %v3881
  %v4031 = vmul.f32 %v3886, %v3886
  %v4032 = vmul.f32 %v3889, %v3889
  %v4033 = vmul.f32 %v3894, %v3894
  %v4034 = vmul.f32 %v3897, %v3897
  %v4035 = vadd.f32 %v3971, %v3972
  %v4036 = vadd.f32 %v4035, %v3973
  %v4037 = vadd.f32 %v4036, %v3974
  %v4038 = vadd.f32 %v4037, %v3975
  %v4039 = vadd.f32 %v4038, %v3976
  %v4040 = vadd.f32 %v4039, %v3977
  %v4041 = vadd.f32 %v4040, %v3978
  %v4042 = vadd.f32 %v4041, %v3979
  %v4043 = vadd.f32 %v4042, %v3980
  %v4044 = vadd.f32 %v4043, %v3981
  %v4045 = vadd.f32 %v4044, %v3982
  %v4046 = vadd.f32 %v4045, %v3983
  %v4047 = vadd.f32 %v4046, %v3984
  %v4048 = vadd.f32 %v4047, %v3985
  %v4049 = vadd.f32 %v4048, %v3986
  %v4050 = vadd.f32 %v4049, %v3987
  %v4051 = vadd.f32 %v4050, %v3988
  %v4052 = vadd.f32 %v4051, %v3989
  %v4053 = vadd.f32 %v4052, %v3990
  %v4054 = vadd.f32 %v4053, %v3991
  %v4055 = vadd.f32 %v4054, %v3992
  %v4056 = vadd.f32 %v4055, %v3993
  %v4057 = vadd.f32 %v4056, %v3994
  %v4058 = vadd.f32 %v4057, %v3995
  %v4059 = vadd.f32 %v4058, %v3996
  %v4060 = vadd.f32 %v4059, %v3997
  %v4061 = vadd.f32 %v4060, %v3998
  %v4062 = vadd.f32 %v4061, %v3999
  %v4063 = vadd.f32 %v4062, %v4000
  %v4064 = vadd.f32 %v4063, %v4001
  %v4065 = vadd.f32 %v4064, %v4002
  %v4066 = vadd.f32 %v4065, %v4003
  %v4067 = vadd.f32 %v4066, %v4004
  %v4068 = vadd.f32 %v4067, %v4005
  %v4069 = vadd.f32 %v4068, %v4006
  %v4070 = vadd.f32 %v4069, %v4007
  %v4071 = vadd.f32 %v4070, %v4008
  %v4072 = vadd.f32 %v4071, %v4009
  %v4073 = vadd.f32 %v4072, %v4010
  %v4074 = vadd.f32 %v4073, %v4011
  %v4075 = vadd.f32 %v4074, %v4012
  %v4076 = vadd.f32 %v4075, %v4013
  %v4077 = vadd.f32 %v4076, %v4014
  %v4078 = vadd.f32 %v4077, %v4015
  %v4079 = vadd.f32 %v4078, %v4016
  %v4080 = vadd.f32 %v4079, %v4017
  %v4081 = vadd.f32 %v4080, %v4018
  %v4082 = vadd.f32 %v4081, %v4019
  %v4083 = vadd.f32 %v4082, %v4020
  %v4084 = vadd.f32 %v4083, %v4021
  %v4085 = vadd.f32 %v4084, %v4022
  %v4086 = vadd.f32 %v4085, %v4023
  %v4087 = vadd.f32 %v4086, %v4024
  %v4088 = vadd.f32 %v4087, %v4025
  %v4089 = vadd.f32 %v4088, %v4026
  %v4090 = vadd.f32 %v4089, %v4027
  %v4091 = vadd.f32 %v4090, %v4028
  %v4092 = vadd.f32 %v4091, %v4029
  %v4093 = vadd.f32 %v4092, %v4030
  %v4094 = vadd.f32 %v4093, %v4031
  %v4095 = vadd.f32 %v4094, %v4032
  %v4096 = vadd.f32 %v4095, %v4033
  %v4097 = vadd.f32 %v4096, %v4034
  %v4098 = vrot.slane %v4097, 4
  %v4099 = vadd.f32 %v4097, %v4098
  %v4100 = vrot.slane %v4099, 2
  %v4101 = vadd.f32 %v4099, %v4100
  %v4102 = vrot.slane %v4101, 1
  %v4103 = vadd.f32 %v4101, %v4102
  %v4104 = vmul.f32 %v4103, %v3969
  %v4105 = vmul.f32 %v3970, %v3970
  %v4106 = vsub.f32 %v4104, %v4105
  %v4107 = vmax.f32 %v4106, 0.0
  %v4108 = vld [vmem:[%s2] sm:$0x1]
  %v4109 = vadd.f32 %v4107, 1e-05
  %v4110 = vrsqrt.pop %v4109
  %v4111 = vmul.f32 %v4108, %v4110
  %v4112 = vld [vmem:[%s3] sm:$0x1]
  %v4113 = vmul.f32 %v3970, %v4111
  %v4114 = vsub.f32 %v4112, %v4113
  %v4116 = vlaneseq
  %v4117 = vshrl.u32 %v4116, 7
  %v4118 = vsub.s32 0, %v4117
  %v4119 = vrot.slane %v4111, %v4118
  %v4121 = vmul.f32 %v3646, %v4119
  %v4122 = vmul.f32 %v3649, %v4119
  %v4123 = vmul.f32 %v3654, %v4119
  %v4124 = vmul.f32 %v3657, %v4119
  %v4125 = vmul.f32 %v3662, %v4119
  %v4126 = vmul.f32 %v3665, %v4119
  %v4127 = vmul.f32 %v3670, %v4119
  %v4128 = vmul.f32 %v3673, %v4119
  %v4129 = vmul.f32 %v3678, %v4119
  %v4130 = vmul.f32 %v3681, %v4119
  %v4131 = vmul.f32 %v3686, %v4119
  %v4132 = vmul.f32 %v3689, %v4119
  %v4133 = vmul.f32 %v3694, %v4119
  %v4134 = vmul.f32 %v3697, %v4119
  %v4135 = vmul.f32 %v3702, %v4119
  %v4136 = vmul.f32 %v3705, %v4119
  %v4137 = vmul.f32 %v3710, %v4119
  %v4138 = vmul.f32 %v3713, %v4119
  %v4139 = vmul.f32 %v3718, %v4119
  %v4140 = vmul.f32 %v3721, %v4119
  %v4141 = vmul.f32 %v3726, %v4119
  %v4142 = vmul.f32 %v3729, %v4119
  %v4143 = vmul.f32 %v3734, %v4119
  %v4144 = vmul.f32 %v3737, %v4119
  %v4145 = vmul.f32 %v3742, %v4119
  %v4146 = vmul.f32 %v3745, %v4119
  %v4147 = vmul.f32 %v3750, %v4119
  %v4148 = vmul.f32 %v3753, %v4119
  %v4149 = vmul.f32 %v3758, %v4119
  %v4150 = vmul.f32 %v3761, %v4119
  %v4151 = vmul.f32 %v3766, %v4119
  %v4152 = vmul.f32 %v3769, %v4119
  %v4153 = vmul.f32 %v3774, %v4119
  %v4154 = vmul.f32 %v3777, %v4119
  %v4155 = vmul.f32 %v3782, %v4119
  %v4156 = vmul.f32 %v3785, %v4119
  %v4157 = vmul.f32 %v3790, %v4119
  %v4158 = vmul.f32 %v3793, %v4119
  %v4159 = vmul.f32 %v3798, %v4119
  %v4160 = vmul.f32 %v3801, %v4119
  %v4161 = vmul.f32 %v3806, %v4119
  %v4162 = vmul.f32 %v3809, %v4119
  %v4163 = vmul.f32 %v3814, %v4119
  %v4164 = vmul.f32 %v3817, %v4119
  %v4165 = vmul.f32 %v3822, %v4119
  %v4166 = vmul.f32 %v3825, %v4119
  %v4167 = vmul.f32 %v3830, %v4119
  %v4168 = vmul.f32 %v3833, %v4119
  %v4169 = vmul.f32 %v3838, %v4119
  %v4170 = vmul.f32 %v3841, %v4119
  %v4171 = vmul.f32 %v3846, %v4119
  %v4172 = vmul.f32 %v3849, %v4119
  %v4173 = vmul.f32 %v3854, %v4119
  %v4174 = vmul.f32 %v3857, %v4119
  %v4175 = vmul.f32 %v3862, %v4119
  %v4176 = vmul.f32 %v3865, %v4119
  %v4177 = vmul.f32 %v3870, %v4119
  %v4178 = vmul.f32 %v3873, %v4119
  %v4179 = vmul.f32 %v3878, %v4119
  %v4180 = vmul.f32 %v3881, %v4119
  %v4181 = vmul.f32 %v3886, %v4119
  %v4182 = vmul.f32 %v3889, %v4119
  %v4183 = vmul.f32 %v3894, %v4119
  %v4184 = vmul.f32 %v3897, %v4119
  %v4186 = vlaneseq
  %v4187 = vshrl.u32 %v4186, 7
  %v4188 = vsub.s32 0, %v4187
  %v4189 = vrot.slane %v4114, %v4188
  %v4191 = vadd.f32 %v4121, %v4189
  %v4192 = vadd.f32 %v4122, %v4189
  %v4193 = vadd.f32 %v4123, %v4189
  %v4194 = vadd.f32 %v4124, %v4189
  %v4195 = vadd.f32 %v4125, %v4189
  %v4196 = vadd.f32 %v4126, %v4189
  %v4197 = vadd.f32 %v4127, %v4189
  %v4198 = vadd.f32 %v4128, %v4189
  %v4199 = vadd.f32 %v4129, %v4189
  %v4200 = vadd.f32 %v4130, %v4189
  %v4201 = vadd.f32 %v4131, %v4189
  %v4202 = vadd.f32 %v4132, %v4189
  %v4203 = vadd.f32 %v4133, %v4189
  %v4204 = vadd.f32 %v4134, %v4189
  %v4205 = vadd.f32 %v4135, %v4189
  %v4206 = vadd.f32 %v4136, %v4189
  %v4207 = vadd.f32 %v4137, %v4189
  %v4208 = vadd.f32 %v4138, %v4189
  %v4209 = vadd.f32 %v4139, %v4189
  %v4210 = vadd.f32 %v4140, %v4189
  %v4211 = vadd.f32 %v4141, %v4189
  %v4212 = vadd.f32 %v4142, %v4189
  %v4213 = vadd.f32 %v4143, %v4189
  %v4214 = vadd.f32 %v4144, %v4189
  %v4215 = vadd.f32 %v4145, %v4189
  %v4216 = vadd.f32 %v4146, %v4189
  %v4217 = vadd.f32 %v4147, %v4189
  %v4218 = vadd.f32 %v4148, %v4189
  %v4219 = vadd.f32 %v4149, %v4189
  %v4220 = vadd.f32 %v4150, %v4189
  %v4221 = vadd.f32 %v4151, %v4189
  %v4222 = vadd.f32 %v4152, %v4189
  %v4223 = vadd.f32 %v4153, %v4189
  %v4224 = vadd.f32 %v4154, %v4189
  %v4225 = vadd.f32 %v4155, %v4189
  %v4226 = vadd.f32 %v4156, %v4189
  %v4227 = vadd.f32 %v4157, %v4189
  %v4228 = vadd.f32 %v4158, %v4189
  %v4229 = vadd.f32 %v4159, %v4189
  %v4230 = vadd.f32 %v4160, %v4189
  %v4231 = vadd.f32 %v4161, %v4189
  %v4232 = vadd.f32 %v4162, %v4189
  %v4233 = vadd.f32 %v4163, %v4189
  %v4234 = vadd.f32 %v4164, %v4189
  %v4235 = vadd.f32 %v4165, %v4189
  %v4236 = vadd.f32 %v4166, %v4189
  %v4237 = vadd.f32 %v4167, %v4189
  %v4238 = vadd.f32 %v4168, %v4189
  %v4239 = vadd.f32 %v4169, %v4189
  %v4240 = vadd.f32 %v4170, %v4189
  %v4241 = vadd.f32 %v4171, %v4189
  %v4242 = vadd.f32 %v4172, %v4189
  %v4243 = vadd.f32 %v4173, %v4189
  %v4244 = vadd.f32 %v4174, %v4189
  %v4245 = vadd.f32 %v4175, %v4189
  %v4246 = vadd.f32 %v4176, %v4189
  %v4247 = vadd.f32 %v4177, %v4189
  %v4248 = vadd.f32 %v4178, %v4189
  %v4249 = vadd.f32 %v4179, %v4189
  %v4250 = vadd.f32 %v4180, %v4189
  %v4251 = vadd.f32 %v4181, %v4189
  %v4252 = vadd.f32 %v4182, %v4189
  %v4253 = vadd.f32 %v4183, %v4189
  %v4254 = vadd.f32 %v4184, %v4189
  %v4255 = vmax.f32 %v4191, 0.0
  %v4256 = vmax.f32 %v4192, 0.0
  %v4257 = vmax.f32 %v4193, 0.0
  %v4258 = vmax.f32 %v4194, 0.0
  %v4259 = vmax.f32 %v4195, 0.0
  %v4260 = vmax.f32 %v4196, 0.0
  %v4261 = vmax.f32 %v4197, 0.0
  %v4262 = vmax.f32 %v4198, 0.0
  %v4263 = vmax.f32 %v4199, 0.0
  %v4264 = vmax.f32 %v4200, 0.0
  %v4265 = vmax.f32 %v4201, 0.0
  %v4266 = vmax.f32 %v4202, 0.0
  %v4267 = vmax.f32 %v4203, 0.0
  %v4268 = vmax.f32 %v4204, 0.0
  %v4269 = vmax.f32 %v4205, 0.0
  %v4270 = vmax.f32 %v4206, 0.0
  %v4271 = vmax.f32 %v4207, 0.0
  %v4272 = vmax.f32 %v4208, 0.0
  %v4273 = vmax.f32 %v4209, 0.0
  %v4274 = vmax.f32 %v4210, 0.0
  %v4275 = vmax.f32 %v4211, 0.0
  %v4276 = vmax.f32 %v4212, 0.0
  %v4277 = vmax.f32 %v4213, 0.0
  %v4278 = vmax.f32 %v4214, 0.0
  %v4279 = vmax.f32 %v4215, 0.0
  %v4280 = vmax.f32 %v4216, 0.0
  %v4281 = vmax.f32 %v4217, 0.0
  %v4282 = vmax.f32 %v4218, 0.0
  %v4283 = vmax.f32 %v4219, 0.0
  %v4284 = vmax.f32 %v4220, 0.0
  %v4285 = vmax.f32 %v4221, 0.0
  %v4286 = vmax.f32 %v4222, 0.0
  %v4287 = vmax.f32 %v4223, 0.0
  %v4288 = vmax.f32 %v4224, 0.0
  %v4289 = vmax.f32 %v4225, 0.0
  %v4290 = vmax.f32 %v4226, 0.0
  %v4291 = vmax.f32 %v4227, 0.0
  %v4292 = vmax.f32 %v4228, 0.0
  %v4293 = vmax.f32 %v4229, 0.0
  %v4294 = vmax.f32 %v4230, 0.0
  %v4295 = vmax.f32 %v4231, 0.0
  %v4296 = vmax.f32 %v4232, 0.0
  %v4297 = vmax.f32 %v4233, 0.0
  %v4298 = vmax.f32 %v4234, 0.0
  %v4299 = vmax.f32 %v4235, 0.0
  %v4300 = vmax.f32 %v4236, 0.0
  %v4301 = vmax.f32 %v4237, 0.0
  %v4302 = vmax.f32 %v4238, 0.0
  %v4303 = vmax.f32 %v4239, 0.0
  %v4304 = vmax.f32 %v4240, 0.0
  %v4305 = vmax.f32 %v4241, 0.0
  %v4306 = vmax.f32 %v4242, 0.0
  %v4307 = vmax.f32 %v4243, 0.0
  %v4308 = vmax.f32 %v4244, 0.0
  %v4309 = vmax.f32 %v4245, 0.0
  %v4310 = vmax.f32 %v4246, 0.0
  %v4311 = vmax.f32 %v4247, 0.0
  %v4312 = vmax.f32 %v4248, 0.0
  %v4313 = vmax.f32 %v4249, 0.0
  %v4314 = vmax.f32 %v4250, 0.0
  %v4315 = vmax.f32 %v4251, 0.0
  %v4316 = vmax.f32 %v4252, 0.0
  %v4317 = vmax.f32 %v4253, 0.0
  %v4318 = vmax.f32 %v4254, 0.0
  %4319 = vst [vmem:[#allocation2] sm:$0xff] %v4255
  %4320 = vst [vmem:[#allocation2 + $0x8] sm:$0xff] %v4256
  %4321 = vst [vmem:[#allocation2 + $0x10] sm:$0xff] %v4257
  %4322 = vst [vmem:[#allocation2 + $0x18] sm:$0xff] %v4258
  %4323 = vst [vmem:[#allocation2 + $0x20] sm:$0xff] %v4259
  %4324 = vst [vmem:[#allocation2 + $0x28] sm:$0xff] %v4260
  %4325 = vst [vmem:[#allocation2 + $0x30] sm:$0xff] %v4261
  %4326 = vst [vmem:[#allocation2 + $0x38] sm:$0xff] %v4262
  %4327 = vst [vmem:[#allocation2 + $0x40] sm:$0xff] %v4263
  %4328 = vst [vmem:[#allocation2 + $0x48] sm:$0xff] %v4264
  %4329 = vst [vmem:[#allocation2 + $0x50] sm:$0xff] %v4265
  %4330 = vst [vmem:[#allocation2 + $0x58] sm:$0xff] %v4266
  %4331 = vst [vmem:[#allocation2 + $0x60] sm:$0xff] %v4267
  %4332 = vst [vmem:[#allocation2 + $0x68] sm:$0xff] %v4268
  %4333 = vst [vmem:[#allocation2 + $0x70] sm:$0xff] %v4269
  %4334 = vst [vmem:[#allocation2 + $0x78] sm:$0xff] %v4270
  %4335 = vst [vmem:[#allocation2 + $0x80] sm:$0xff] %v4271
  %4336 = vst [vmem:[#allocation2 + $0x88] sm:$0xff] %v4272
  %4337 = vst [vmem:[#allocation2 + $0x90] sm:$0xff] %v4273
  %4338 = vst [vmem:[#allocation2 + $0x98] sm:$0xff] %v4274
  %4339 = vst [vmem:[#allocation2 + $0xa0] sm:$0xff] %v4275
  %4340 = vst [vmem:[#allocation2 + $0xa8] sm:$0xff] %v4276
  %4341 = vst [vmem:[#allocation2 + $0xb0] sm:$0xff] %v4277
  %4342 = vst [vmem:[#allocation2 + $0xb8] sm:$0xff] %v4278
  %4343 = vst [vmem:[#allocation2 + $0xc0] sm:$0xff] %v4279
  %4344 = vst [vmem:[#allocation2 + $0xc8] sm:$0xff] %v4280
  %4345 = vst [vmem:[#allocation2 + $0xd0] sm:$0xff] %v4281
  %4346 = vst [vmem:[#allocation2 + $0xd8] sm:$0xff] %v4282
  %4347 = vst [vmem:[#allocation2 + $0xe0] sm:$0xff] %v4283
  %4348 = vst [vmem:[#allocation2 + $0xe8] sm:$0xff] %v4284
  %4349 = vst [vmem:[#allocation2 + $0xf0] sm:$0xff] %v4285
  %4350 = vst [vmem:[#allocation2 + $0xf8] sm:$0xff] %v4286
  %4351 = vst [vmem:[#allocation2 + $0x100] sm:$0xff] %v4287
  %4352 = vst [vmem:[#allocation2 + $0x108] sm:$0xff] %v4288
  %4353 = vst [vmem:[#allocation2 + $0x110] sm:$0xff] %v4289
  %4354 = vst [vmem:[#allocation2 + $0x118] sm:$0xff] %v4290
  %4355 = vst [vmem:[#allocation2 + $0x120] sm:$0xff] %v4291
  %4356 = vst [vmem:[#allocation2 + $0x128] sm:$0xff] %v4292
  %4357 = vst [vmem:[#allocation2 + $0x130] sm:$0xff] %v4293
  %4358 = vst [vmem:[#allocation2 + $0x138] sm:$0xff] %v4294
  %4359 = vst [vmem:[#allocation2 + $0x140] sm:$0xff] %v4295
  %4360 = vst [vmem:[#allocation2 + $0x148] sm:$0xff] %v4296
  %4361 = vst [vmem:[#allocation2 + $0x150] sm:$0xff] %v4297
  %4362 = vst [vmem:[#allocation2 + $0x158] sm:$0xff] %v4298
  %4363 = vst [vmem:[#allocation2 + $0x160] sm:$0xff] %v4299
  %4364 = vst [vmem:[#allocation2 + $0x168] sm:$0xff] %v4300
  %4365 = vst [vmem:[#allocation2 + $0x170] sm:$0xff] %v4301
  %4366 = vst [vmem:[#allocation2 + $0x178] sm:$0xff] %v4302
  %4367 = vst [vmem:[#allocation2 + $0x180] sm:$0xff] %v4303
  %4368 = vst [vmem:[#allocation2 + $0x188] sm:$0xff] %v4304
  %4369 = vst [vmem:[#allocation2 + $0x190] sm:$0xff] %v4305
  %4370 = vst [vmem:[#allocation2 + $0x198] sm:$0xff] %v4306
  %4371 = vst [vmem:[#allocation2 + $0x1a0] sm:$0xff] %v4307
  %4372 = vst [vmem:[#allocation2 + $0x1a8] sm:$0xff] %v4308
  %4373 = vst [vmem:[#allocation2 + $0x1b0] sm:$0xff] %v4309
  %4374 = vst [vmem:[#allocation2 + $0x1b8] sm:$0xff] %v4310
  %4375 = vst [vmem:[#allocation2 + $0x1c0] sm:$0xff] %v4311
  %4376 = vst [vmem:[#allocation2 + $0x1c8] sm:$0xff] %v4312
  %4377 = vst [vmem:[#allocation2 + $0x1d0] sm:$0xff] %v4313
  %4378 = vst [vmem:[#allocation2 + $0x1d8] sm:$0xff] %v4314
  %4379 = vst [vmem:[#allocation2 + $0x1e0] sm:$0xff] %v4315
  %4380 = vst [vmem:[#allocation2 + $0x1e8] sm:$0xff] %v4316
  %4381 = vst [vmem:[#allocation2 + $0x1f0] sm:$0xff] %v4317
  %4382 = vst [vmem:[#allocation2 + $0x1f8] sm:$0xff] %v4318
  %v4383 = vld [vmem:[#allocation2] sm:$0xff]
  %v4384 = vld [vmem:[#allocation2 + $0x8] sm:$0xff]
  %v4385 = vld [vmem:[#allocation2 + $0x20] sm:$0xff]
  %v4386 = vld [vmem:[#allocation2 + $0x28] sm:$0xff]
  %v4387 = vld [vmem:[#allocation2 + $0x40] sm:$0xff]
  %v4388 = vld [vmem:[#allocation2 + $0x48] sm:$0xff]
  %v4389 = vld [vmem:[#allocation2 + $0x60] sm:$0xff]
  %v4390 = vld [vmem:[#allocation2 + $0x68] sm:$0xff]
  %v4391 = vld [vmem:[#allocation2 + $0x80] sm:$0xff]
  %v4392 = vld [vmem:[#allocation2 + $0x88] sm:$0xff]
  %v4393 = vld [vmem:[#allocation2 + $0xa0] sm:$0xff]
  %v4394 = vld [vmem:[#allocation2 + $0xa8] sm:$0xff]
  %v4395 = vld [vmem:[#allocation2 + $0xc0] sm:$0xff]
  %v4396 = vld [vmem:[#allocation2 + $0xc8] sm:$0xff]
  %v4397 = vld [vmem:[#allocation2 + $0xe0] sm:$0xff]
  %v4398 = vld [vmem:[#allocation2 + $0xe8] sm:$0xff]
  %v4399 = vld [vmem:[#allocation2 + $0x100] sm:$0xff]
  %v4400 = vld [vmem:[#allocation2 + $0x108] sm:$0xff]
  %v4401 = vld [vmem:[#allocation2 + $0x120] sm:$0xff]
  %v4402 = vld [vmem:[#allocation2 + $0x128] sm:$0xff]
  %v4403 = vld [vmem:[#allocation2 + $0x140] sm:$0xff]
  %v4404 = vld [vmem:[#allocation2 + $0x148] sm:$0xff]
  %v4405 = vld [vmem:[#allocation2 + $0x160] sm:$0xff]
  %v4406 = vld [vmem:[#allocation2 + $0x168] sm:$0xff]
  %v4407 = vld [vmem:[#allocation2 + $0x180] sm:$0xff]
  %v4408 = vld [vmem:[#allocation2 + $0x188] sm:$0xff]
  %v4409 = vld [vmem:[#allocation2 + $0x1a0] sm:$0xff]
  %v4410 = vld [vmem:[#allocation2 + $0x1a8] sm:$0xff]
  %v4411 = vld [vmem:[#allocation2 + $0x1c0] sm:$0xff]
  %v4412 = vld [vmem:[#allocation2 + $0x1c8] sm:$0xff]
  %v4413 = vld [vmem:[#allocation2 + $0x1e0] sm:$0xff]
  %v4414 = vld [vmem:[#allocation2 + $0x1e8] sm:$0xff]
  %s4415 = scalar_lea.vmem [#allocation2], 16
  %v4416 = vld [vmem:[%s4415] sm:$0xff]
  %v4417 = vld [vmem:[%s4415 + $0x8] sm:$0xff]
  %v4418 = vld [vmem:[%s4415 + $0x20] sm:$0xff]
  %v4419 = vld [vmem:[%s4415 + $0x28] sm:$0xff]
  %v4420 = vld [vmem:[%s4415 + $0x40] sm:$0xff]
  %v4421 = vld [vmem:[%s4415 + $0x48] sm:$0xff]
  %v4422 = vld [vmem:[%s4415 + $0x60] sm:$0xff]
  %v4423 = vld [vmem:[%s4415 + $0x68] sm:$0xff]
  %v4424 = vld [vmem:[%s4415 + $0x80] sm:$0xff]
  %v4425 = vld [vmem:[%s4415 + $0x88] sm:$0xff]
  %v4426 = vld [vmem:[%s4415 + $0xa0] sm:$0xff]
  %v4427 = vld [vmem:[%s4415 + $0xa8] sm:$0xff]
  %v4428 = vld [vmem:[%s4415 + $0xc0] sm:$0xff]
  %v4429 = vld [vmem:[%s4415 + $0xc8] sm:$0xff]
  %v4430 = vld [vmem:[%s4415 + $0xe0] sm:$0xff]
  %v4431 = vld [vmem:[%s4415 + $0xe8] sm:$0xff]
  %v4432 = vld [vmem:[%s4415 + $0x100] sm:$0xff]
  %v4433 = vld [vmem:[%s4415 + $0x108] sm:$0xff]
  %v4434 = vld [vmem:[%s4415 + $0x120] sm:$0xff]
  %v4435 = vld [vmem:[%s4415 + $0x128] sm:$0xff]
  %v4436 = vld [vmem:[%s4415 + $0x140] sm:$0xff]
  %v4437 = vld [vmem:[%s4415 + $0x148] sm:$0xff]
  %v4438 = vld [vmem:[%s4415 + $0x160] sm:$0xff]
  %v4439 = vld [vmem:[%s4415 + $0x168] sm:$0xff]
  %v4440 = vld [vmem:[%s4415 + $0x180] sm:$0xff]
  %v4441 = vld [vmem:[%s4415 + $0x188] sm:$0xff]
  %v4442 = vld [vmem:[%s4415 + $0x1a0] sm:$0xff]
  %v4443 = vld [vmem:[%s4415 + $0x1a8] sm:$0xff]
  %v4444 = vld [vmem:[%s4415 + $0x1c0] sm:$0xff]
  %v4445 = vld [vmem:[%s4415 + $0x1c8] sm:$0xff]
  %v4446 = vld [vmem:[%s4415 + $0x1e0] sm:$0xff]
  %v4447 = vld [vmem:[%s4415 + $0x1e8] sm:$0xff]
  %v4448 = vmax.f32 %v4383, %v4416
  %v4449 = vmax.f32 %v4384, %v4417
  %v4450 = vmax.f32 %v4385, %v4418
  %v4451 = vmax.f32 %v4386, %v4419
  %v4452 = vmax.f32 %v4387, %v4420
  %v4453 = vmax.f32 %v4388, %v4421
  %v4454 = vmax.f32 %v4389, %v4422
  %v4455 = vmax.f32 %v4390, %v4423
  %v4456 = vmax.f32 %v4391, %v4424
  %v4457 = vmax.f32 %v4392, %v4425
  %v4458 = vmax.f32 %v4393, %v4426
  %v4459 = vmax.f32 %v4394, %v4427
  %v4460 = vmax.f32 %v4395, %v4428
  %v4461 = vmax.f32 %v4396, %v4429
  %v4462 = vmax.f32 %v4397, %v4430
  %v4463 = vmax.f32 %v4398, %v4431
  %v4464 = vmax.f32 %v4399, %v4432
  %v4465 = vmax.f32 %v4400, %v4433
  %v4466 = vmax.f32 %v4401, %v4434
  %v4467 = vmax.f32 %v4402, %v4435
  %v4468 = vmax.f32 %v4403, %v4436
  %v4469 = vmax.f32 %v4404, %v4437
  %v4470 = vmax.f32 %v4405, %v4438
  %v4471 = vmax.f32 %v4406, %v4439
  %v4472 = vmax.f32 %v4407, %v4440
  %v4473 = vmax.f32 %v4408, %v4441
  %v4474 = vmax.f32 %v4409, %v4442
  %v4475 = vmax.f32 %v4410, %v4443
  %v4476 = vmax.f32 %v4411, %v4444
  %v4477 = vmax.f32 %v4412, %v4445
  %v4478 = vmax.f32 %v4413, %v4446
  %v4479 = vmax.f32 %v4414, %v4447
  %4480 = vst [vmem:[#allocation3] sm:$0xff] %v4448
  %4481 = vst [vmem:[#allocation3 + $0x8] sm:$0xff] %v4449
  %4482 = vst [vmem:[#allocation3 + $0x10] sm:$0xff] %v4450
  %4483 = vst [vmem:[#allocation3 + $0x18] sm:$0xff] %v4451
  %4484 = vst [vmem:[#allocation3 + $0x20] sm:$0xff] %v4452
  %4485 = vst [vmem:[#allocation3 + $0x28] sm:$0xff] %v4453
  %4486 = vst [vmem:[#allocation3 + $0x30] sm:$0xff] %v4454
  %4487 = vst [vmem:[#allocation3 + $0x38] sm:$0xff] %v4455
  %4488 = vst [vmem:[#allocation3 + $0x40] sm:$0xff] %v4456
  %4489 = vst [vmem:[#allocation3 + $0x48] sm:$0xff] %v4457
  %4490 = vst [vmem:[#allocation3 + $0x50] sm:$0xff] %v4458
  %4491 = vst [vmem:[#allocation3 + $0x58] sm:$0xff] %v4459
  %4492 = vst [vmem:[#allocation3 + $0x60] sm:$0xff] %v4460
  %4493 = vst [vmem:[#allocation3 + $0x68] sm:$0xff] %v4461
  %4494 = vst [vmem:[#allocation3 + $0x70] sm:$0xff] %v4462
  %4495 = vst [vmem:[#allocation3 + $0x78] sm:$0xff] %v4463
  %4496 = vst [vmem:[#allocation3 + $0x80] sm:$0xff] %v4464
  %4497 = vst [vmem:[#allocation3 + $0x88] sm:$0xff] %v4465
  %4498 = vst [vmem:[#allocation3 + $0x90] sm:$0xff] %v4466
  %4499 = vst [vmem:[#allocation3 + $0x98] sm:$0xff] %v4467
  %4500 = vst [vmem:[#allocation3 + $0xa0] sm:$0xff] %v4468
  %4501 = vst [vmem:[#allocation3 + $0xa8] sm:$0xff] %v4469
  %4502 = vst [vmem:[#allocation3 + $0xb0] sm:$0xff] %v4470
  %4503 = vst [vmem:[#allocation3 + $0xb8] sm:$0xff] %v4471
  %4504 = vst [vmem:[#allocation3 + $0xc0] sm:$0xff] %v4472
  %4505 = vst [vmem:[#allocation3 + $0xc8] sm:$0xff] %v4473
  %4506 = vst [vmem:[#allocation3 + $0xd0] sm:$0xff] %v4474
  %4507 = vst [vmem:[#allocation3 + $0xd8] sm:$0xff] %v4475
  %4508 = vst [vmem:[#allocation3 + $0xe0] sm:$0xff] %v4476
  %4509 = vst [vmem:[#allocation3 + $0xe8] sm:$0xff] %v4477
  %4510 = vst [vmem:[#allocation3 + $0xf0] sm:$0xff] %v4478
  %4511 = vst [vmem:[#allocation3 + $0xf8] sm:$0xff] %v4479
  %v4512 = vld [vmem:[#allocation3] ss:$2 sm:$0xff]
  %s4513 = scalar_lea.vmem [#allocation3], 16
  %v4514 = vld [vmem:[%s4513] ss:$2 sm:$0xff]
  %s4515 = scalar_lea.vmem [#allocation3], 32
  %v4516 = vld [vmem:[%s4515] ss:$2 sm:$0xff]
  %s4517 = scalar_lea.vmem [#allocation3], 48
  %v4518 = vld [vmem:[%s4517] ss:$2 sm:$0xff]
  %s4519 = scalar_lea.vmem [#allocation3], 64
  %v4520 = vld [vmem:[%s4519] ss:$2 sm:$0xff]
  %s4521 = scalar_lea.vmem [#allocation3], 80
  %v4522 = vld [vmem:[%s4521] ss:$2 sm:$0xff]
  %s4523 = scalar_lea.vmem [#allocation3], 96
  %v4524 = vld [vmem:[%s4523] ss:$2 sm:$0xff]
  %s4525 = scalar_lea.vmem [#allocation3], 112
  %v4526 = vld [vmem:[%s4525] ss:$2 sm:$0xff]
  %s4527 = scalar_lea.vmem [#allocation3], 128
  %v4528 = vld [vmem:[%s4527] ss:$2 sm:$0xff]
  %s4529 = scalar_lea.vmem [#allocation3], 144
  %v4530 = vld [vmem:[%s4529] ss:$2 sm:$0xff]
  %s4531 = scalar_lea.vmem [#allocation3], 160
  %v4532 = vld [vmem:[%s4531] ss:$2 sm:$0xff]
  %s4533 = scalar_lea.vmem [#allocation3], 176
  %v4534 = vld [vmem:[%s4533] ss:$2 sm:$0xff]
  %s4535 = scalar_lea.vmem [#allocation3], 192
  %v4536 = vld [vmem:[%s4535] ss:$2 sm:$0xff]
  %s4537 = scalar_lea.vmem [#allocation3], 208
  %v4538 = vld [vmem:[%s4537] ss:$2 sm:$0xff]
  %s4539 = scalar_lea.vmem [#allocation3], 224
  %v4540 = vld [vmem:[%s4539] ss:$2 sm:$0xff]
  %s4541 = scalar_lea.vmem [#allocation3], 240
  %v4542 = vld [vmem:[%s4541] ss:$2 sm:$0xff]
  %s4543 = scalar_lea.vmem [#allocation3], 1
  %v4544 = vld [vmem:[%s4543] ss:$2 sm:$0xff]
  %s4545 = scalar_lea.vmem [#allocation3], 17
  %v4546 = vld [vmem:[%s4545] ss:$2 sm:$0xff]
  %s4547 = scalar_lea.vmem [#allocation3], 33
  %v4548 = vld [vmem:[%s4547] ss:$2 sm:$0xff]
  %s4549 = scalar_lea.vmem [#allocation3], 49
  %v4550 = vld [vmem:[%s4549] ss:$2 sm:$0xff]
  %s4551 = scalar_lea.vmem [#allocation3], 65
  %v4552 = vld [vmem:[%s4551] ss:$2 sm:$0xff]
  %s4553 = scalar_lea.vmem [#allocation3], 81
  %v4554 = vld [vmem:[%s4553] ss:$2 sm:$0xff]
  %s4555 = scalar_lea.vmem [#allocation3], 97
  %v4556 = vld [vmem:[%s4555] ss:$2 sm:$0xff]
  %s4557 = scalar_lea.vmem [#allocation3], 113
  %v4558 = vld [vmem:[%s4557] ss:$2 sm:$0xff]
  %s4559 = scalar_lea.vmem [#allocation3], 129
  %v4560 = vld [vmem:[%s4559] ss:$2 sm:$0xff]
  %s4561 = scalar_lea.vmem [#allocation3], 145
  %v4562 = vld [vmem:[%s4561] ss:$2 sm:$0xff]
  %s4563 = scalar_lea.vmem [#allocation3], 161
  %v4564 = vld [vmem:[%s4563] ss:$2 sm:$0xff]
  %s4565 = scalar_lea.vmem [#allocation3], 177
  %v4566 = vld [vmem:[%s4565] ss:$2 sm:$0xff]
  %s4567 = scalar_lea.vmem [#allocation3], 193
  %v4568 = vld [vmem:[%s4567] ss:$2 sm:$0xff]
  %s4569 = scalar_lea.vmem [#allocation3], 209
  %v4570 = vld [vmem:[%s4569] ss:$2 sm:$0xff]
  %s4571 = scalar_lea.vmem [#allocation3], 225
  %v4572 = vld [vmem:[%s4571] ss:$2 sm:$0xff]
  %s4573 = scalar_lea.vmem [#allocation3], 241
  %v4574 = vld [vmem:[%s4573] ss:$2 sm:$0xff]
  %v4575 = vmax.f32 %v4512, %v4544
  %v4576 = vmax.f32 %v4514, %v4546
  %v4577 = vmax.f32 %v4516, %v4548
  %v4578 = vmax.f32 %v4518, %v4550
  %v4579 = vmax.f32 %v4520, %v4552
  %v4580 = vmax.f32 %v4522, %v4554
  %v4581 = vmax.f32 %v4524, %v4556
  %v4582 = vmax.f32 %v4526, %v4558
  %v4583 = vmax.f32 %v4528, %v4560
  %v4584 = vmax.f32 %v4530, %v4562
  %v4585 = vmax.f32 %v4532, %v4564
  %v4586 = vmax.f32 %v4534, %v4566
  %v4587 = vmax.f32 %v4536, %v4568
  %v4588 = vmax.f32 %v4538, %v4570
  %v4589 = vmax.f32 %v4540, %v4572
  %v4590 = vmax.f32 %v4542, %v4574
  %4591 = vst [vmem:[%s4] sm:$0xff] %v4575
  %4592 = vst [vmem:[%s4 + $0x8] sm:$0xff] %v4576
  %4593 = vst [vmem:[%s4 + $0x10] sm:$0xff] %v4577
  %4594 = vst [vmem:[%s4 + $0x18] sm:$0xff] %v4578
  %4595 = vst [vmem:[%s4 + $0x20] sm:$0xff] %v4579
  %4596 = vst [vmem:[%s4 + $0x28] sm:$0xff] %v4580
  %4597 = vst [vmem:[%s4 + $0x30] sm:$0xff] %v4581
  %4598 = vst [vmem:[%s4 + $0x38] sm:$0xff] %v4582
  %4599 = vst [vmem:[%s4 + $0x40] sm:$0xff] %v4583
  %4600 = vst [vmem:[%s4 + $0x48] sm:$0xff] %v4584
  %4601 = vst [vmem:[%s4 + $0x50] sm:$0xff] %v4585
  %4602 = vst [vmem:[%s4 + $0x58] sm:$0xff] %v4586
  %4603 = vst [vmem:[%s4 + $0x60] sm:$0xff] %v4587
  %4604 = vst [vmem:[%s4 + $0x68] sm:$0xff] %v4588
  %4605 = vst [vmem:[%s4 + $0x70] sm:$0xff] %v4589
  %4606 = vst [vmem:[%s4 + $0x78] sm:$0xff] %v4590
  // Predicated region
  $region18: #{conv_block.1} parent=0 // pred_check
    _
  $region19: #{conv_block.1} parent=0 // pred_check_branch
    %4608 = sbr.rel (0) target = $region21
  $region20: #{conv_block.1} parent=0 // pred_region
    _
  $region21: #{conv_block.1} parent=0 // pred_fallthru
    _
  // Predicated region
  $region22: #{conv_block.1} parent=0 // pred_check
    _
  $region23: #{conv_block.1} parent=0 // pred_check_branch
    %4610 = sbr.rel (0) target = $region25
  $region24: #{conv_block.1} parent=0 // pred_region
    _
  $region25: #{conv_block.1} parent=0 // pred_fallthru
    _

</llo_original>
